<compile_context>
chip_gen: v5e
topology: v5e:2x2
jax: 0.10.0
libtpu: 0.0.40
codegen_flags: <defaults>
</compile_context>

<pallas_src>
import jax
import jax.numpy as jnp
from jax.experimental import pallas as pl
from jax.experimental.pallas import tpu as pltpu

N_FEAT = 64
N_BLOCKS = 5
KSIZE = 7
PAD = 3
BN_EPS = 1e-5
LANE = 128
TILE_M = 4096   # rows of the (N*H*W, C) activation matrix per grid step


# ---------------------------------------------------------------------------
# Pallas kernels
# ---------------------------------------------------------------------------
def _conv_block1_kernel(p_ref, w_ref, y_ref, sum_ref, sq_ref):
    """im2col 7x7 conv fused with block-1 1x1 conv (weights pre-folded) + BN stats."""
    y = jnp.dot(p_ref[...], w_ref[...], preferred_element_type=jnp.float32)
    y_ref[...] = y.astype(jnp.bfloat16)
    # per-tile partial statistics (reduced wrapper-side) -> grid axis stays "parallel"
    sum_ref[0] = jnp.sum(y, axis=0, keepdims=True)
    sq_ref[0] = jnp.sum(y * y, axis=0, keepdims=True)


def _mid_block_kernel(y_prev_ref, sc_ref, sh_ref, wk_ref, y_ref, sum_ref, sq_ref):
    """Fused BN(scale,shift)+ReLU of the previous block, 1x1 conv, per-tile BN stats."""
    feat = jnp.maximum(
        y_prev_ref[...].astype(jnp.float32) * sc_ref[...] + sh_ref[...], 0.0)
    y = jnp.dot(feat.astype(jnp.bfloat16), wk_ref[...],
                preferred_element_type=jnp.float32)
    y_ref[...] = y.astype(jnp.bfloat16)
    sum_ref[0] = jnp.sum(y, axis=0, keepdims=True)
    sq_ref[0] = jnp.sum(y * y, axis=0, keepdims=True)


def _final_kernel(y_prev_ref, sc_ref, sh_ref, wf_ref, bf_ref, out_ref):
    """BN+ReLU of block 5, 64->1 projection (VPU mul + XLU lane reduce), sigmoid."""
    feat = jnp.maximum(
        y_prev_ref[...].astype(jnp.float32) * sc_ref[...] + sh_ref[...], 0.0)
    z = jnp.sum(feat * wf_ref[...], axis=-1, keepdims=True) + bf_ref[...]
    out_ref[...] = jax.nn.sigmoid(z)


# ---------------------------------------------------------------------------
# Wrapper-side glue: spectral norm folding, im2col, BN stat folding.
# ---------------------------------------------------------------------------
def _spectral_normalize(w, n_iter=8):
    """Fold spectral norm into the weight (deterministic power iteration).
    # TODO(synk): torch's spectral_norm does 1 power iteration per forward with a
    # persistent random `u` buffer; this deterministic variant matches the math
    # (W / sigma) but not torch's stateful iteration bit-for-bit.
    """
    out_c = w.shape[0]
    mat = w.reshape(out_c, -1).astype(jnp.float32)
    u = jnp.ones((out_c,), jnp.float32) / jnp.sqrt(jnp.float32(out_c))
    v = None
    for _ in range(n_iter):
        v = mat.T @ u
        v = v / (jnp.linalg.norm(v) + 1e-12)
        u = mat @ v
        u = u / (jnp.linalg.norm(u) + 1e-12)
    sigma = u @ (mat @ v)
    return w / sigma


def init_params(key, n_colors):
    ks = jax.random.split(key, 8)
    p = {}
    p["w1"] = 0.05 * jax.random.normal(ks[0], (N_FEAT, n_colors, KSIZE, KSIZE), jnp.float32)
    p["b1"] = 0.05 * jax.random.normal(ks[1], (N_FEAT,), jnp.float32)
    p["wk"] = 0.05 * jax.random.normal(ks[2], (N_BLOCKS, N_FEAT, N_FEAT, 1, 1), jnp.float32)
    p["bk"] = 0.05 * jax.random.normal(ks[3], (N_BLOCKS, N_FEAT), jnp.float32)
    p["gamma"] = jnp.ones((N_BLOCKS, N_FEAT), jnp.float32)
    p["beta"] = jnp.zeros((N_BLOCKS, N_FEAT), jnp.float32)
    p["wf"] = 0.05 * jax.random.normal(ks[4], (1, N_FEAT, 1, 1), jnp.float32)
    p["bf"] = 0.05 * jax.random.normal(ks[5], (1,), jnp.float32)
    return p


def _pack_params(p):
    cin = p["w1"].shape[1]
    kdim = KSIZE * KSIZE * cin
    kp = ((kdim + LANE - 1) // LANE) * LANE
    # 7x7 conv weight -> (dy, dx, cin)-ordered im2col matrix, folded with the
    # block-1 1x1 conv (no bias/BN/ReLU in between, so the composition is linear).
    w1 = _spectral_normalize(p["w1"])
    w1 = jnp.transpose(w1, (2, 3, 1, 0)).reshape(kdim, N_FEAT).astype(jnp.float32)
    wk0 = _spectral_normalize(p["wk"][0])[:, :, 0, 0].T.astype(jnp.float32)
    wc = jnp.pad(w1 @ wk0, ((0, kp - kdim), (0, 0))).astype(jnp.bfloat16)
    # 1x1 conv weights -> (in, out), bf16 for the MXU (index 0 unused: folded above).
    wk = jnp.stack([_spectral_normalize(p["wk"][k])[:, :, 0, 0].T
                    for k in range(N_BLOCKS)], axis=0).astype(jnp.bfloat16)
    # Final 1x1 conv: (1, 64) row + scalar bias, kept f32 (VPU path, not MXU).
    wf = _spectral_normalize(p["wf"])[:, :, 0, 0]
    bf = p["bf"].reshape(1, 1)
    # NOTE: p["b1"] / p["bk"] are intentionally not used by the kernels:
    # constant per-channel offsets feeding training-mode BatchNorm cancel exactly.
    return wc, wk, wf, bf, kp


def _im2col_patches(x_nchw, rows_pad, kp):
    # TODO(synk): im2col is still assembled wrapper-side (bf16, pad fused into the
    # same pass); an in-kernel halo'd gather would cut the remaining patch traffic.
    n, c, h, w = x_nchw.shape
    x = jnp.transpose(x_nchw, (0, 2, 3, 1)).astype(jnp.bfloat16)      # -> NHWC bf16
    xp = jnp.pad(x, ((0, 0), (PAD, PAD), (PAD, PAD), (0, 0)))
    cols = [xp[:, dy:dy + h, dx:dx + w, :]
            for dy in range(KSIZE) for dx in range(KSIZE)]
    patches = jnp.concatenate(cols, axis=-1).reshape(n * h * w, KSIZE * KSIZE * c)
    patches = jnp.pad(patches,
                      ((0, rows_pad - n * h * w), (0, kp - KSIZE * KSIZE * c)))
    return patches


def _bn_scale_shift(ssum, ssq, gamma, beta, count):
    # TODO(synk): one-pass E[x^2]-E[x]^2 in f32 can lose precision at very large
    # N*H*W; a shifted/Welford combination of the per-tile partials would be safer.
    mean = ssum / count
    var = jnp.maximum(ssq / count - mean * mean, 0.0)   # clamp: one-pass variance
    scale = gamma.reshape(1, N_FEAT) * jax.lax.rsqrt(var + BN_EPS)
    shift = beta.reshape(1, N_FEAT) - mean * scale
    return scale, shift


def _pad_row_step(pad_y_bf16, scale, shift, wk_k):
    """Mirror of _mid_block_kernel for an all-padded row (used to correct stats)."""
    feat = jnp.maximum(pad_y_bf16.astype(jnp.float32) * scale + shift, 0.0)
    return jnp.dot(feat.astype(jnp.bfloat16), wk_k,
                   preferred_element_type=jnp.float32)        # (1, 64) f32


@jax.jit
def discriminator_forward(x_nchw, params):
    """x_nchw: (N, C, H, W) float32  ->  (N, 1, H, W) float32 in [0, 1]."""
    n, c, h, w = x_nchw.shape
    rows = n * h * w
    tile_m = min(TILE_M, ((rows + 7) // 8) * 8)
    rows_pad = ((rows + tile_m - 1) // tile_m) * tile_m
    num_tiles = rows_pad // tile_m
    grid = (num_tiles,)
    npad = float(rows_pad - rows)
    count = float(rows)

    wc, wk, wf, bf, kp = _pack_params(params)
    patches = _im2col_patches(x_nchw, rows_pad, kp)

    row_spec = pl.BlockSpec((tile_m, N_FEAT), lambda i: (i, 0))
    chan_spec = pl.BlockSpec((1, N_FEAT), lambda i: (0, 0))
    stat_spec = pl.BlockSpec((1, 1, N_FEAT), lambda i: (i, 0, 0))
    y_shape = jax.ShapeDtypeStruct((rows_pad, N_FEAT), jnp.bfloat16)
    stat_shape = jax.ShapeDtypeStruct((num_tiles, 1, N_FEAT), jnp.float32)
    cparams = pltpu.CompilerParams(
        dimension_semantics=("parallel",),        # per-tile outputs only -> v7x 2-TC
        vmem_limit_bytes=32 << 20)                # explicit budget (<= v7x physical)

    # -- first layer: 7x7 conv + block-1 conv as ONE im2col matmul ---------------
    y, psum, psq = pl.pallas_call(
        _conv_block1_kernel,
        grid=grid,
        in_specs=[
            pl.BlockSpec((tile_m, kp), lambda i: (i, 0)),
            pl.BlockSpec((kp, N_FEAT), lambda i: (0, 0)),
        ],
        out_specs=(row_spec, stat_spec, stat_spec),
        out_shape=(y_shape, stat_shape, stat_shape),
        compiler_params=cparams,
    )(patches, wc)
    ssum = jnp.sum(psum, axis=0)
    ssq = jnp.sum(psq, axis=0)
    # padded patch rows are all-zero -> y contribution is exactly zero (no fixup).
    pad_y = jnp.zeros((1, N_FEAT), jnp.bfloat16)

    # -- blocks 2..5: BN+ReLU of previous block fused with this block's conv ----
    for k in range(1, N_BLOCKS):
        scale, shift = _bn_scale_shift(ssum, ssq, params["gamma"][k - 1],
                                       params["beta"][k - 1], count)
        y, psum, psq = pl.pallas_call(
            _mid_block_kernel,
            grid=grid,
            in_specs=[row_spec, chan_spec, chan_spec,
                      pl.BlockSpec((N_FEAT, N_FEAT), lambda i: (0, 0))],
            out_specs=(row_spec, stat_spec, stat_spec),
            out_shape=(y_shape, stat_shape, stat_shape),
            compiler_params=cparams,
        )(y, scale, shift, wk[k])
        ssum = jnp.sum(psum, axis=0)
        ssq = jnp.sum(psq, axis=0)
        if npad > 0.0:   # static: subtract the constant padded-row stat pollution
            y_pad = _pad_row_step(pad_y, scale, shift, wk[k])
            ssum = ssum - npad * y_pad
            ssq = ssq - npad * (y_pad * y_pad)
            pad_y = y_pad.astype(jnp.bfloat16)

    # -- final: BN+ReLU of block 5, 64->1 projection, sigmoid --------------------
    scale, shift = _bn_scale_shift(ssum, ssq, params["gamma"][N_BLOCKS - 1],
                                   params["beta"][N_BLOCKS - 1], count)
    out = pl.pallas_call(
        _final_kernel,
        grid=grid,
        in_specs=[row_spec, chan_spec, chan_spec, chan_spec,
                  pl.BlockSpec((1, 1), lambda i: (0, 0))],
        out_specs=pl.BlockSpec((tile_m, 1), lambda i: (i, 0)),
        out_shape=jax.ShapeDtypeStruct((rows_pad, 1), jnp.float32),
        compiler_params=cparams,
    )(y, scale, shift, wf, bf)

    return out[:rows, 0].reshape(n, h, w)[:, None, :, :]


# ---------------------------------------------------------------------------
# Pure-JAX reference (exact module semantics, incl. the pre-BN biases that the
# Pallas path drops because they cancel under training-mode BatchNorm).
# ---------------------------------------------------------------------------
@jax.jit
def _reference_forward(x_nchw, params):
    dn = ("NCHW", "OIHW", "NCHW")
    x = jax.lax.conv_general_dilated(x_nchw, _spectral_normalize(params["w1"]),
                                     (1, 1), ((PAD, PAD), (PAD, PAD)),
                                     dimension_numbers=dn)
    x = x + params["b1"].reshape(1, N_FEAT, 1, 1)
    for k in range(N_BLOCKS):
        wk = _spectral_normalize(params["wk"][k])
        x = jax.lax.conv_general_dilated(x, wk, (1, 1), ((0, 0), (0, 0)),
                                         dimension_numbers=dn)
        x = x + params["bk"][k].reshape(1, N_FEAT, 1, 1)
        mean = jnp.mean(x, axis=(0, 2, 3), keepdims=True)
        var = jnp.mean((x - mean) ** 2, axis=(0, 2, 3), keepdims=True)
        x = (x - mean) * jax.lax.rsqrt(var + BN_EPS)
        x = x * params["gamma"][k].reshape(1, N_FEAT, 1, 1) \
              + params["beta"][k].reshape(1, N_FEAT, 1, 1)
        x = jnp.maximum(x, 0.0)
    x = jax.lax.conv_general_dilated(x, _spectral_normalize(params["wf"]),
                                     (1, 1), ((0, 0), (0, 0)),
                                     dimension_numbers=dn)
    x = x + params["bf"].reshape(1, 1, 1, 1)
    return jax.nn.sigmoid(x)


if __name__ == "__main__":
    key = jax.random.PRNGKey(0)
    k_x, k_p = jax.random.split(key)

    n_colors = 3
    x = jax.random.normal(k_x, (2, n_colors, 16, 16), jnp.float32)
    params = init_params(k_p, n_colors)

    y = discriminator_forward(x, params)
    y = jax.block_until_ready(y)

    assert y.shape == (2, 1, 16, 16)
    assert bool(jnp.all((y >= 0.0) & (y <= 1.0)))

    ref = _reference_forward(x, params)
    assert float(jnp.max(jnp.abs(y - ref))) < 5e-2   # bf16 matmuls/activations vs f32 reference

    print("KERNEL_OK")
</pallas_src>

<mosaic_0001>
module attributes {stable_mosaic.version = 11 : i64} {
  func.func @_conv_block1_kernel(%arg0: i32, %arg1: memref<512x256xbf16, #tpu.memory_space<vmem>>, %arg2: memref<256x64xbf16, #tpu.memory_space<vmem>>, %arg3: memref<512x64xbf16, #tpu.memory_space<vmem>>, %arg4: memref<1x1x64xf32, #tpu.memory_space<vmem>>, %arg5: memref<1x1x64xf32, #tpu.memory_space<vmem>>) attributes {dimension_semantics = [#tpu.dimension_semantics<parallel>], iteration_bounds = array<i64: 1>, scalar_prefetch = 0 : i64, scratch_operands = 0 : i64, tpu.core_type = #tpu.core_type<tc>, window_params = [{transform_indices = @transform_0, window_bounds = array<i64: 512, 256>}, {pipeline_mode = #tpu.pipeline_mode<synchronous>, transform_indices = @transform_1, window_bounds = array<i64: 256, 64>}, {transform_indices = @transform_2, window_bounds = array<i64: 512, 64>}, {transform_indices = @transform_3, window_bounds = array<i64: 1, 1, 64>}, {transform_indices = @transform_4, window_bounds = array<i64: 1, 1, 64>}]} {
    %c0 = arith.constant 0 : index
    %c0_0 = arith.constant 0 : index
    %0 = vector.load %arg1[%c0, %c0_0] : memref<512x256xbf16, #tpu.memory_space<vmem>>, vector<512x256xbf16>
    %c0_1 = arith.constant 0 : index
    %c0_2 = arith.constant 0 : index
    %1 = vector.load %arg2[%c0_1, %c0_2] : memref<256x64xbf16, #tpu.memory_space<vmem>>, vector<256x64xbf16>
    %cst = arith.constant dense<0.000000e+00> : vector<512x64xf32>
    %2 = tpu.matmul %0, %1, %cst {dimension_numbers = #tpu.dot_dimension_numbers<[1], [0], [0], [1], [0, 0, 1, 1], [], []>} : vector<512x256xbf16>, vector<256x64xbf16>, vector<512x64xf32> -> vector<512x64xf32>
    %3 = arith.truncf %2 : vector<512x64xf32> to vector<512x64xbf16>
    %c0_3 = arith.constant 0 : index
    %c0_4 = arith.constant 0 : index
    %4 = vector.load %arg3[%c0_3, %c0_4] : memref<512x64xbf16, #tpu.memory_space<vmem>>, vector<512x64xbf16>
    tpu.vector_store %arg3[%c0_3, %c0_4], %3 {strides = array<i32>} : memref<512x64xbf16, #tpu.memory_space<vmem>>, vector<512x64xbf16>,
    %cst_5 = arith.constant dense<0.000000e+00> : vector<64xf32>
    %5 = vector.multi_reduction <add>, %2, %cst_5 [0] : vector<512x64xf32> to vector<64xf32>
    %6 = vector.shape_cast %5 : vector<64xf32> to vector<1x64xf32>
    %c0_6 = arith.constant 0 : index
    %c0_7 = arith.constant 0 : index
    %c0_8 = arith.constant 0 : index
    %7 = vector.load %arg4[%c0_6, %c0_7, %c0_8] : memref<1x1x64xf32, #tpu.memory_space<vmem>>, vector<1x1x64xf32>
    %8 = vector.shape_cast %7 : vector<1x1x64xf32> to vector<1x64xf32>
    %9 = vector.shape_cast %6 : vector<1x64xf32> to vector<1x1x64xf32>
    tpu.vector_store %arg4[%c0_6, %c0_7, %c0_8], %9 {strides = array<i32>} : memref<1x1x64xf32, #tpu.memory_space<vmem>>, vector<1x1x64xf32>,
    %10 = arith.mulf %2, %2 : vector<512x64xf32>
    %cst_9 = arith.constant dense<0.000000e+00> : vector<64xf32>
    %11 = vector.multi_reduction <add>, %10, %cst_9 [0] : vector<512x64xf32> to vector<64xf32>
    %12 = vector.shape_cast %11 : vector<64xf32> to vector<1x64xf32>
    %c0_10 = arith.constant 0 : index
    %c0_11 = arith.constant 0 : index
    %c0_12 = arith.constant 0 : index
    %13 = vector.load %arg5[%c0_10, %c0_11, %c0_12] : memref<1x1x64xf32, #tpu.memory_space<vmem>>, vector<1x1x64xf32>
    %14 = vector.shape_cast %13 : vector<1x1x64xf32> to vector<1x64xf32>
    %15 = vector.shape_cast %12 : vector<1x64xf32> to vector<1x1x64xf32>
    tpu.vector_store %arg5[%c0_10, %c0_11, %c0_12], %15 {strides = array<i32>} : memref<1x1x64xf32, #tpu.memory_space<vmem>>, vector<1x1x64xf32>,
    return
  }
  func.func @transform_0(%arg0: i32) -> (i32, i32) {
    %c0_i32 = arith.constant 0 : i32
    %c0_i32_0 = arith.constant 0 : i32
    return %arg0, %c0_i32 : i32, i32
  }
  func.func @transform_1(%arg0: i32) -> (i32, i32) {
    %c0_i32 = arith.constant 0 : i32
    %c0_i32_0 = arith.constant 0 : i32
    %c0_i32_1 = arith.constant 0 : i32
    return %c0_i32, %c0_i32_0 : i32, i32
  }
  func.func @transform_2(%arg0: i32) -> (i32, i32) {
    %c0_i32 = arith.constant 0 : i32
    %c0_i32_0 = arith.constant 0 : i32
    return %arg0, %c0_i32 : i32, i32
  }
  func.func @transform_3(%arg0: i32) -> (i32, i32, i32) {
    %c0_i32 = arith.constant 0 : i32
    %c0_i32_0 = arith.constant 0 : i32
    %c0_i32_1 = arith.constant 0 : i32
    return %arg0, %c0_i32, %c0_i32_0 : i32, i32, i32
  }
  func.func @transform_4(%arg0: i32) -> (i32, i32, i32) {
    %c0_i32 = arith.constant 0 : i32
    %c0_i32_0 = arith.constant 0 : i32
    %c0_i32_1 = arith.constant 0 : i32
    return %arg0, %c0_i32, %c0_i32_0 : i32, i32, i32
  }
}

module attributes {stable_mosaic.version = 11 : i64} {
  func.func @_mid_block_kernel(%arg0: i32, %arg1: memref<512x64xbf16, #tpu.memory_space<vmem>>, %arg2: memref<1x64xf32, #tpu.memory_space<vmem>>, %arg3: memref<1x64xf32, #tpu.memory_space<vmem>>, %arg4: memref<64x64xbf16, #tpu.memory_space<vmem>>, %arg5: memref<512x64xbf16, #tpu.memory_space<vmem>>, %arg6: memref<1x1x64xf32, #tpu.memory_space<vmem>>, %arg7: memref<1x1x64xf32, #tpu.memory_space<vmem>>) attributes {dimension_semantics = [#tpu.dimension_semantics<parallel>], iteration_bounds = array<i64: 1>, scalar_prefetch = 0 : i64, scratch_operands = 0 : i64, tpu.core_type = #tpu.core_type<tc>, window_params = [{transform_indices = @transform_0, window_bounds = array<i64: 512, 64>}, {pipeline_mode = #tpu.pipeline_mode<synchronous>, transform_indices = @transform_1, window_bounds = array<i64: 1, 64>}, {pipeline_mode = #tpu.pipeline_mode<synchronous>, transform_indices = @transform_2, window_bounds = array<i64: 1, 64>}, {pipeline_mode = #tpu.pipeline_mode<synchronous>, transform_indices = @transform_3, window_bounds = array<i64: 64, 64>}, {transform_indices = @transform_4, window_bounds = array<i64: 512, 64>}, {transform_indices = @transform_5, window_bounds = array<i64: 1, 1, 64>}, {transform_indices = @transform_6, window_bounds = array<i64: 1, 1, 64>}]} {
    %c0 = arith.constant 0 : index
    %c0_0 = arith.constant 0 : index
    %0 = vector.load %arg1[%c0, %c0_0] : memref<512x64xbf16, #tpu.memory_space<vmem>>, vector<512x64xbf16>
    %1 = arith.extf %0 : vector<512x64xbf16> to vector<512x64xf32>
    %c0_1 = arith.constant 0 : index
    %c0_2 = arith.constant 0 : index
    %2 = vector.load %arg2[%c0_1, %c0_2] : memref<1x64xf32, #tpu.memory_space<vmem>>, vector<1x64xf32>
    %3 = vector.broadcast %2 : vector<1x64xf32> to vector<512x64xf32>
    %4 = arith.mulf %1, %3 : vector<512x64xf32>
    %c0_3 = arith.constant 0 : index
    %c0_4 = arith.constant 0 : index
    %5 = vector.load %arg3[%c0_3, %c0_4] : memref<1x64xf32, #tpu.memory_space<vmem>>, vector<1x64xf32>
    %6 = vector.broadcast %5 : vector<1x64xf32> to vector<512x64xf32>
    %7 = arith.addf %4, %6 : vector<512x64xf32>
    %cst = arith.constant 0.000000e+00 : f32
    %8 = vector.broadcast %cst : f32 to vector<512x64xf32>
    %9 = arith.maximumf %7, %8 : vector<512x64xf32>
    %10 = arith.truncf %9 : vector<512x64xf32> to vector<512x64xbf16>
    %c0_5 = arith.constant 0 : index
    %c0_6 = arith.constant 0 : index
    %11 = vector.load %arg4[%c0_5, %c0_6] : memref<64x64xbf16, #tpu.memory_space<vmem>>, vector<64x64xbf16>
    %cst_7 = arith.constant dense<0.000000e+00> : vector<512x64xf32>
    %12 = tpu.matmul %10, %11, %cst_7 {dimension_numbers = #tpu.dot_dimension_numbers<[1], [0], [0], [1], [0, 0, 1, 1], [], []>} : vector<512x64xbf16>, vector<64x64xbf16>, vector<512x64xf32> -> vector<512x64xf32>
    %13 = arith.truncf %12 : vector<512x64xf32> to vector<512x64xbf16>
    %c0_8 = arith.constant 0 : index
    %c0_9 = arith.constant 0 : index
    %14 = vector.load %arg5[%c0_8, %c0_9] : memref<512x64xbf16, #tpu.memory_space<vmem>>, vector<512x64xbf16>
    tpu.vector_store %arg5[%c0_8, %c0_9], %13 {strides = array<i32>} : memref<512x64xbf16, #tpu.memory_space<vmem>>, vector<512x64xbf16>,
    %cst_10 = arith.constant dense<0.000000e+00> : vector<64xf32>
    %15 = vector.multi_reduction <add>, %12, %cst_10 [0] : vector<512x64xf32> to vector<64xf32>
    %16 = vector.shape_cast %15 : vector<64xf32> to vector<1x64xf32>
    %c0_11 = arith.constant 0 : index
    %c0_12 = arith.constant 0 : index
    %c0_13 = arith.constant 0 : index
    %17 = vector.load %arg6[%c0_11, %c0_12, %c0_13] : memref<1x1x64xf32, #tpu.memory_space<vmem>>, vector<1x1x64xf32>
    %18 = vector.shape_cast %17 : vector<1x1x64xf32> to vector<1x64xf32>
    %19 = vector.shape_cast %16 : vector<1x64xf32> to vector<1x1x64xf32>
    tpu.vector_store %arg6[%c0_11, %c0_12, %c0_13], %19 {strides = array<i32>} : memref<1x1x64xf32, #tpu.memory_space<vmem>>, vector<1x1x64xf32>,
    %20 = arith.mulf %12, %12 : vector<512x64xf32>
    %cst_14 = arith.constant dense<0.000000e+00> : vector<64xf32>
    %21 = vector.multi_reduction <add>, %20, %cst_14 [0] : vector<512x64xf32> to vector<64xf32>
    %22 = vector.shape_cast %21 : vector<64xf32> to vector<1x64xf32>
    %c0_15 = arith.constant 0 : index
    %c0_16 = arith.constant 0 : index
    %c0_17 = arith.constant 0 : index
    %23 = vector.load %arg7[%c0_15, %c0_16, %c0_17] : memref<1x1x64xf32, #tpu.memory_space<vmem>>, vector<1x1x64xf32>
    %24 = vector.shape_cast %23 : vector<1x1x64xf32> to vector<1x64xf32>
    %25 = vector.shape_cast %22 : vector<1x64xf32> to vector<1x1x64xf32>
    tpu.vector_store %arg7[%c0_15, %c0_16, %c0_17], %25 {strides = array<i32>} : memref<1x1x64xf32, #tpu.memory_space<vmem>>, vector<1x1x64xf32>,
    return
  }
  func.func @transform_0(%arg0: i32) -> (i32, i32) {
    %c0_i32 = arith.constant 0 : i32
    %c0_i32_0 = arith.constant 0 : i32
    return %arg0, %c0_i32 : i32, i32
  }
  func.func @transform_1(%arg0: i32) -> (i32, i32) {
    %c0_i32 = arith.constant 0 : i32
    %c0_i32_0 = arith.constant 0 : i32
    %c0_i32_1 = arith.constant 0 : i32
    return %c0_i32, %c0_i32_0 : i32, i32
  }
  func.func @transform_2(%arg0: i32) -> (i32, i32) {
    %c0_i32 = arith.constant 0 : i32
    %c0_i32_0 = arith.constant 0 : i32
    %c0_i32_1 = arith.constant 0 : i32
    return %c0_i32, %c0_i32_0 : i32, i32
  }
  func.func @transform_3(%arg0: i32) -> (i32, i32) {
    %c0_i32 = arith.constant 0 : i32
    %c0_i32_0 = arith.constant 0 : i32
    %c0_i32_1 = arith.constant 0 : i32
    return %c0_i32, %c0_i32_0 : i32, i32
  }
  func.func @transform_4(%arg0: i32) -> (i32, i32) {
    %c0_i32 = arith.constant 0 : i32
    %c0_i32_0 = arith.constant 0 : i32
    return %arg0, %c0_i32 : i32, i32
  }
  func.func @transform_5(%arg0: i32) -> (i32, i32, i32) {
    %c0_i32 = arith.constant 0 : i32
    %c0_i32_0 = arith.constant 0 : i32
    %c0_i32_1 = arith.constant 0 : i32
    return %arg0, %c0_i32, %c0_i32_0 : i32, i32, i32
  }
  func.func @transform_6(%arg0: i32) -> (i32, i32, i32) {
    %c0_i32 = arith.constant 0 : i32
    %c0_i32_0 = arith.constant 0 : i32
    %c0_i32_1 = arith.constant 0 : i32
    return %arg0, %c0_i32, %c0_i32_0 : i32, i32, i32
  }
}

module attributes {stable_mosaic.version = 11 : i64} {
  func.func @_final_kernel(%arg0: i32, %arg1: memref<512x64xbf16, #tpu.memory_space<vmem>>, %arg2: memref<1x64xf32, #tpu.memory_space<vmem>>, %arg3: memref<1x64xf32, #tpu.memory_space<vmem>>, %arg4: memref<1x64xf32, #tpu.memory_space<vmem>>, %arg5: memref<1x1xf32, #tpu.memory_space<vmem>>, %arg6: memref<512x1xf32, #tpu.memory_space<vmem>>) attributes {dimension_semantics = [#tpu.dimension_semantics<parallel>], iteration_bounds = array<i64: 1>, scalar_prefetch = 0 : i64, scratch_operands = 0 : i64, tpu.core_type = #tpu.core_type<tc>, window_params = [{transform_indices = @transform_0, window_bounds = array<i64: 512, 64>}, {pipeline_mode = #tpu.pipeline_mode<synchronous>, transform_indices = @transform_1, window_bounds = array<i64: 1, 64>}, {pipeline_mode = #tpu.pipeline_mode<synchronous>, transform_indices = @transform_2, window_bounds = array<i64: 1, 64>}, {pipeline_mode = #tpu.pipeline_mode<synchronous>, transform_indices = @transform_3, window_bounds = array<i64: 1, 64>}, {pipeline_mode = #tpu.pipeline_mode<synchronous>, transform_indices = @transform_4, window_bounds = array<i64: 1, 1>}, {transform_indices = @transform_5, window_bounds = array<i64: 512, 1>}]} {
    %c0 = arith.constant 0 : index
    %c0_0 = arith.constant 0 : index
    %0 = vector.load %arg1[%c0, %c0_0] : memref<512x64xbf16, #tpu.memory_space<vmem>>, vector<512x64xbf16>
    %1 = arith.extf %0 : vector<512x64xbf16> to vector<512x64xf32>
    %c0_1 = arith.constant 0 : index
    %c0_2 = arith.constant 0 : index
    %2 = vector.load %arg2[%c0_1, %c0_2] : memref<1x64xf32, #tpu.memory_space<vmem>>, vector<1x64xf32>
    %3 = vector.broadcast %2 : vector<1x64xf32> to vector<512x64xf32>
    %4 = arith.mulf %1, %3 : vector<512x64xf32>
    %c0_3 = arith.constant 0 : index
    %c0_4 = arith.constant 0 : index
    %5 = vector.load %arg3[%c0_3, %c0_4] : memref<1x64xf32, #tpu.memory_space<vmem>>, vector<1x64xf32>
    %6 = vector.broadcast %5 : vector<1x64xf32> to vector<512x64xf32>
    %7 = arith.addf %4, %6 : vector<512x64xf32>
    %cst = arith.constant 0.000000e+00 : f32
    %8 = vector.broadcast %cst : f32 to vector<512x64xf32>
    %9 = arith.maximumf %7, %8 : vector<512x64xf32>
    %c0_5 = arith.constant 0 : index
    %c0_6 = arith.constant 0 : index
    %10 = vector.load %arg4[%c0_5, %c0_6] : memref<1x64xf32, #tpu.memory_space<vmem>>, vector<1x64xf32>
    %11 = vector.broadcast %10 : vector<1x64xf32> to vector<512x64xf32>
    %12 = arith.mulf %9, %11 : vector<512x64xf32>
    %cst_7 = arith.constant dense<0.000000e+00> : vector<512xf32>
    %13 = vector.multi_reduction <add>, %12, %cst_7 [1] : vector<512x64xf32> to vector<512xf32>
    %14 = vector.shape_cast %13 : vector<512xf32> to vector<512x1xf32>
    %c0_8 = arith.constant 0 : index
    %c0_9 = arith.constant 0 : index
    %15 = vector.load %arg5[%c0_8, %c0_9] : memref<1x1xf32, #tpu.memory_space<vmem>>, vector<1x1xf32>
    %16 = vector.broadcast %15 : vector<1x1xf32> to vector<512x1xf32>
    %17 = arith.addf %14, %16 : vector<512x1xf32>
    %18 = arith.negf %17 : vector<512x1xf32>
    %19 = math.exp %18 : vector<512x1xf32>
    %cst_10 = arith.constant 1.000000e+00 : f32
    %20 = vector.broadcast %cst_10 : f32 to vector<512x1xf32>
    %21 = arith.addf %20, %19 : vector<512x1xf32>
    %22 = arith.divf %20, %21 : vector<512x1xf32>
    %c0_11 = arith.constant 0 : index
    %c0_12 = arith.constant 0 : index
    %23 = vector.load %arg6[%c0_11, %c0_12] : memref<512x1xf32, #tpu.memory_space<vmem>>, vector<512x1xf32>
    tpu.vector_store %arg6[%c0_11, %c0_12], %22 {strides = array<i32>} : memref<512x1xf32, #tpu.memory_space<vmem>>, vector<512x1xf32>,
    return
  }
  func.func @transform_0(%arg0: i32) -> (i32, i32) {
    %c0_i32 = arith.constant 0 : i32
    %c0_i32_0 = arith.constant 0 : i32
    return %arg0, %c0_i32 : i32, i32
  }
  func.func @transform_1(%arg0: i32) -> (i32, i32) {
    %c0_i32 = arith.constant 0 : i32
    %c0_i32_0 = arith.constant 0 : i32
    %c0_i32_1 = arith.constant 0 : i32
    return %c0_i32, %c0_i32_0 : i32, i32
  }
  func.func @transform_2(%arg0: i32) -> (i32, i32) {
    %c0_i32 = arith.constant 0 : i32
    %c0_i32_0 = arith.constant 0 : i32
    %c0_i32_1 = arith.constant 0 : i32
    return %c0_i32, %c0_i32_0 : i32, i32
  }
  func.func @transform_3(%arg0: i32) -> (i32, i32) {
    %c0_i32 = arith.constant 0 : i32
    %c0_i32_0 = arith.constant 0 : i32
    %c0_i32_1 = arith.constant 0 : i32
    return %c0_i32, %c0_i32_0 : i32, i32
  }
  func.func @transform_4(%arg0: i32) -> (i32, i32) {
    %c0_i32 = arith.constant 0 : i32
    %c0_i32_0 = arith.constant 0 : i32
    %c0_i32_1 = arith.constant 0 : i32
    return %c0_i32, %c0_i32_0 : i32, i32
  }
  func.func @transform_5(%arg0: i32) -> (i32, i32) {
    %c0_i32 = arith.constant 0 : i32
    %c0_i32_0 = arith.constant 0 : i32
    return %arg0, %c0_i32 : i32, i32
  }
}

</mosaic_0001>

<llo_original>
// kernel: squeeze.47
$region0: #{squeeze.47}
  %s0 = inlined_call_operand.vmem [shape: f32[512], index: 0, kind: input, shape index: {}]
  %s1 = inlined_call_operand.hbm [shape: f32[2,1,16,16], index: 1, kind: output, shape index: {}]
  $region1: #{squeeze.47} parent=0
    #allocation0 [shape = 'u8[16384]{0}', space=vmem, size = 0x4000, scoped, tag = 'operand span for operand 1']
    #allocation1 [shape = 's32[1]{0}', space=sflag, size = 0x4, scoped, tag = 'scoped memory for squeeze.47']
    #allocation2 [shape = 'u8[4096]{0}', space=vmem, size = 0x1000, scoped, tag = 'scoped mem for input reshape']
    %2 = vsyncpa [#allocation1], 0
    %s4 = ssub.s32 16, 1
    %v5 = vld [vmem:[%s0] sm:%s4]
    %6 = vst [vmem:[#allocation2] sm:%s4] %v5
    %v7 = vld [vmem:[#allocation2] sm:$0xf]
    %vm8 = vcmask 130048
    %9 = vst.msk [vmem:[#allocation0] ss:$8 sm:$0xf] %vm8, %v7
    %v10 = vld [vmem:[#allocation2] sm:$0xf]
    %11 = vrot.lane.b32.xlu0 %v10, 112
    %v12 = vpop.permute.xlu0 %11
    %vm13 = vcmask 130048
    %s14 = scalar_lea.vmem [#allocation0], 1
    %15 = vst.msk [vmem:[%s14] ss:$8 sm:$0xf] %vm13, %v12
    %v16 = vld [vmem:[#allocation2] sm:$0xf]
    %17 = vrot.lane.b32.xlu0 %v16, 96
    %v18 = vpop.permute.xlu0 %17
    %vm19 = vcmask 130048
    %s20 = scalar_lea.vmem [#allocation0], 2
    %21 = vst.msk [vmem:[%s20] ss:$8 sm:$0xf] %vm19, %v18
    %v22 = vld [vmem:[#allocation2] sm:$0xf]
    %23 = vrot.lane.b32.xlu0 %v22, 80
    %v24 = vpop.permute.xlu0 %23
    %vm25 = vcmask 130048
    %s26 = scalar_lea.vmem [#allocation0], 3
    %27 = vst.msk [vmem:[%s26] ss:$8 sm:$0xf] %vm25, %v24
    %v28 = vld [vmem:[#allocation2] sm:$0xf]
    %29 = vrot.lane.b32.xlu0 %v28, 64
    %v30 = vpop.permute.xlu0 %29
    %vm31 = vcmask 130048
    %s32 = scalar_lea.vmem [#allocation0], 4
    %33 = vst.msk [vmem:[%s32] ss:$8 sm:$0xf] %vm31, %v30
    %v34 = vld [vmem:[#allocation2] sm:$0xf]
    %35 = vrot.lane.b32.xlu0 %v34, 48
    %v36 = vpop.permute.xlu0 %35
    %vm37 = vcmask 130048
    %s38 = scalar_lea.vmem [#allocation0], 5
    %39 = vst.msk [vmem:[%s38] ss:$8 sm:$0xf] %vm37, %v36
    %v40 = vld [vmem:[#allocation2] sm:$0xf]
    %41 = vrot.lane.b32.xlu0 %v40, 32
    %v42 = vpop.permute.xlu0 %41
    %vm43 = vcmask 130048
    %s44 = scalar_lea.vmem [#allocation0], 6
    %45 = vst.msk [vmem:[%s44] ss:$8 sm:$0xf] %vm43, %v42
    %v46 = vld [vmem:[#allocation2] sm:$0xf]
    %47 = vrot.lane.b32.xlu0 %v46, 16
    %v48 = vpop.permute.xlu0 %47
    %vm49 = vcmask 130048
    %s50 = scalar_lea.vmem [#allocation0], 7
    %51 = vst.msk [vmem:[%s50] ss:$8 sm:$0xf] %vm49, %v48
    %53 = vsyncadd [#allocation1], 0
    %s55 = sshll.u32 [#allocation0], 4
    %s56 = int_to_ptr.vmem [resolvable:$true] %s55
    %s57 = sshll.u32 %s1, 4
    %s58 = int_to_ptr.hbm [resolvable:$true] %s57
    %60 = dma.vmem_to_hbm [thread:$0]  %s56, 512, %s58, [#allocation1]
    %62 = dma.done [#allocation1], 512
    %63 = vsyncpa [#allocation1], 1

// kernel: discriminator_forward.7
$region0: #{discriminator_forward.7}
  #allocation0 [shape = 'u32[]', space=smem, size = 0x4, offset = 0x4, fixed_abs, tag = 'smem constant byte address 0x4 - core index']
  #allocation1 [shape = 'u32[72,128]{1,0:T(1,128)}', space=vmem, size = 0x9000, scoped, tag = 'internal scratch']
  %s0 = inlined_call_operand.vmem [shape: bf16[512,64], index: 0, kind: input, shape index: {}]
  %s1 = inlined_call_operand.vmem [shape: f32[1,64], index: 1, kind: input, shape index: {}]
  %s2 = inlined_call_operand.vmem [shape: f32[1,64], index: 2, kind: input, shape index: {}]
  %s3 = inlined_call_operand.vmem [shape: bf16[64,64], index: 3, kind: input, shape index: {}]
  %s4 = inlined_call_operand.vmem [shape: bf16[512,64], index: 4, kind: output, shape index: {0}]
  %s5 = inlined_call_operand.vmem [shape: f32[1,1,64], index: 5, kind: output, shape index: {1}]
  %s6 = inlined_call_operand.vmem [shape: f32[1,1,64], index: 6, kind: output, shape index: {2}]
  %7 = xla_tuple %s4, %s5, %s6
  %s8 = sld [smem:[#allocation0]]
  $region42: #{discriminator_forward.7} parent=0
    _
  %s10 = ssub.s32 1, %s8
  %s11 = scalar_select 0, %s10, %s8
  // Predicated region
  $region2: #{discriminator_forward.7} parent=0 // pred_check
    _
  $region3: #{discriminator_forward.7} parent=0 // pred_check_branch
    %13 = sbr.rel (0) target = $region5
  $region4: #{discriminator_forward.7} parent=0 // pred_region
    _
  $region5: #{discriminator_forward.7} parent=0 // pred_fallthru
    _
  // Predicated region
  $region6: #{discriminator_forward.7} parent=0 // pred_check
    _
  $region7: #{discriminator_forward.7} parent=0 // pred_check_branch
    %15 = sbr.rel (0) target = $region9
  $region8: #{discriminator_forward.7} parent=0 // pred_region
    _
  $region9: #{discriminator_forward.7} parent=0 // pred_fallthru
    _
  // Predicated region
  $region10: #{discriminator_forward.7} parent=0 // pred_check
    _
  $region11: #{discriminator_forward.7} parent=0 // pred_check_branch
    %17 = sbr.rel (0) target = $region13
  $region12: #{discriminator_forward.7} parent=0 // pred_region
    _
  $region13: #{discriminator_forward.7} parent=0 // pred_fallthru
    _
  // Predicated region
  $region14: #{discriminator_forward.7} parent=0 // pred_check
    _
  $region15: #{discriminator_forward.7} parent=0 // pred_check_branch
    %19 = sbr.rel (0) target = $region17
  $region16: #{discriminator_forward.7} parent=0 // pred_region
    _
  $region17: #{discriminator_forward.7} parent=0 // pred_fallthru
    _
  %v21 = vld [vmem:[%s0] sm:$0xf]
  %v22 = vld [vmem:[%s0 + $0x4] sm:$0xf]
  %v23 = vld [vmem:[%s0 + $0x8] sm:$0xf]
  %v24 = vld [vmem:[%s0 + $0xc] sm:$0xf]
  %v25 = vld [vmem:[%s0 + $0x10] sm:$0xf]
  %v26 = vld [vmem:[%s0 + $0x14] sm:$0xf]
  %v27 = vld [vmem:[%s0 + $0x18] sm:$0xf]
  %v28 = vld [vmem:[%s0 + $0x1c] sm:$0xf]
  %v29 = vld [vmem:[%s0 + $0x20] sm:$0xf]
  %v30 = vld [vmem:[%s0 + $0x24] sm:$0xf]
  %v31 = vld [vmem:[%s0 + $0x28] sm:$0xf]
  %v32 = vld [vmem:[%s0 + $0x2c] sm:$0xf]
  %v33 = vld [vmem:[%s0 + $0x30] sm:$0xf]
  %v34 = vld [vmem:[%s0 + $0x34] sm:$0xf]
  %v35 = vld [vmem:[%s0 + $0x38] sm:$0xf]
  %v36 = vld [vmem:[%s0 + $0x3c] sm:$0xf]
  %v37 = vld [vmem:[%s0 + $0x40] sm:$0xf]
  %v38 = vld [vmem:[%s0 + $0x44] sm:$0xf]
  %v39 = vld [vmem:[%s0 + $0x48] sm:$0xf]
  %v40 = vld [vmem:[%s0 + $0x4c] sm:$0xf]
  %v41 = vld [vmem:[%s0 + $0x50] sm:$0xf]
  %v42 = vld [vmem:[%s0 + $0x54] sm:$0xf]
  %v43 = vld [vmem:[%s0 + $0x58] sm:$0xf]
  %v44 = vld [vmem:[%s0 + $0x5c] sm:$0xf]
  %v45 = vld [vmem:[%s0 + $0x60] sm:$0xf]
  %v46 = vld [vmem:[%s0 + $0x64] sm:$0xf]
  %v47 = vld [vmem:[%s0 + $0x68] sm:$0xf]
  %v48 = vld [vmem:[%s0 + $0x6c] sm:$0xf]
  %v49 = vld [vmem:[%s0 + $0x70] sm:$0xf]
  %v50 = vld [vmem:[%s0 + $0x74] sm:$0xf]
  %v51 = vld [vmem:[%s0 + $0x78] sm:$0xf]
  %v52 = vld [vmem:[%s0 + $0x7c] sm:$0xf]
  %v53 = vld [vmem:[%s0 + $0x80] sm:$0xf]
  %v54 = vld [vmem:[%s0 + $0x84] sm:$0xf]
  %v55 = vld [vmem:[%s0 + $0x88] sm:$0xf]
  %v56 = vld [vmem:[%s0 + $0x8c] sm:$0xf]
  %v57 = vld [vmem:[%s0 + $0x90] sm:$0xf]
  %v58 = vld [vmem:[%s0 + $0x94] sm:$0xf]
  %v59 = vld [vmem:[%s0 + $0x98] sm:$0xf]
  %v60 = vld [vmem:[%s0 + $0x9c] sm:$0xf]
  %v61 = vld [vmem:[%s0 + $0xa0] sm:$0xf]
  %v62 = vld [vmem:[%s0 + $0xa4] sm:$0xf]
  %v63 = vld [vmem:[%s0 + $0xa8] sm:$0xf]
  %v64 = vld [vmem:[%s0 + $0xac] sm:$0xf]
  %v65 = vld [vmem:[%s0 + $0xb0] sm:$0xf]
  %v66 = vld [vmem:[%s0 + $0xb4] sm:$0xf]
  %v67 = vld [vmem:[%s0 + $0xb8] sm:$0xf]
  %v68 = vld [vmem:[%s0 + $0xbc] sm:$0xf]
  %v69 = vld [vmem:[%s0 + $0xc0] sm:$0xf]
  %v70 = vld [vmem:[%s0 + $0xc4] sm:$0xf]
  %v71 = vld [vmem:[%s0 + $0xc8] sm:$0xf]
  %v72 = vld [vmem:[%s0 + $0xcc] sm:$0xf]
  %v73 = vld [vmem:[%s0 + $0xd0] sm:$0xf]
  %v74 = vld [vmem:[%s0 + $0xd4] sm:$0xf]
  %v75 = vld [vmem:[%s0 + $0xd8] sm:$0xf]
  %v76 = vld [vmem:[%s0 + $0xdc] sm:$0xf]
  %v77 = vld [vmem:[%s0 + $0xe0] sm:$0xf]
  %v78 = vld [vmem:[%s0 + $0xe4] sm:$0xf]
  %v79 = vld [vmem:[%s0 + $0xe8] sm:$0xf]
  %v80 = vld [vmem:[%s0 + $0xec] sm:$0xf]
  %v81 = vld [vmem:[%s0 + $0xf0] sm:$0xf]
  %v82 = vld [vmem:[%s0 + $0xf4] sm:$0xf]
  %v83 = vld [vmem:[%s0 + $0xf8] sm:$0xf]
  %v84 = vld [vmem:[%s0 + $0xfc] sm:$0xf]
  %v85 = vunpack.c.l.bf16 %v21
  %v86 = vunpack.c.l.bf16 %v22
  %v87 = vunpack.c.l.bf16 %v23
  %v88 = vunpack.c.l.bf16 %v24
  %v89 = vunpack.c.l.bf16 %v25
  %v90 = vunpack.c.l.bf16 %v26
  %v91 = vunpack.c.l.bf16 %v27
  %v92 = vunpack.c.l.bf16 %v28
  %v93 = vunpack.c.l.bf16 %v29
  %v94 = vunpack.c.l.bf16 %v30
  %v95 = vunpack.c.l.bf16 %v31
  %v96 = vunpack.c.l.bf16 %v32
  %v97 = vunpack.c.l.bf16 %v33
  %v98 = vunpack.c.l.bf16 %v34
  %v99 = vunpack.c.l.bf16 %v35
  %v100 = vunpack.c.l.bf16 %v36
  %v101 = vunpack.c.l.bf16 %v37
  %v102 = vunpack.c.l.bf16 %v38
  %v103 = vunpack.c.l.bf16 %v39
  %v104 = vunpack.c.l.bf16 %v40
  %v105 = vunpack.c.l.bf16 %v41
  %v106 = vunpack.c.l.bf16 %v42
  %v107 = vunpack.c.l.bf16 %v43
  %v108 = vunpack.c.l.bf16 %v44
  %v109 = vunpack.c.l.bf16 %v45
  %v110 = vunpack.c.l.bf16 %v46
  %v111 = vunpack.c.l.bf16 %v47
  %v112 = vunpack.c.l.bf16 %v48
  %v113 = vunpack.c.l.bf16 %v49
  %v114 = vunpack.c.l.bf16 %v50
  %v115 = vunpack.c.l.bf16 %v51
  %v116 = vunpack.c.l.bf16 %v52
  %v117 = vunpack.c.l.bf16 %v53
  %v118 = vunpack.c.l.bf16 %v54
  %v119 = vunpack.c.l.bf16 %v55
  %v120 = vunpack.c.l.bf16 %v56
  %v121 = vunpack.c.l.bf16 %v57
  %v122 = vunpack.c.l.bf16 %v58
  %v123 = vunpack.c.l.bf16 %v59
  %v124 = vunpack.c.l.bf16 %v60
  %v125 = vunpack.c.l.bf16 %v61
  %v126 = vunpack.c.l.bf16 %v62
  %v127 = vunpack.c.l.bf16 %v63
  %v128 = vunpack.c.l.bf16 %v64
  %v129 = vunpack.c.l.bf16 %v65
  %v130 = vunpack.c.l.bf16 %v66
  %v131 = vunpack.c.l.bf16 %v67
  %v132 = vunpack.c.l.bf16 %v68
  %v133 = vunpack.c.l.bf16 %v69
  %v134 = vunpack.c.l.bf16 %v70
  %v135 = vunpack.c.l.bf16 %v71
  %v136 = vunpack.c.l.bf16 %v72
  %v137 = vunpack.c.l.bf16 %v73
  %v138 = vunpack.c.l.bf16 %v74
  %v139 = vunpack.c.l.bf16 %v75
  %v140 = vunpack.c.l.bf16 %v76
  %v141 = vunpack.c.l.bf16 %v77
  %v142 = vunpack.c.l.bf16 %v78
  %v143 = vunpack.c.l.bf16 %v79
  %v144 = vunpack.c.l.bf16 %v80
  %v145 = vunpack.c.l.bf16 %v81
  %v146 = vunpack.c.l.bf16 %v82
  %v147 = vunpack.c.l.bf16 %v83
  %v148 = vunpack.c.l.bf16 %v84
  %v149 = vld [vmem:[%s1] sm:$0x1]
  %v151 = vperm.slane %v149, 0
  %v153 = vmul.f32 %v85, %v151
  %v154 = vmul.f32 %v86, %v151
  %v155 = vmul.f32 %v87, %v151
  %v156 = vmul.f32 %v88, %v151
  %v157 = vmul.f32 %v89, %v151
  %v158 = vmul.f32 %v90, %v151
  %v159 = vmul.f32 %v91, %v151
  %v160 = vmul.f32 %v92, %v151
  %v161 = vmul.f32 %v93, %v151
  %v162 = vmul.f32 %v94, %v151
  %v163 = vmul.f32 %v95, %v151
  %v164 = vmul.f32 %v96, %v151
  %v165 = vmul.f32 %v97, %v151
  %v166 = vmul.f32 %v98, %v151
  %v167 = vmul.f32 %v99, %v151
  %v168 = vmul.f32 %v100, %v151
  %v169 = vmul.f32 %v101, %v151
  %v170 = vmul.f32 %v102, %v151
  %v171 = vmul.f32 %v103, %v151
  %v172 = vmul.f32 %v104, %v151
  %v173 = vmul.f32 %v105, %v151
  %v174 = vmul.f32 %v106, %v151
  %v175 = vmul.f32 %v107, %v151
  %v176 = vmul.f32 %v108, %v151
  %v177 = vmul.f32 %v109, %v151
  %v178 = vmul.f32 %v110, %v151
  %v179 = vmul.f32 %v111, %v151
  %v180 = vmul.f32 %v112, %v151
  %v181 = vmul.f32 %v113, %v151
  %v182 = vmul.f32 %v114, %v151
  %v183 = vmul.f32 %v115, %v151
  %v184 = vmul.f32 %v116, %v151
  %v185 = vmul.f32 %v117, %v151
  %v186 = vmul.f32 %v118, %v151
  %v187 = vmul.f32 %v119, %v151
  %v188 = vmul.f32 %v120, %v151
  %v189 = vmul.f32 %v121, %v151
  %v190 = vmul.f32 %v122, %v151
  %v191 = vmul.f32 %v123, %v151
  %v192 = vmul.f32 %v124, %v151
  %v193 = vmul.f32 %v125, %v151
  %v194 = vmul.f32 %v126, %v151
  %v195 = vmul.f32 %v127, %v151
  %v196 = vmul.f32 %v128, %v151
  %v197 = vmul.f32 %v129, %v151
  %v198 = vmul.f32 %v130, %v151
  %v199 = vmul.f32 %v131, %v151
  %v200 = vmul.f32 %v132, %v151
  %v201 = vmul.f32 %v133, %v151
  %v202 = vmul.f32 %v134, %v151
  %v203 = vmul.f32 %v135, %v151
  %v204 = vmul.f32 %v136, %v151
  %v205 = vmul.f32 %v137, %v151
  %v206 = vmul.f32 %v138, %v151
  %v207 = vmul.f32 %v139, %v151
  %v208 = vmul.f32 %v140, %v151
  %v209 = vmul.f32 %v141, %v151
  %v210 = vmul.f32 %v142, %v151
  %v211 = vmul.f32 %v143, %v151
  %v212 = vmul.f32 %v144, %v151
  %v213 = vmul.f32 %v145, %v151
  %v214 = vmul.f32 %v146, %v151
  %v215 = vmul.f32 %v147, %v151
  %v216 = vmul.f32 %v148, %v151
  %v217 = vld [vmem:[%s2] sm:$0x1]
  %v219 = vperm.slane %v217, 0
  %v221 = vadd.f32 %v153, %v219
  %v222 = vadd.f32 %v154, %v219
  %v223 = vadd.f32 %v155, %v219
  %v224 = vadd.f32 %v156, %v219
  %v225 = vadd.f32 %v157, %v219
  %v226 = vadd.f32 %v158, %v219
  %v227 = vadd.f32 %v159, %v219
  %v228 = vadd.f32 %v160, %v219
  %v229 = vadd.f32 %v161, %v219
  %v230 = vadd.f32 %v162, %v219
  %v231 = vadd.f32 %v163, %v219
  %v232 = vadd.f32 %v164, %v219
  %v233 = vadd.f32 %v165, %v219
  %v234 = vadd.f32 %v166, %v219
  %v235 = vadd.f32 %v167, %v219
  %v236 = vadd.f32 %v168, %v219
  %v237 = vadd.f32 %v169, %v219
  %v238 = vadd.f32 %v170, %v219
  %v239 = vadd.f32 %v171, %v219
  %v240 = vadd.f32 %v172, %v219
  %v241 = vadd.f32 %v173, %v219
  %v242 = vadd.f32 %v174, %v219
  %v243 = vadd.f32 %v175, %v219
  %v244 = vadd.f32 %v176, %v219
  %v245 = vadd.f32 %v177, %v219
  %v246 = vadd.f32 %v178, %v219
  %v247 = vadd.f32 %v179, %v219
  %v248 = vadd.f32 %v180, %v219
  %v249 = vadd.f32 %v181, %v219
  %v250 = vadd.f32 %v182, %v219
  %v251 = vadd.f32 %v183, %v219
  %v252 = vadd.f32 %v184, %v219
  %v253 = vadd.f32 %v185, %v219
  %v254 = vadd.f32 %v186, %v219
  %v255 = vadd.f32 %v187, %v219
  %v256 = vadd.f32 %v188, %v219
  %v257 = vadd.f32 %v189, %v219
  %v258 = vadd.f32 %v190, %v219
  %v259 = vadd.f32 %v191, %v219
  %v260 = vadd.f32 %v192, %v219
  %v261 = vadd.f32 %v193, %v219
  %v262 = vadd.f32 %v194, %v219
  %v263 = vadd.f32 %v195, %v219
  %v264 = vadd.f32 %v196, %v219
  %v265 = vadd.f32 %v197, %v219
  %v266 = vadd.f32 %v198, %v219
  %v267 = vadd.f32 %v199, %v219
  %v268 = vadd.f32 %v200, %v219
  %v269 = vadd.f32 %v201, %v219
  %v270 = vadd.f32 %v202, %v219
  %v271 = vadd.f32 %v203, %v219
  %v272 = vadd.f32 %v204, %v219
  %v273 = vadd.f32 %v205, %v219
  %v274 = vadd.f32 %v206, %v219
  %v275 = vadd.f32 %v207, %v219
  %v276 = vadd.f32 %v208, %v219
  %v277 = vadd.f32 %v209, %v219
  %v278 = vadd.f32 %v210, %v219
  %v279 = vadd.f32 %v211, %v219
  %v280 = vadd.f32 %v212, %v219
  %v281 = vadd.f32 %v213, %v219
  %v282 = vadd.f32 %v214, %v219
  %v283 = vadd.f32 %v215, %v219
  %v284 = vadd.f32 %v216, %v219
  %v285 = vmax.f32 %v221, 0.0
  %v286 = vmax.f32 %v222, 0.0
  %v287 = vmax.f32 %v223, 0.0
  %v288 = vmax.f32 %v224, 0.0
  %v289 = vmax.f32 %v225, 0.0
  %v290 = vmax.f32 %v226, 0.0
  %v291 = vmax.f32 %v227, 0.0
  %v292 = vmax.f32 %v228, 0.0
  %v293 = vmax.f32 %v229, 0.0
  %v294 = vmax.f32 %v230, 0.0
  %v295 = vmax.f32 %v231, 0.0
  %v296 = vmax.f32 %v232, 0.0
  %v297 = vmax.f32 %v233, 0.0
  %v298 = vmax.f32 %v234, 0.0
  %v299 = vmax.f32 %v235, 0.0
  %v300 = vmax.f32 %v236, 0.0
  %v301 = vmax.f32 %v237, 0.0
  %v302 = vmax.f32 %v238, 0.0
  %v303 = vmax.f32 %v239, 0.0
  %v304 = vmax.f32 %v240, 0.0
  %v305 = vmax.f32 %v241, 0.0
  %v306 = vmax.f32 %v242, 0.0
  %v307 = vmax.f32 %v243, 0.0
  %v308 = vmax.f32 %v244, 0.0
  %v309 = vmax.f32 %v245, 0.0
  %v310 = vmax.f32 %v246, 0.0
  %v311 = vmax.f32 %v247, 0.0
  %v312 = vmax.f32 %v248, 0.0
  %v313 = vmax.f32 %v249, 0.0
  %v314 = vmax.f32 %v250, 0.0
  %v315 = vmax.f32 %v251, 0.0
  %v316 = vmax.f32 %v252, 0.0
  %v317 = vmax.f32 %v253, 0.0
  %v318 = vmax.f32 %v254, 0.0
  %v319 = vmax.f32 %v255, 0.0
  %v320 = vmax.f32 %v256, 0.0
  %v321 = vmax.f32 %v257, 0.0
  %v322 = vmax.f32 %v258, 0.0
  %v323 = vmax.f32 %v259, 0.0
  %v324 = vmax.f32 %v260, 0.0
  %v325 = vmax.f32 %v261, 0.0
  %v326 = vmax.f32 %v262, 0.0
  %v327 = vmax.f32 %v263, 0.0
  %v328 = vmax.f32 %v264, 0.0
  %v329 = vmax.f32 %v265, 0.0
  %v330 = vmax.f32 %v266, 0.0
  %v331 = vmax.f32 %v267, 0.0
  %v332 = vmax.f32 %v268, 0.0
  %v333 = vmax.f32 %v269, 0.0
  %v334 = vmax.f32 %v270, 0.0
  %v335 = vmax.f32 %v271, 0.0
  %v336 = vmax.f32 %v272, 0.0
  %v337 = vmax.f32 %v273, 0.0
  %v338 = vmax.f32 %v274, 0.0
  %v339 = vmax.f32 %v275, 0.0
  %v340 = vmax.f32 %v276, 0.0
  %v341 = vmax.f32 %v277, 0.0
  %v342 = vmax.f32 %v278, 0.0
  %v343 = vmax.f32 %v279, 0.0
  %v344 = vmax.f32 %v280, 0.0
  %v345 = vmax.f32 %v281, 0.0
  %v346 = vmax.f32 %v282, 0.0
  %v347 = vmax.f32 %v283, 0.0
  %v348 = vmax.f32 %v284, 0.0
  %v349 = vpack.c.bf16 %v286, %v285
  %v350 = vpack.c.bf16 %v288, %v287
  %v351 = vpack.c.bf16 %v290, %v289
  %v352 = vpack.c.bf16 %v292, %v291
  %v353 = vpack.c.bf16 %v294, %v293
  %v354 = vpack.c.bf16 %v296, %v295
  %v355 = vpack.c.bf16 %v298, %v297
  %v356 = vpack.c.bf16 %v300, %v299
  %v357 = vpack.c.bf16 %v302, %v301
  %v358 = vpack.c.bf16 %v304, %v303
  %v359 = vpack.c.bf16 %v306, %v305
  %v360 = vpack.c.bf16 %v308, %v307
  %v361 = vpack.c.bf16 %v310, %v309
  %v362 = vpack.c.bf16 %v312, %v311
  %v363 = vpack.c.bf16 %v314, %v313
  %v364 = vpack.c.bf16 %v316, %v315
  %v365 = vpack.c.bf16 %v318, %v317
  %v366 = vpack.c.bf16 %v320, %v319
  %v367 = vpack.c.bf16 %v322, %v321
  %v368 = vpack.c.bf16 %v324, %v323
  %v369 = vpack.c.bf16 %v326, %v325
  %v370 = vpack.c.bf16 %v328, %v327
  %v371 = vpack.c.bf16 %v330, %v329
  %v372 = vpack.c.bf16 %v332, %v331
  %v373 = vpack.c.bf16 %v334, %v333
  %v374 = vpack.c.bf16 %v336, %v335
  %v375 = vpack.c.bf16 %v338, %v337
  %v376 = vpack.c.bf16 %v340, %v339
  %v377 = vpack.c.bf16 %v342, %v341
  %v378 = vpack.c.bf16 %v344, %v343
  %v379 = vpack.c.bf16 %v346, %v345
  %v380 = vpack.c.bf16 %v348, %v347
  %v381 = vld [vmem:[%s3] sm:$0xf]
  %v382 = vld [vmem:[%s3 + $0x4] sm:$0xf]
  %v383 = vld [vmem:[%s3 + $0x8] sm:$0xf]
  %v384 = vld [vmem:[%s3 + $0xc] sm:$0xf]
  %v385 = vld [vmem:[%s3 + $0x10] sm:$0xf]
  %v386 = vld [vmem:[%s3 + $0x14] sm:$0xf]
  %v387 = vld [vmem:[%s3 + $0x18] sm:$0xf]
  %v388 = vld [vmem:[%s3 + $0x1c] sm:$0xf]
  %v397 = vunpack.c.l.b16 %v381
  %v398 = vunpack.c.l.b16 %v382
  %v399 = vunpack.c.l.b16 %v383
  %v400 = vunpack.c.l.b16 %v384
  %v401 = vunpack.c.l.b16 %v385
  %v402 = vunpack.c.l.b16 %v386
  %v403 = vunpack.c.l.b16 %v387
  %v404 = vunpack.c.l.b16 %v388
  %v405 = vpack.c.b16 %v398, %v397
  %v406 = vpack.c.b16 %v400, %v399
  %v407 = vpack.c.b16 %v402, %v401
  %v408 = vpack.c.b16 %v404, %v403
  %vm413 = vcmask 523264
  %v415 = vsel %vm413, %v349, 0
  %v418 = vsel %vm413, %v350, 0
  %v421 = vsel %vm413, %v351, 0
  %v424 = vsel %vm413, %v352, 0
  %v427 = vsel %vm413, %v353, 0
  %v430 = vsel %vm413, %v354, 0
  %v433 = vsel %vm413, %v355, 0
  %v436 = vsel %vm413, %v356, 0
  %v439 = vsel %vm413, %v357, 0
  %v442 = vsel %vm413, %v358, 0
  %v445 = vsel %vm413, %v359, 0
  %v448 = vsel %vm413, %v360, 0
  %v451 = vsel %vm413, %v361, 0
  %v454 = vsel %vm413, %v362, 0
  %v457 = vsel %vm413, %v363, 0
  %v460 = vsel %vm413, %v364, 0
  %v463 = vsel %vm413, %v365, 0
  %v466 = vsel %vm413, %v366, 0
  %v469 = vsel %vm413, %v367, 0
  %v472 = vsel %vm413, %v368, 0
  %v475 = vsel %vm413, %v369, 0
  %v478 = vsel %vm413, %v370, 0
  %v481 = vsel %vm413, %v371, 0
  %v484 = vsel %vm413, %v372, 0
  %v487 = vsel %vm413, %v373, 0
  %v490 = vsel %vm413, %v374, 0
  %v493 = vsel %vm413, %v375, 0
  %v496 = vsel %vm413, %v376, 0
  %v499 = vsel %vm413, %v377, 0
  %v502 = vsel %vm413, %v378, 0
  %v505 = vsel %vm413, %v379, 0
  %v508 = vsel %vm413, %v380, 0
  %510 = vmatpush.bf16.msra.mxu0 0
  %511 = vmatpush.bf16.msra.mxu0 0
  %512 = vmatpush.bf16.msra.mxu0 0
  %513 = vmatpush.bf16.msra.mxu0 0
  %514 = vmatpush.bf16.msra.mxu0 %v408
  %515 = vmatpush.bf16.msra.mxu0 %v407
  %516 = vmatpush.bf16.msra.mxu0 %v406
  %517 = vmatpush.bf16.msra.mxu0 %v405
  %518 = vmatmul.bf16.gmra.mxu0 %v415
  %v519 = vpop.f32.mrf.mxu0
  %v520 = vadd.f32 0.0, %v519
  %v521 = vpop.f32.mrf.mxu0
  %v522 = vadd.f32 0.0, %v521
  %523 = vmatmul.bf16.gmra.mxu0 %v418
  %v524 = vpop.f32.mrf.mxu0
  %v525 = vadd.f32 0.0, %v524
  %v526 = vpop.f32.mrf.mxu0
  %v527 = vadd.f32 0.0, %v526
  %528 = vmatmul.bf16.gmra.mxu0 %v421
  %v529 = vpop.f32.mrf.mxu0
  %v530 = vadd.f32 0.0, %v529
  %v531 = vpop.f32.mrf.mxu0
  %v532 = vadd.f32 0.0, %v531
  %533 = vmatmul.bf16.gmra.mxu0 %v424
  %v534 = vpop.f32.mrf.mxu0
  %v535 = vadd.f32 0.0, %v534
  %v536 = vpop.f32.mrf.mxu0
  %v537 = vadd.f32 0.0, %v536
  %538 = vmatmul.bf16.gmra.mxu0 %v427
  %v539 = vpop.f32.mrf.mxu0
  %v540 = vadd.f32 0.0, %v539
  %v541 = vpop.f32.mrf.mxu0
  %v542 = vadd.f32 0.0, %v541
  %543 = vmatmul.bf16.gmra.mxu0 %v430
  %v544 = vpop.f32.mrf.mxu0
  %v545 = vadd.f32 0.0, %v544
  %v546 = vpop.f32.mrf.mxu0
  %v547 = vadd.f32 0.0, %v546
  %548 = vmatmul.bf16.gmra.mxu0 %v433
  %v549 = vpop.f32.mrf.mxu0
  %v550 = vadd.f32 0.0, %v549
  %v551 = vpop.f32.mrf.mxu0
  %v552 = vadd.f32 0.0, %v551
  %553 = vmatmul.bf16.gmra.mxu0 %v436
  %v554 = vpop.f32.mrf.mxu0
  %v555 = vadd.f32 0.0, %v554
  %v556 = vpop.f32.mrf.mxu0
  %v557 = vadd.f32 0.0, %v556
  %558 = vmatmul.bf16.gmra.mxu0 %v439
  %v559 = vpop.f32.mrf.mxu0
  %v560 = vadd.f32 0.0, %v559
  %v561 = vpop.f32.mrf.mxu0
  %v562 = vadd.f32 0.0, %v561
  %563 = vmatmul.bf16.gmra.mxu0 %v442
  %v564 = vpop.f32.mrf.mxu0
  %v565 = vadd.f32 0.0, %v564
  %v566 = vpop.f32.mrf.mxu0
  %v567 = vadd.f32 0.0, %v566
  %568 = vmatmul.bf16.gmra.mxu0 %v445
  %v569 = vpop.f32.mrf.mxu0
  %v570 = vadd.f32 0.0, %v569
  %v571 = vpop.f32.mrf.mxu0
  %v572 = vadd.f32 0.0, %v571
  %573 = vmatmul.bf16.gmra.mxu0 %v448
  %v574 = vpop.f32.mrf.mxu0
  %v575 = vadd.f32 0.0, %v574
  %v576 = vpop.f32.mrf.mxu0
  %v577 = vadd.f32 0.0, %v576
  %578 = vmatmul.bf16.gmra.mxu0 %v451
  %v579 = vpop.f32.mrf.mxu0
  %v580 = vadd.f32 0.0, %v579
  %v581 = vpop.f32.mrf.mxu0
  %v582 = vadd.f32 0.0, %v581
  %583 = vmatmul.bf16.gmra.mxu0 %v454
  %v584 = vpop.f32.mrf.mxu0
  %v585 = vadd.f32 0.0, %v584
  %v586 = vpop.f32.mrf.mxu0
  %v587 = vadd.f32 0.0, %v586
  %588 = vmatmul.bf16.gmra.mxu0 %v457
  %v589 = vpop.f32.mrf.mxu0
  %v590 = vadd.f32 0.0, %v589
  %v591 = vpop.f32.mrf.mxu0
  %v592 = vadd.f32 0.0, %v591
  %593 = vmatmul.bf16.gmra.mxu0 %v460
  %v594 = vpop.f32.mrf.mxu0
  %v595 = vadd.f32 0.0, %v594
  %v596 = vpop.f32.mrf.mxu0
  %v597 = vadd.f32 0.0, %v596
  %598 = vmatmul.bf16.gmra.mxu0 %v463
  %v599 = vpop.f32.mrf.mxu0
  %v600 = vadd.f32 0.0, %v599
  %v601 = vpop.f32.mrf.mxu0
  %v602 = vadd.f32 0.0, %v601
  %603 = vmatmul.bf16.gmra.mxu0 %v466
  %v604 = vpop.f32.mrf.mxu0
  %v605 = vadd.f32 0.0, %v604
  %v606 = vpop.f32.mrf.mxu0
  %v607 = vadd.f32 0.0, %v606
  %608 = vmatmul.bf16.gmra.mxu0 %v469
  %v609 = vpop.f32.mrf.mxu0
  %v610 = vadd.f32 0.0, %v609
  %v611 = vpop.f32.mrf.mxu0
  %v612 = vadd.f32 0.0, %v611
  %613 = vmatmul.bf16.gmra.mxu0 %v472
  %v614 = vpop.f32.mrf.mxu0
  %v615 = vadd.f32 0.0, %v614
  %v616 = vpop.f32.mrf.mxu0
  %v617 = vadd.f32 0.0, %v616
  %618 = vmatmul.bf16.gmra.mxu0 %v475
  %v619 = vpop.f32.mrf.mxu0
  %v620 = vadd.f32 0.0, %v619
  %v621 = vpop.f32.mrf.mxu0
  %v622 = vadd.f32 0.0, %v621
  %623 = vmatmul.bf16.gmra.mxu0 %v478
  %v624 = vpop.f32.mrf.mxu0
  %v625 = vadd.f32 0.0, %v624
  %v626 = vpop.f32.mrf.mxu0
  %v627 = vadd.f32 0.0, %v626
  %628 = vmatmul.bf16.gmra.mxu0 %v481
  %v629 = vpop.f32.mrf.mxu0
  %v630 = vadd.f32 0.0, %v629
  %v631 = vpop.f32.mrf.mxu0
  %v632 = vadd.f32 0.0, %v631
  %633 = vmatmul.bf16.gmra.mxu0 %v484
  %v634 = vpop.f32.mrf.mxu0
  %v635 = vadd.f32 0.0, %v634
  %v636 = vpop.f32.mrf.mxu0
  %v637 = vadd.f32 0.0, %v636
  %638 = vmatmul.bf16.gmra.mxu0 %v487
  %v639 = vpop.f32.mrf.mxu0
  %v640 = vadd.f32 0.0, %v639
  %v641 = vpop.f32.mrf.mxu0
  %v642 = vadd.f32 0.0, %v641
  %643 = vmatmul.bf16.gmra.mxu0 %v490
  %v644 = vpop.f32.mrf.mxu0
  %v645 = vadd.f32 0.0, %v644
  %v646 = vpop.f32.mrf.mxu0
  %v647 = vadd.f32 0.0, %v646
  %648 = vmatmul.bf16.gmra.mxu0 %v493
  %v649 = vpop.f32.mrf.mxu0
  %v650 = vadd.f32 0.0, %v649
  %v651 = vpop.f32.mrf.mxu0
  %v652 = vadd.f32 0.0, %v651
  %653 = vmatmul.bf16.gmra.mxu0 %v496
  %v654 = vpop.f32.mrf.mxu0
  %v655 = vadd.f32 0.0, %v654
  %v656 = vpop.f32.mrf.mxu0
  %v657 = vadd.f32 0.0, %v656
  %658 = vmatmul.bf16.gmra.mxu0 %v499
  %v659 = vpop.f32.mrf.mxu0
  %v660 = vadd.f32 0.0, %v659
  %v661 = vpop.f32.mrf.mxu0
  %v662 = vadd.f32 0.0, %v661
  %663 = vmatmul.bf16.gmra.mxu0 %v502
  %v664 = vpop.f32.mrf.mxu0
  %v665 = vadd.f32 0.0, %v664
  %v666 = vpop.f32.mrf.mxu0
  %v667 = vadd.f32 0.0, %v666
  %668 = vmatmul.bf16.gmra.mxu0 %v505
  %v669 = vpop.f32.mrf.mxu0
  %v670 = vadd.f32 0.0, %v669
  %v671 = vpop.f32.mrf.mxu0
  %v672 = vadd.f32 0.0, %v671
  %673 = vmatmul.bf16.gmra.mxu0 %v508
  %v674 = vpop.f32.mrf.mxu0
  %v675 = vadd.f32 0.0, %v674
  %v676 = vpop.f32.mrf.mxu0
  %v677 = vadd.f32 0.0, %v676
  %678 = vdwg.mxu0
  %v679 = vpack.c.bf16 %v520, %v520
  %v680 = vpack.c.bf16 %v522, %v522
  %v681 = vpack.c.bf16 %v525, %v525
  %v682 = vpack.c.bf16 %v527, %v527
  %v683 = vpack.c.bf16 %v530, %v530
  %v684 = vpack.c.bf16 %v532, %v532
  %v685 = vpack.c.bf16 %v535, %v535
  %v686 = vpack.c.bf16 %v537, %v537
  %v687 = vpack.c.bf16 %v540, %v540
  %v688 = vpack.c.bf16 %v542, %v542
  %v689 = vpack.c.bf16 %v545, %v545
  %v690 = vpack.c.bf16 %v547, %v547
  %v691 = vpack.c.bf16 %v550, %v550
  %v692 = vpack.c.bf16 %v552, %v552
  %v693 = vpack.c.bf16 %v555, %v555
  %v694 = vpack.c.bf16 %v557, %v557
  %v695 = vpack.c.bf16 %v560, %v560
  %v696 = vpack.c.bf16 %v562, %v562
  %v697 = vpack.c.bf16 %v565, %v565
  %v698 = vpack.c.bf16 %v567, %v567
  %v699 = vpack.c.bf16 %v570, %v570
  %v700 = vpack.c.bf16 %v572, %v572
  %v701 = vpack.c.bf16 %v575, %v575
  %v702 = vpack.c.bf16 %v577, %v577
  %v703 = vpack.c.bf16 %v580, %v580
  %v704 = vpack.c.bf16 %v582, %v582
  %v705 = vpack.c.bf16 %v585, %v585
  %v706 = vpack.c.bf16 %v587, %v587
  %v707 = vpack.c.bf16 %v590, %v590
  %v708 = vpack.c.bf16 %v592, %v592
  %v709 = vpack.c.bf16 %v595, %v595
  %v710 = vpack.c.bf16 %v597, %v597
  %v711 = vpack.c.bf16 %v600, %v600
  %v712 = vpack.c.bf16 %v602, %v602
  %v713 = vpack.c.bf16 %v605, %v605
  %v714 = vpack.c.bf16 %v607, %v607
  %v715 = vpack.c.bf16 %v610, %v610
  %v716 = vpack.c.bf16 %v612, %v612
  %v717 = vpack.c.bf16 %v615, %v615
  %v718 = vpack.c.bf16 %v617, %v617
  %v719 = vpack.c.bf16 %v620, %v620
  %v720 = vpack.c.bf16 %v622, %v622
  %v721 = vpack.c.bf16 %v625, %v625
  %v722 = vpack.c.bf16 %v627, %v627
  %v723 = vpack.c.bf16 %v630, %v630
  %v724 = vpack.c.bf16 %v632, %v632
  %v725 = vpack.c.bf16 %v635, %v635
  %v726 = vpack.c.bf16 %v637, %v637
  %v727 = vpack.c.bf16 %v640, %v640
  %v728 = vpack.c.bf16 %v642, %v642
  %v729 = vpack.c.bf16 %v645, %v645
  %v730 = vpack.c.bf16 %v647, %v647
  %v731 = vpack.c.bf16 %v650, %v650
  %v732 = vpack.c.bf16 %v652, %v652
  %v733 = vpack.c.bf16 %v655, %v655
  %v734 = vpack.c.bf16 %v657, %v657
  %v735 = vpack.c.bf16 %v660, %v660
  %v736 = vpack.c.bf16 %v662, %v662
  %v737 = vpack.c.bf16 %v665, %v665
  %v738 = vpack.c.bf16 %v667, %v667
  %v739 = vpack.c.bf16 %v670, %v670
  %v740 = vpack.c.bf16 %v672, %v672
  %v741 = vpack.c.bf16 %v675, %v675
  %v742 = vpack.c.bf16 %v677, %v677
  %vm743 = vcmask 519168
  %744 = vst.msk [vmem:[%s4] sm:$0xf] %vm743, %v679
  %745 = vst.msk [vmem:[%s4 + $0x4] sm:$0xf] %vm743, %v680
  %746 = vst.msk [vmem:[%s4 + $0x8] sm:$0xf] %vm743, %v681
  %747 = vst.msk [vmem:[%s4 + $0xc] sm:$0xf] %vm743, %v682
  %748 = vst.msk [vmem:[%s4 + $0x10] sm:$0xf] %vm743, %v683
  %749 = vst.msk [vmem:[%s4 + $0x14] sm:$0xf] %vm743, %v684
  %750 = vst.msk [vmem:[%s4 + $0x18] sm:$0xf] %vm743, %v685
  %751 = vst.msk [vmem:[%s4 + $0x1c] sm:$0xf] %vm743, %v686
  %752 = vst.msk [vmem:[%s4 + $0x20] sm:$0xf] %vm743, %v687
  %753 = vst.msk [vmem:[%s4 + $0x24] sm:$0xf] %vm743, %v688
  %754 = vst.msk [vmem:[%s4 + $0x28] sm:$0xf] %vm743, %v689
  %755 = vst.msk [vmem:[%s4 + $0x2c] sm:$0xf] %vm743, %v690
  %756 = vst.msk [vmem:[%s4 + $0x30] sm:$0xf] %vm743, %v691
  %757 = vst.msk [vmem:[%s4 + $0x34] sm:$0xf] %vm743, %v692
  %758 = vst.msk [vmem:[%s4 + $0x38] sm:$0xf] %vm743, %v693
  %759 = vst.msk [vmem:[%s4 + $0x3c] sm:$0xf] %vm743, %v694
  %760 = vst.msk [vmem:[%s4 + $0x40] sm:$0xf] %vm743, %v695
  %761 = vst.msk [vmem:[%s4 + $0x44] sm:$0xf] %vm743, %v696
  %762 = vst.msk [vmem:[%s4 + $0x48] sm:$0xf] %vm743, %v697
  %763 = vst.msk [vmem:[%s4 + $0x4c] sm:$0xf] %vm743, %v698
  %764 = vst.msk [vmem:[%s4 + $0x50] sm:$0xf] %vm743, %v699
  %765 = vst.msk [vmem:[%s4 + $0x54] sm:$0xf] %vm743, %v700
  %766 = vst.msk [vmem:[%s4 + $0x58] sm:$0xf] %vm743, %v701
  %767 = vst.msk [vmem:[%s4 + $0x5c] sm:$0xf] %vm743, %v702
  %768 = vst.msk [vmem:[%s4 + $0x60] sm:$0xf] %vm743, %v703
  %769 = vst.msk [vmem:[%s4 + $0x64] sm:$0xf] %vm743, %v704
  %770 = vst.msk [vmem:[%s4 + $0x68] sm:$0xf] %vm743, %v705
  %771 = vst.msk [vmem:[%s4 + $0x6c] sm:$0xf] %vm743, %v706
  %772 = vst.msk [vmem:[%s4 + $0x70] sm:$0xf] %vm743, %v707
  %773 = vst.msk [vmem:[%s4 + $0x74] sm:$0xf] %vm743, %v708
  %774 = vst.msk [vmem:[%s4 + $0x78] sm:$0xf] %vm743, %v709
  %775 = vst.msk [vmem:[%s4 + $0x7c] sm:$0xf] %vm743, %v710
  %776 = vst.msk [vmem:[%s4 + $0x80] sm:$0xf] %vm743, %v711
  %777 = vst.msk [vmem:[%s4 + $0x84] sm:$0xf] %vm743, %v712
  %778 = vst.msk [vmem:[%s4 + $0x88] sm:$0xf] %vm743, %v713
  %779 = vst.msk [vmem:[%s4 + $0x8c] sm:$0xf] %vm743, %v714
  %780 = vst.msk [vmem:[%s4 + $0x90] sm:$0xf] %vm743, %v715
  %781 = vst.msk [vmem:[%s4 + $0x94] sm:$0xf] %vm743, %v716
  %782 = vst.msk [vmem:[%s4 + $0x98] sm:$0xf] %vm743, %v717
  %783 = vst.msk [vmem:[%s4 + $0x9c] sm:$0xf] %vm743, %v718
  %784 = vst.msk [vmem:[%s4 + $0xa0] sm:$0xf] %vm743, %v719
  %785 = vst.msk [vmem:[%s4 + $0xa4] sm:$0xf] %vm743, %v720
  %786 = vst.msk [vmem:[%s4 + $0xa8] sm:$0xf] %vm743, %v721
  %787 = vst.msk [vmem:[%s4 + $0xac] sm:$0xf] %vm743, %v722
  %788 = vst.msk [vmem:[%s4 + $0xb0] sm:$0xf] %vm743, %v723
  %789 = vst.msk [vmem:[%s4 + $0xb4] sm:$0xf] %vm743, %v724
  %790 = vst.msk [vmem:[%s4 + $0xb8] sm:$0xf] %vm743, %v725
  %791 = vst.msk [vmem:[%s4 + $0xbc] sm:$0xf] %vm743, %v726
  %792 = vst.msk [vmem:[%s4 + $0xc0] sm:$0xf] %vm743, %v727
  %793 = vst.msk [vmem:[%s4 + $0xc4] sm:$0xf] %vm743, %v728
  %794 = vst.msk [vmem:[%s4 + $0xc8] sm:$0xf] %vm743, %v729
  %795 = vst.msk [vmem:[%s4 + $0xcc] sm:$0xf] %vm743, %v730
  %796 = vst.msk [vmem:[%s4 + $0xd0] sm:$0xf] %vm743, %v731
  %797 = vst.msk [vmem:[%s4 + $0xd4] sm:$0xf] %vm743, %v732
  %798 = vst.msk [vmem:[%s4 + $0xd8] sm:$0xf] %vm743, %v733
  %799 = vst.msk [vmem:[%s4 + $0xdc] sm:$0xf] %vm743, %v734
  %800 = vst.msk [vmem:[%s4 + $0xe0] sm:$0xf] %vm743, %v735
  %801 = vst.msk [vmem:[%s4 + $0xe4] sm:$0xf] %vm743, %v736
  %802 = vst.msk [vmem:[%s4 + $0xe8] sm:$0xf] %vm743, %v737
  %803 = vst.msk [vmem:[%s4 + $0xec] sm:$0xf] %vm743, %v738
  %804 = vst.msk [vmem:[%s4 + $0xf0] sm:$0xf] %vm743, %v739
  %805 = vst.msk [vmem:[%s4 + $0xf4] sm:$0xf] %vm743, %v740
  %806 = vst.msk [vmem:[%s4 + $0xf8] sm:$0xf] %vm743, %v741
  %807 = vst.msk [vmem:[%s4 + $0xfc] sm:$0xf] %vm743, %v742
  %v808 = vsel %vm413, %v520, 0.0
  %v809 = vsel %vm413, %v522, 0.0
  %v810 = vadd.f32 %v808, %v809
  %v811 = vsel %vm413, %v525, 0.0
  %v812 = vadd.f32 %v810, %v811
  %v813 = vsel %vm413, %v527, 0.0
  %v814 = vadd.f32 %v812, %v813
  %v815 = vsel %vm413, %v530, 0.0
  %v816 = vadd.f32 %v814, %v815
  %v817 = vsel %vm413, %v532, 0.0
  %v818 = vadd.f32 %v816, %v817
  %v819 = vsel %vm413, %v535, 0.0
  %v820 = vadd.f32 %v818, %v819
  %v821 = vsel %vm413, %v537, 0.0
  %v822 = vadd.f32 %v820, %v821
  %v823 = vsel %vm413, %v540, 0.0
  %v824 = vadd.f32 %v822, %v823
  %v825 = vsel %vm413, %v542, 0.0
  %v826 = vadd.f32 %v824, %v825
  %v827 = vsel %vm413, %v545, 0.0
  %v828 = vadd.f32 %v826, %v827
  %v829 = vsel %vm413, %v547, 0.0
  %v830 = vadd.f32 %v828, %v829
  %v831 = vsel %vm413, %v550, 0.0
  %v832 = vadd.f32 %v830, %v831
  %v833 = vsel %vm413, %v552, 0.0
  %v834 = vadd.f32 %v832, %v833
  %v835 = vsel %vm413, %v555, 0.0
  %v836 = vadd.f32 %v834, %v835
  %v837 = vsel %vm413, %v557, 0.0
  %v838 = vadd.f32 %v836, %v837
  %v839 = vsel %vm413, %v560, 0.0
  %v840 = vadd.f32 %v838, %v839
  %v841 = vsel %vm413, %v562, 0.0
  %v842 = vadd.f32 %v840, %v841
  %v843 = vsel %vm413, %v565, 0.0
  %v844 = vadd.f32 %v842, %v843
  %v845 = vsel %vm413, %v567, 0.0
  %v846 = vadd.f32 %v844, %v845
  %v847 = vsel %vm413, %v570, 0.0
  %v848 = vadd.f32 %v846, %v847
  %v849 = vsel %vm413, %v572, 0.0
  %v850 = vadd.f32 %v848, %v849
  %v851 = vsel %vm413, %v575, 0.0
  %v852 = vadd.f32 %v850, %v851
  %v853 = vsel %vm413, %v577, 0.0
  %v854 = vadd.f32 %v852, %v853
  %v855 = vsel %vm413, %v580, 0.0
  %v856 = vadd.f32 %v854, %v855
  %v857 = vsel %vm413, %v582, 0.0
  %v858 = vadd.f32 %v856, %v857
  %v859 = vsel %vm413, %v585, 0.0
  %v860 = vadd.f32 %v858, %v859
  %v861 = vsel %vm413, %v587, 0.0
  %v862 = vadd.f32 %v860, %v861
  %v863 = vsel %vm413, %v590, 0.0
  %v864 = vadd.f32 %v862, %v863
  %v865 = vsel %vm413, %v592, 0.0
  %v866 = vadd.f32 %v864, %v865
  %v867 = vsel %vm413, %v595, 0.0
  %v868 = vadd.f32 %v866, %v867
  %v869 = vsel %vm413, %v597, 0.0
  %v870 = vadd.f32 %v868, %v869
  %v871 = vsel %vm413, %v600, 0.0
  %v872 = vadd.f32 %v870, %v871
  %v873 = vsel %vm413, %v602, 0.0
  %v874 = vadd.f32 %v872, %v873
  %v875 = vsel %vm413, %v605, 0.0
  %v876 = vadd.f32 %v874, %v875
  %v877 = vsel %vm413, %v607, 0.0
  %v878 = vadd.f32 %v876, %v877
  %v879 = vsel %vm413, %v610, 0.0
  %v880 = vadd.f32 %v878, %v879
  %v881 = vsel %vm413, %v612, 0.0
  %v882 = vadd.f32 %v880, %v881
  %v883 = vsel %vm413, %v615, 0.0
  %v884 = vadd.f32 %v882, %v883
  %v885 = vsel %vm413, %v617, 0.0
  %v886 = vadd.f32 %v884, %v885
  %v887 = vsel %vm413, %v620, 0.0
  %v888 = vadd.f32 %v886, %v887
  %v889 = vsel %vm413, %v622, 0.0
  %v890 = vadd.f32 %v888, %v889
  %v891 = vsel %vm413, %v625, 0.0
  %v892 = vadd.f32 %v890, %v891
  %v893 = vsel %vm413, %v627, 0.0
  %v894 = vadd.f32 %v892, %v893
  %v895 = vsel %vm413, %v630, 0.0
  %v896 = vadd.f32 %v894, %v895
  %v897 = vsel %vm413, %v632, 0.0
  %v898 = vadd.f32 %v896, %v897
  %v899 = vsel %vm413, %v635, 0.0
  %v900 = vadd.f32 %v898, %v899
  %v901 = vsel %vm413, %v637, 0.0
  %v902 = vadd.f32 %v900, %v901
  %v903 = vsel %vm413, %v640, 0.0
  %v904 = vadd.f32 %v902, %v903
  %v905 = vsel %vm413, %v642, 0.0
  %v906 = vadd.f32 %v904, %v905
  %v907 = vsel %vm413, %v645, 0.0
  %v908 = vadd.f32 %v906, %v907
  %v909 = vsel %vm413, %v647, 0.0
  %v910 = vadd.f32 %v908, %v909
  %v911 = vsel %vm413, %v650, 0.0
  %v912 = vadd.f32 %v910, %v911
  %v913 = vsel %vm413, %v652, 0.0
  %v914 = vadd.f32 %v912, %v913
  %v915 = vsel %vm413, %v655, 0.0
  %v916 = vadd.f32 %v914, %v915
  %v917 = vsel %vm413, %v657, 0.0
  %v918 = vadd.f32 %v916, %v917
  %v919 = vsel %vm413, %v660, 0.0
  %v920 = vadd.f32 %v918, %v919
  %v921 = vsel %vm413, %v662, 0.0
  %v922 = vadd.f32 %v920, %v921
  %v923 = vsel %vm413, %v665, 0.0
  %v924 = vadd.f32 %v922, %v923
  %v925 = vsel %vm413, %v667, 0.0
  %v926 = vadd.f32 %v924, %v925
  %v927 = vsel %vm413, %v670, 0.0
  %v928 = vadd.f32 %v926, %v927
  %v929 = vsel %vm413, %v672, 0.0
  %v930 = vadd.f32 %v928, %v929
  %v931 = vsel %vm413, %v675, 0.0
  %v932 = vadd.f32 %v930, %v931
  %v933 = vsel %vm413, %v677, 0.0
  %v934 = vadd.f32 %v932, %v933
  %v935 = vrot.slane %v934, 4
  %v936 = vadd.f32 %v934, %v935
  %v937 = vrot.slane %v936, 2
  %v938 = vadd.f32 %v936, %v937
  %v939 = vrot.slane %v938, 1
  %v940 = vadd.f32 %v938, %v939
  %vm941 = vcmask 516096
  %942 = vst.msk [vmem:[%s5] sm:$0x1] %vm941, %v940
  %v943 = vmul.f32 %v520, %v520
  %v944 = vmul.f32 %v522, %v522
  %v945 = vmul.f32 %v525, %v525
  %v946 = vmul.f32 %v527, %v527
  %v947 = vmul.f32 %v530, %v530
  %v948 = vmul.f32 %v532, %v532
  %v949 = vmul.f32 %v535, %v535
  %v950 = vmul.f32 %v537, %v537
  %v951 = vmul.f32 %v540, %v540
  %v952 = vmul.f32 %v542, %v542
  %v953 = vmul.f32 %v545, %v545
  %v954 = vmul.f32 %v547, %v547
  %v955 = vmul.f32 %v550, %v550
  %v956 = vmul.f32 %v552, %v552
  %v957 = vmul.f32 %v555, %v555
  %v958 = vmul.f32 %v557, %v557
  %v959 = vmul.f32 %v560, %v560
  %v960 = vmul.f32 %v562, %v562
  %v961 = vmul.f32 %v565, %v565
  %v962 = vmul.f32 %v567, %v567
  %v963 = vmul.f32 %v570, %v570
  %v964 = vmul.f32 %v572, %v572
  %v965 = vmul.f32 %v575, %v575
  %v966 = vmul.f32 %v577, %v577
  %v967 = vmul.f32 %v580, %v580
  %v968 = vmul.f32 %v582, %v582
  %v969 = vmul.f32 %v585, %v585
  %v970 = vmul.f32 %v587, %v587
  %v971 = vmul.f32 %v590, %v590
  %v972 = vmul.f32 %v592, %v592
  %v973 = vmul.f32 %v595, %v595
  %v974 = vmul.f32 %v597, %v597
  %v975 = vmul.f32 %v600, %v600
  %v976 = vmul.f32 %v602, %v602
  %v977 = vmul.f32 %v605, %v605
  %v978 = vmul.f32 %v607, %v607
  %v979 = vmul.f32 %v610, %v610
  %v980 = vmul.f32 %v612, %v612
  %v981 = vmul.f32 %v615, %v615
  %v982 = vmul.f32 %v617, %v617
  %v983 = vmul.f32 %v620, %v620
  %v984 = vmul.f32 %v622, %v622
  %v985 = vmul.f32 %v625, %v625
  %v986 = vmul.f32 %v627, %v627
  %v987 = vmul.f32 %v630, %v630
  %v988 = vmul.f32 %v632, %v632
  %v989 = vmul.f32 %v635, %v635
  %v990 = vmul.f32 %v637, %v637
  %v991 = vmul.f32 %v640, %v640
  %v992 = vmul.f32 %v642, %v642
  %v993 = vmul.f32 %v645, %v645
  %v994 = vmul.f32 %v647, %v647
  %v995 = vmul.f32 %v650, %v650
  %v996 = vmul.f32 %v652, %v652
  %v997 = vmul.f32 %v655, %v655
  %v998 = vmul.f32 %v657, %v657
  %v999 = vmul.f32 %v660, %v660
  %v1000 = vmul.f32 %v662, %v662
  %v1001 = vmul.f32 %v665, %v665
  %v1002 = vmul.f32 %v667, %v667
  %v1003 = vmul.f32 %v670, %v670
  %v1004 = vmul.f32 %v672, %v672
  %v1005 = vmul.f32 %v675, %v675
  %v1006 = vmul.f32 %v677, %v677
  %v1007 = vsel %vm413, %v943, 0.0
  %v1008 = vsel %vm413, %v944, 0.0
  %v1009 = vadd.f32 %v1007, %v1008
  %v1010 = vsel %vm413, %v945, 0.0
  %v1011 = vadd.f32 %v1009, %v1010
  %v1012 = vsel %vm413, %v946, 0.0
  %v1013 = vadd.f32 %v1011, %v1012
  %v1014 = vsel %vm413, %v947, 0.0
  %v1015 = vadd.f32 %v1013, %v1014
  %v1016 = vsel %vm413, %v948, 0.0
  %v1017 = vadd.f32 %v1015, %v1016
  %v1018 = vsel %vm413, %v949, 0.0
  %v1019 = vadd.f32 %v1017, %v1018
  %v1020 = vsel %vm413, %v950, 0.0
  %v1021 = vadd.f32 %v1019, %v1020
  %v1022 = vsel %vm413, %v951, 0.0
  %v1023 = vadd.f32 %v1021, %v1022
  %v1024 = vsel %vm413, %v952, 0.0
  %v1025 = vadd.f32 %v1023, %v1024
  %v1026 = vsel %vm413, %v953, 0.0
  %v1027 = vadd.f32 %v1025, %v1026
  %v1028 = vsel %vm413, %v954, 0.0
  %v1029 = vadd.f32 %v1027, %v1028
  %v1030 = vsel %vm413, %v955, 0.0
  %v1031 = vadd.f32 %v1029, %v1030
  %v1032 = vsel %vm413, %v956, 0.0
  %v1033 = vadd.f32 %v1031, %v1032
  %v1034 = vsel %vm413, %v957, 0.0
  %v1035 = vadd.f32 %v1033, %v1034
  %v1036 = vsel %vm413, %v958, 0.0
  %v1037 = vadd.f32 %v1035, %v1036
  %v1038 = vsel %vm413, %v959, 0.0
  %v1039 = vadd.f32 %v1037, %v1038
  %v1040 = vsel %vm413, %v960, 0.0
  %v1041 = vadd.f32 %v1039, %v1040
  %v1042 = vsel %vm413, %v961, 0.0
  %v1043 = vadd.f32 %v1041, %v1042
  %v1044 = vsel %vm413, %v962, 0.0
  %v1045 = vadd.f32 %v1043, %v1044
  %v1046 = vsel %vm413, %v963, 0.0
  %v1047 = vadd.f32 %v1045, %v1046
  %v1048 = vsel %vm413, %v964, 0.0
  %v1049 = vadd.f32 %v1047, %v1048
  %v1050 = vsel %vm413, %v965, 0.0
  %v1051 = vadd.f32 %v1049, %v1050
  %v1052 = vsel %vm413, %v966, 0.0
  %v1053 = vadd.f32 %v1051, %v1052
  %v1054 = vsel %vm413, %v967, 0.0
  %v1055 = vadd.f32 %v1053, %v1054
  %v1056 = vsel %vm413, %v968, 0.0
  %v1057 = vadd.f32 %v1055, %v1056
  %v1058 = vsel %vm413, %v969, 0.0
  %v1059 = vadd.f32 %v1057, %v1058
  %v1060 = vsel %vm413, %v970, 0.0
  %v1061 = vadd.f32 %v1059, %v1060
  %v1062 = vsel %vm413, %v971, 0.0
  %v1063 = vadd.f32 %v1061, %v1062
  %v1064 = vsel %vm413, %v972, 0.0
  %v1065 = vadd.f32 %v1063, %v1064
  %v1066 = vsel %vm413, %v973, 0.0
  %v1067 = vadd.f32 %v1065, %v1066
  %v1068 = vsel %vm413, %v974, 0.0
  %v1069 = vadd.f32 %v1067, %v1068
  %v1070 = vsel %vm413, %v975, 0.0
  %v1071 = vadd.f32 %v1069, %v1070
  %v1072 = vsel %vm413, %v976, 0.0
  %v1073 = vadd.f32 %v1071, %v1072
  %v1074 = vsel %vm413, %v977, 0.0
  %v1075 = vadd.f32 %v1073, %v1074
  %v1076 = vsel %vm413, %v978, 0.0
  %v1077 = vadd.f32 %v1075, %v1076
  %v1078 = vsel %vm413, %v979, 0.0
  %v1079 = vadd.f32 %v1077, %v1078
  %v1080 = vsel %vm413, %v980, 0.0
  %v1081 = vadd.f32 %v1079, %v1080
  %v1082 = vsel %vm413, %v981, 0.0
  %v1083 = vadd.f32 %v1081, %v1082
  %v1084 = vsel %vm413, %v982, 0.0
  %v1085 = vadd.f32 %v1083, %v1084
  %v1086 = vsel %vm413, %v983, 0.0
  %v1087 = vadd.f32 %v1085, %v1086
  %v1088 = vsel %vm413, %v984, 0.0
  %v1089 = vadd.f32 %v1087, %v1088
  %v1090 = vsel %vm413, %v985, 0.0
  %v1091 = vadd.f32 %v1089, %v1090
  %v1092 = vsel %vm413, %v986, 0.0
  %v1093 = vadd.f32 %v1091, %v1092
  %v1094 = vsel %vm413, %v987, 0.0
  %v1095 = vadd.f32 %v1093, %v1094
  %v1096 = vsel %vm413, %v988, 0.0
  %v1097 = vadd.f32 %v1095, %v1096
  %v1098 = vsel %vm413, %v989, 0.0
  %v1099 = vadd.f32 %v1097, %v1098
  %v1100 = vsel %vm413, %v990, 0.0
  %v1101 = vadd.f32 %v1099, %v1100
  %v1102 = vsel %vm413, %v991, 0.0
  %v1103 = vadd.f32 %v1101, %v1102
  %v1104 = vsel %vm413, %v992, 0.0
  %v1105 = vadd.f32 %v1103, %v1104
  %v1106 = vsel %vm413, %v993, 0.0
  %v1107 = vadd.f32 %v1105, %v1106
  %v1108 = vsel %vm413, %v994, 0.0
  %v1109 = vadd.f32 %v1107, %v1108
  %v1110 = vsel %vm413, %v995, 0.0
  %v1111 = vadd.f32 %v1109, %v1110
  %v1112 = vsel %vm413, %v996, 0.0
  %v1113 = vadd.f32 %v1111, %v1112
  %v1114 = vsel %vm413, %v997, 0.0
  %v1115 = vadd.f32 %v1113, %v1114
  %v1116 = vsel %vm413, %v998, 0.0
  %v1117 = vadd.f32 %v1115, %v1116
  %v1118 = vsel %vm413, %v999, 0.0
  %v1119 = vadd.f32 %v1117, %v1118
  %v1120 = vsel %vm413, %v1000, 0.0
  %v1121 = vadd.f32 %v1119, %v1120
  %v1122 = vsel %vm413, %v1001, 0.0
  %v1123 = vadd.f32 %v1121, %v1122
  %v1124 = vsel %vm413, %v1002, 0.0
  %v1125 = vadd.f32 %v1123, %v1124
  %v1126 = vsel %vm413, %v1003, 0.0
  %v1127 = vadd.f32 %v1125, %v1126
  %v1128 = vsel %vm413, %v1004, 0.0
  %v1129 = vadd.f32 %v1127, %v1128
  %v1130 = vsel %vm413, %v1005, 0.0
  %v1131 = vadd.f32 %v1129, %v1130
  %v1132 = vsel %vm413, %v1006, 0.0
  %v1133 = vadd.f32 %v1131, %v1132
  %v1134 = vrot.slane %v1133, 4
  %v1135 = vadd.f32 %v1133, %v1134
  %v1136 = vrot.slane %v1135, 2
  %v1137 = vadd.f32 %v1135, %v1136
  %v1138 = vrot.slane %v1137, 1
  %v1139 = vadd.f32 %v1137, %v1138
  %1140 = vst.msk [vmem:[%s6] sm:$0x1] %vm941, %v1139
  // Predicated region
  $region18: #{discriminator_forward.7} parent=0 // pred_check
    _
  $region19: #{discriminator_forward.7} parent=0 // pred_check_branch
    %1142 = sbr.rel (0) target = $region21
  $region20: #{discriminator_forward.7} parent=0 // pred_region
    _
  $region21: #{discriminator_forward.7} parent=0 // pred_fallthru
    _
  // Predicated region
  $region22: #{discriminator_forward.7} parent=0 // pred_check
    _
  $region23: #{discriminator_forward.7} parent=0 // pred_check_branch
    %1144 = sbr.rel (0) target = $region25
  $region24: #{discriminator_forward.7} parent=0 // pred_region
    _
  $region25: #{discriminator_forward.7} parent=0 // pred_fallthru
    _
  // Predicated region
  $region26: #{discriminator_forward.7} parent=0 // pred_check
    _
  $region27: #{discriminator_forward.7} parent=0 // pred_check_branch
    %1146 = sbr.rel (0) target = $region29
  $region28: #{discriminator_forward.7} parent=0 // pred_region
    _
  $region29: #{discriminator_forward.7} parent=0 // pred_fallthru
    _
  // Predicated region
  $region30: #{discriminator_forward.7} parent=0 // pred_check
    _
  $region31: #{discriminator_forward.7} parent=0 // pred_check_branch
    %1148 = sbr.rel (0) target = $region33
  $region32: #{discriminator_forward.7} parent=0 // pred_region
    _
  $region33: #{discriminator_forward.7} parent=0 // pred_fallthru
    _
  // Predicated region
  $region34: #{discriminator_forward.7} parent=0 // pred_check
    _
  $region35: #{discriminator_forward.7} parent=0 // pred_check_branch
    %1150 = sbr.rel (0) target = $region37
  $region36: #{discriminator_forward.7} parent=0 // pred_region
    _
  $region37: #{discriminator_forward.7} parent=0 // pred_fallthru
    _
  // Predicated region
  $region38: #{discriminator_forward.7} parent=0 // pred_check
    _
  $region39: #{discriminator_forward.7} parent=0 // pred_check_branch
    %1152 = sbr.rel (0) target = $region41
  $region40: #{discriminator_forward.7} parent=0 // pred_region
    _
  $region41: #{discriminator_forward.7} parent=0 // pred_fallthru
    _

// kernel: discriminator_forward.6
$region0: #{discriminator_forward.6}
  #allocation0 [shape = 'u32[]', space=smem, size = 0x4, offset = 0x4, fixed_abs, tag = 'smem constant byte address 0x4 - core index']
  #allocation1 [shape = 'u32[72,128]{1,0:T(1,128)}', space=vmem, size = 0x9000, scoped, tag = 'internal scratch']
  %s0 = inlined_call_operand.vmem [shape: bf16[512,256], index: 0, kind: input, shape index: {}]
  %s1 = inlined_call_operand.vmem [shape: bf16[256,64], index: 1, kind: input, shape index: {}]
  %s2 = inlined_call_operand.vmem [shape: bf16[512,64], index: 2, kind: output, shape index: {0}]
  %s3 = inlined_call_operand.vmem [shape: f32[1,1,64], index: 3, kind: output, shape index: {1}]
  %s4 = inlined_call_operand.vmem [shape: f32[1,1,64], index: 4, kind: output, shape index: {2}]
  %5 = xla_tuple %s2, %s3, %s4
  %s6 = sld [smem:[#allocation0]]
  $region34: #{discriminator_forward.6} parent=0
    _
  %s8 = ssub.s32 1, %s6
  %s9 = scalar_select 0, %s8, %s6
  // Predicated region
  $region2: #{discriminator_forward.6} parent=0 // pred_check
    _
  $region3: #{discriminator_forward.6} parent=0 // pred_check_branch
    %11 = sbr.rel (0) target = $region5
  $region4: #{discriminator_forward.6} parent=0 // pred_region
    _
  $region5: #{discriminator_forward.6} parent=0 // pred_fallthru
    _
  // Predicated region
  $region6: #{discriminator_forward.6} parent=0 // pred_check
    _
  $region7: #{discriminator_forward.6} parent=0 // pred_check_branch
    %13 = sbr.rel (0) target = $region9
  $region8: #{discriminator_forward.6} parent=0 // pred_region
    _
  $region9: #{discriminator_forward.6} parent=0 // pred_fallthru
    _
  %v14 = vld [vmem:[%s0] sm:$0xff]
  %v15 = vld [vmem:[%s0 + $0x8] sm:$0xff]
  %v16 = vld [vmem:[%s0 + $0x10] sm:$0xff]
  %v17 = vld [vmem:[%s0 + $0x18] sm:$0xff]
  %v18 = vld [vmem:[%s0 + $0x20] sm:$0xff]
  %v19 = vld [vmem:[%s0 + $0x28] sm:$0xff]
  %v20 = vld [vmem:[%s0 + $0x30] sm:$0xff]
  %v21 = vld [vmem:[%s0 + $0x38] sm:$0xff]
  %v22 = vld [vmem:[%s0 + $0x40] sm:$0xff]
  %v23 = vld [vmem:[%s0 + $0x48] sm:$0xff]
  %v24 = vld [vmem:[%s0 + $0x50] sm:$0xff]
  %v25 = vld [vmem:[%s0 + $0x58] sm:$0xff]
  %v26 = vld [vmem:[%s0 + $0x60] sm:$0xff]
  %v27 = vld [vmem:[%s0 + $0x68] sm:$0xff]
  %v28 = vld [vmem:[%s0 + $0x70] sm:$0xff]
  %v29 = vld [vmem:[%s0 + $0x78] sm:$0xff]
  %v30 = vld [vmem:[%s0 + $0x80] sm:$0xff]
  %v31 = vld [vmem:[%s0 + $0x88] sm:$0xff]
  %v32 = vld [vmem:[%s0 + $0x90] sm:$0xff]
  %v33 = vld [vmem:[%s0 + $0x98] sm:$0xff]
  %v34 = vld [vmem:[%s0 + $0xa0] sm:$0xff]
  %v35 = vld [vmem:[%s0 + $0xa8] sm:$0xff]
  %v36 = vld [vmem:[%s0 + $0xb0] sm:$0xff]
  %v37 = vld [vmem:[%s0 + $0xb8] sm:$0xff]
  %v38 = vld [vmem:[%s0 + $0xc0] sm:$0xff]
  %v39 = vld [vmem:[%s0 + $0xc8] sm:$0xff]
  %v40 = vld [vmem:[%s0 + $0xd0] sm:$0xff]
  %v41 = vld [vmem:[%s0 + $0xd8] sm:$0xff]
  %v42 = vld [vmem:[%s0 + $0xe0] sm:$0xff]
  %v43 = vld [vmem:[%s0 + $0xe8] sm:$0xff]
  %v44 = vld [vmem:[%s0 + $0xf0] sm:$0xff]
  %v45 = vld [vmem:[%s0 + $0xf8] sm:$0xff]
  %v46 = vld [vmem:[%s0 + $0x100] sm:$0xff]
  %v47 = vld [vmem:[%s0 + $0x108] sm:$0xff]
  %v48 = vld [vmem:[%s0 + $0x110] sm:$0xff]
  %v49 = vld [vmem:[%s0 + $0x118] sm:$0xff]
  %v50 = vld [vmem:[%s0 + $0x120] sm:$0xff]
  %v51 = vld [vmem:[%s0 + $0x128] sm:$0xff]
  %v52 = vld [vmem:[%s0 + $0x130] sm:$0xff]
  %v53 = vld [vmem:[%s0 + $0x138] sm:$0xff]
  %v54 = vld [vmem:[%s0 + $0x140] sm:$0xff]
  %v55 = vld [vmem:[%s0 + $0x148] sm:$0xff]
  %v56 = vld [vmem:[%s0 + $0x150] sm:$0xff]
  %v57 = vld [vmem:[%s0 + $0x158] sm:$0xff]
  %v58 = vld [vmem:[%s0 + $0x160] sm:$0xff]
  %v59 = vld [vmem:[%s0 + $0x168] sm:$0xff]
  %v60 = vld [vmem:[%s0 + $0x170] sm:$0xff]
  %v61 = vld [vmem:[%s0 + $0x178] sm:$0xff]
  %v62 = vld [vmem:[%s0 + $0x180] sm:$0xff]
  %v63 = vld [vmem:[%s0 + $0x188] sm:$0xff]
  %v64 = vld [vmem:[%s0 + $0x190] sm:$0xff]
  %v65 = vld [vmem:[%s0 + $0x198] sm:$0xff]
  %v66 = vld [vmem:[%s0 + $0x1a0] sm:$0xff]
  %v67 = vld [vmem:[%s0 + $0x1a8] sm:$0xff]
  %v68 = vld [vmem:[%s0 + $0x1b0] sm:$0xff]
  %v69 = vld [vmem:[%s0 + $0x1b8] sm:$0xff]
  %v70 = vld [vmem:[%s0 + $0x1c0] sm:$0xff]
  %v71 = vld [vmem:[%s0 + $0x1c8] sm:$0xff]
  %v72 = vld [vmem:[%s0 + $0x1d0] sm:$0xff]
  %v73 = vld [vmem:[%s0 + $0x1d8] sm:$0xff]
  %v74 = vld [vmem:[%s0 + $0x1e0] sm:$0xff]
  %v75 = vld [vmem:[%s0 + $0x1e8] sm:$0xff]
  %v76 = vld [vmem:[%s0 + $0x1f0] sm:$0xff]
  %v77 = vld [vmem:[%s0 + $0x1f8] sm:$0xff]
  %v78 = vld [vmem:[%s1] sm:$0xf]
  %v79 = vld [vmem:[%s1 + $0x4] sm:$0xf]
  %v80 = vld [vmem:[%s1 + $0x8] sm:$0xf]
  %v81 = vld [vmem:[%s1 + $0xc] sm:$0xf]
  %v82 = vld [vmem:[%s1 + $0x10] sm:$0xf]
  %v83 = vld [vmem:[%s1 + $0x14] sm:$0xf]
  %v84 = vld [vmem:[%s1 + $0x18] sm:$0xf]
  %v85 = vld [vmem:[%s1 + $0x1c] sm:$0xf]
  %v86 = vld [vmem:[%s1 + $0x20] sm:$0xf]
  %v87 = vld [vmem:[%s1 + $0x24] sm:$0xf]
  %v88 = vld [vmem:[%s1 + $0x28] sm:$0xf]
  %v89 = vld [vmem:[%s1 + $0x2c] sm:$0xf]
  %v90 = vld [vmem:[%s1 + $0x30] sm:$0xf]
  %v91 = vld [vmem:[%s1 + $0x34] sm:$0xf]
  %v92 = vld [vmem:[%s1 + $0x38] sm:$0xf]
  %v93 = vld [vmem:[%s1 + $0x3c] sm:$0xf]
  %v94 = vld [vmem:[%s1 + $0x40] sm:$0xf]
  %v95 = vld [vmem:[%s1 + $0x44] sm:$0xf]
  %v96 = vld [vmem:[%s1 + $0x48] sm:$0xf]
  %v97 = vld [vmem:[%s1 + $0x4c] sm:$0xf]
  %v98 = vld [vmem:[%s1 + $0x50] sm:$0xf]
  %v99 = vld [vmem:[%s1 + $0x54] sm:$0xf]
  %v100 = vld [vmem:[%s1 + $0x58] sm:$0xf]
  %v101 = vld [vmem:[%s1 + $0x5c] sm:$0xf]
  %v102 = vld [vmem:[%s1 + $0x60] sm:$0xf]
  %v103 = vld [vmem:[%s1 + $0x64] sm:$0xf]
  %v104 = vld [vmem:[%s1 + $0x68] sm:$0xf]
  %v105 = vld [vmem:[%s1 + $0x6c] sm:$0xf]
  %v106 = vld [vmem:[%s1 + $0x70] sm:$0xf]
  %v107 = vld [vmem:[%s1 + $0x74] sm:$0xf]
  %v108 = vld [vmem:[%s1 + $0x78] sm:$0xf]
  %v109 = vld [vmem:[%s1 + $0x7c] sm:$0xf]
  %v174 = vunpack.c.l.b16 %v14
  %v175 = vunpack.c.h.b16 %v14
  %v176 = vunpack.c.l.b16 %v15
  %v177 = vunpack.c.h.b16 %v15
  %v178 = vunpack.c.l.b16 %v16
  %v179 = vunpack.c.h.b16 %v16
  %v180 = vunpack.c.l.b16 %v17
  %v181 = vunpack.c.h.b16 %v17
  %v182 = vunpack.c.l.b16 %v18
  %v183 = vunpack.c.h.b16 %v18
  %v184 = vunpack.c.l.b16 %v19
  %v185 = vunpack.c.h.b16 %v19
  %v186 = vunpack.c.l.b16 %v20
  %v187 = vunpack.c.h.b16 %v20
  %v188 = vunpack.c.l.b16 %v21
  %v189 = vunpack.c.h.b16 %v21
  %v190 = vunpack.c.l.b16 %v22
  %v191 = vunpack.c.h.b16 %v22
  %v192 = vunpack.c.l.b16 %v23
  %v193 = vunpack.c.h.b16 %v23
  %v194 = vunpack.c.l.b16 %v24
  %v195 = vunpack.c.h.b16 %v24
  %v196 = vunpack.c.l.b16 %v25
  %v197 = vunpack.c.h.b16 %v25
  %v198 = vunpack.c.l.b16 %v26
  %v199 = vunpack.c.h.b16 %v26
  %v200 = vunpack.c.l.b16 %v27
  %v201 = vunpack.c.h.b16 %v27
  %v202 = vunpack.c.l.b16 %v28
  %v203 = vunpack.c.h.b16 %v28
  %v204 = vunpack.c.l.b16 %v29
  %v205 = vunpack.c.h.b16 %v29
  %v206 = vunpack.c.l.b16 %v30
  %v207 = vunpack.c.h.b16 %v30
  %v208 = vunpack.c.l.b16 %v31
  %v209 = vunpack.c.h.b16 %v31
  %v210 = vunpack.c.l.b16 %v32
  %v211 = vunpack.c.h.b16 %v32
  %v212 = vunpack.c.l.b16 %v33
  %v213 = vunpack.c.h.b16 %v33
  %v214 = vunpack.c.l.b16 %v34
  %v215 = vunpack.c.h.b16 %v34
  %v216 = vunpack.c.l.b16 %v35
  %v217 = vunpack.c.h.b16 %v35
  %v218 = vunpack.c.l.b16 %v36
  %v219 = vunpack.c.h.b16 %v36
  %v220 = vunpack.c.l.b16 %v37
  %v221 = vunpack.c.h.b16 %v37
  %v222 = vunpack.c.l.b16 %v38
  %v223 = vunpack.c.h.b16 %v38
  %v224 = vunpack.c.l.b16 %v39
  %v225 = vunpack.c.h.b16 %v39
  %v226 = vunpack.c.l.b16 %v40
  %v227 = vunpack.c.h.b16 %v40
  %v228 = vunpack.c.l.b16 %v41
  %v229 = vunpack.c.h.b16 %v41
  %v230 = vunpack.c.l.b16 %v42
  %v231 = vunpack.c.h.b16 %v42
  %v232 = vunpack.c.l.b16 %v43
  %v233 = vunpack.c.h.b16 %v43
  %v234 = vunpack.c.l.b16 %v44
  %v235 = vunpack.c.h.b16 %v44
  %v236 = vunpack.c.l.b16 %v45
  %v237 = vunpack.c.h.b16 %v45
  %v238 = vunpack.c.l.b16 %v46
  %v239 = vunpack.c.h.b16 %v46
  %v240 = vunpack.c.l.b16 %v47
  %v241 = vunpack.c.h.b16 %v47
  %v242 = vunpack.c.l.b16 %v48
  %v243 = vunpack.c.h.b16 %v48
  %v244 = vunpack.c.l.b16 %v49
  %v245 = vunpack.c.h.b16 %v49
  %v246 = vunpack.c.l.b16 %v50
  %v247 = vunpack.c.h.b16 %v50
  %v248 = vunpack.c.l.b16 %v51
  %v249 = vunpack.c.h.b16 %v51
  %v250 = vunpack.c.l.b16 %v52
  %v251 = vunpack.c.h.b16 %v52
  %v252 = vunpack.c.l.b16 %v53
  %v253 = vunpack.c.h.b16 %v53
  %v254 = vunpack.c.l.b16 %v54
  %v255 = vunpack.c.h.b16 %v54
  %v256 = vunpack.c.l.b16 %v55
  %v257 = vunpack.c.h.b16 %v55
  %v258 = vunpack.c.l.b16 %v56
  %v259 = vunpack.c.h.b16 %v56
  %v260 = vunpack.c.l.b16 %v57
  %v261 = vunpack.c.h.b16 %v57
  %v262 = vunpack.c.l.b16 %v58
  %v263 = vunpack.c.h.b16 %v58
  %v264 = vunpack.c.l.b16 %v59
  %v265 = vunpack.c.h.b16 %v59
  %v266 = vunpack.c.l.b16 %v60
  %v267 = vunpack.c.h.b16 %v60
  %v268 = vunpack.c.l.b16 %v61
  %v269 = vunpack.c.h.b16 %v61
  %v270 = vunpack.c.l.b16 %v62
  %v271 = vunpack.c.h.b16 %v62
  %v272 = vunpack.c.l.b16 %v63
  %v273 = vunpack.c.h.b16 %v63
  %v274 = vunpack.c.l.b16 %v64
  %v275 = vunpack.c.h.b16 %v64
  %v276 = vunpack.c.l.b16 %v65
  %v277 = vunpack.c.h.b16 %v65
  %v278 = vunpack.c.l.b16 %v66
  %v279 = vunpack.c.h.b16 %v66
  %v280 = vunpack.c.l.b16 %v67
  %v281 = vunpack.c.h.b16 %v67
  %v282 = vunpack.c.l.b16 %v68
  %v283 = vunpack.c.h.b16 %v68
  %v284 = vunpack.c.l.b16 %v69
  %v285 = vunpack.c.h.b16 %v69
  %v286 = vunpack.c.l.b16 %v70
  %v287 = vunpack.c.h.b16 %v70
  %v288 = vunpack.c.l.b16 %v71
  %v289 = vunpack.c.h.b16 %v71
  %v290 = vunpack.c.l.b16 %v72
  %v291 = vunpack.c.h.b16 %v72
  %v292 = vunpack.c.l.b16 %v73
  %v293 = vunpack.c.h.b16 %v73
  %v294 = vunpack.c.l.b16 %v74
  %v295 = vunpack.c.h.b16 %v74
  %v296 = vunpack.c.l.b16 %v75
  %v297 = vunpack.c.h.b16 %v75
  %v298 = vunpack.c.l.b16 %v76
  %v299 = vunpack.c.h.b16 %v76
  %v300 = vunpack.c.l.b16 %v77
  %v301 = vunpack.c.h.b16 %v77
  %v302 = vpack.c.b16 %v176, %v174
  %v303 = vpack.c.b16 %v177, %v175
  %v304 = vpack.c.b16 %v180, %v178
  %v305 = vpack.c.b16 %v181, %v179
  %v306 = vpack.c.b16 %v184, %v182
  %v307 = vpack.c.b16 %v185, %v183
  %v308 = vpack.c.b16 %v188, %v186
  %v309 = vpack.c.b16 %v189, %v187
  %v310 = vpack.c.b16 %v192, %v190
  %v311 = vpack.c.b16 %v193, %v191
  %v312 = vpack.c.b16 %v196, %v194
  %v313 = vpack.c.b16 %v197, %v195
  %v314 = vpack.c.b16 %v200, %v198
  %v315 = vpack.c.b16 %v201, %v199
  %v316 = vpack.c.b16 %v204, %v202
  %v317 = vpack.c.b16 %v205, %v203
  %v318 = vpack.c.b16 %v208, %v206
  %v319 = vpack.c.b16 %v209, %v207
  %v320 = vpack.c.b16 %v212, %v210
  %v321 = vpack.c.b16 %v213, %v211
  %v322 = vpack.c.b16 %v216, %v214
  %v323 = vpack.c.b16 %v217, %v215
  %v324 = vpack.c.b16 %v220, %v218
  %v325 = vpack.c.b16 %v221, %v219
  %v326 = vpack.c.b16 %v224, %v222
  %v327 = vpack.c.b16 %v225, %v223
  %v328 = vpack.c.b16 %v228, %v226
  %v329 = vpack.c.b16 %v229, %v227
  %v330 = vpack.c.b16 %v232, %v230
  %v331 = vpack.c.b16 %v233, %v231
  %v332 = vpack.c.b16 %v236, %v234
  %v333 = vpack.c.b16 %v237, %v235
  %v334 = vpack.c.b16 %v240, %v238
  %v335 = vpack.c.b16 %v241, %v239
  %v336 = vpack.c.b16 %v244, %v242
  %v337 = vpack.c.b16 %v245, %v243
  %v338 = vpack.c.b16 %v248, %v246
  %v339 = vpack.c.b16 %v249, %v247
  %v340 = vpack.c.b16 %v252, %v250
  %v341 = vpack.c.b16 %v253, %v251
  %v342 = vpack.c.b16 %v256, %v254
  %v343 = vpack.c.b16 %v257, %v255
  %v344 = vpack.c.b16 %v260, %v258
  %v345 = vpack.c.b16 %v261, %v259
  %v346 = vpack.c.b16 %v264, %v262
  %v347 = vpack.c.b16 %v265, %v263
  %v348 = vpack.c.b16 %v268, %v266
  %v349 = vpack.c.b16 %v269, %v267
  %v350 = vpack.c.b16 %v272, %v270
  %v351 = vpack.c.b16 %v273, %v271
  %v352 = vpack.c.b16 %v276, %v274
  %v353 = vpack.c.b16 %v277, %v275
  %v354 = vpack.c.b16 %v280, %v278
  %v355 = vpack.c.b16 %v281, %v279
  %v356 = vpack.c.b16 %v284, %v282
  %v357 = vpack.c.b16 %v285, %v283
  %v358 = vpack.c.b16 %v288, %v286
  %v359 = vpack.c.b16 %v289, %v287
  %v360 = vpack.c.b16 %v292, %v290
  %v361 = vpack.c.b16 %v293, %v291
  %v362 = vpack.c.b16 %v296, %v294
  %v363 = vpack.c.b16 %v297, %v295
  %v364 = vpack.c.b16 %v300, %v298
  %v365 = vpack.c.b16 %v301, %v299
  %v462 = vunpack.c.l.b16 %v78
  %v463 = vunpack.c.l.b16 %v79
  %v464 = vunpack.c.l.b16 %v80
  %v465 = vunpack.c.l.b16 %v81
  %v466 = vunpack.c.l.b16 %v82
  %v467 = vunpack.c.l.b16 %v83
  %v468 = vunpack.c.l.b16 %v84
  %v469 = vunpack.c.l.b16 %v85
  %v470 = vunpack.c.l.b16 %v86
  %v471 = vunpack.c.l.b16 %v87
  %v472 = vunpack.c.l.b16 %v88
  %v473 = vunpack.c.l.b16 %v89
  %v474 = vunpack.c.l.b16 %v90
  %v475 = vunpack.c.l.b16 %v91
  %v476 = vunpack.c.l.b16 %v92
  %v477 = vunpack.c.l.b16 %v93
  %v478 = vunpack.c.l.b16 %v94
  %v479 = vunpack.c.l.b16 %v95
  %v480 = vunpack.c.l.b16 %v96
  %v481 = vunpack.c.l.b16 %v97
  %v482 = vunpack.c.l.b16 %v98
  %v483 = vunpack.c.l.b16 %v99
  %v484 = vunpack.c.l.b16 %v100
  %v485 = vunpack.c.l.b16 %v101
  %v486 = vunpack.c.l.b16 %v102
  %v487 = vunpack.c.l.b16 %v103
  %v488 = vunpack.c.l.b16 %v104
  %v489 = vunpack.c.l.b16 %v105
  %v490 = vunpack.c.l.b16 %v106
  %v491 = vunpack.c.l.b16 %v107
  %v492 = vunpack.c.l.b16 %v108
  %v493 = vunpack.c.l.b16 %v109
  %v494 = vpack.c.b16 %v463, %v462
  %v495 = vpack.c.b16 %v465, %v464
  %v496 = vpack.c.b16 %v467, %v466
  %v497 = vpack.c.b16 %v469, %v468
  %v498 = vpack.c.b16 %v471, %v470
  %v499 = vpack.c.b16 %v473, %v472
  %v500 = vpack.c.b16 %v475, %v474
  %v501 = vpack.c.b16 %v477, %v476
  %v502 = vpack.c.b16 %v479, %v478
  %v503 = vpack.c.b16 %v481, %v480
  %v504 = vpack.c.b16 %v483, %v482
  %v505 = vpack.c.b16 %v485, %v484
  %v506 = vpack.c.b16 %v487, %v486
  %v507 = vpack.c.b16 %v489, %v488
  %v508 = vpack.c.b16 %v491, %v490
  %v509 = vpack.c.b16 %v493, %v492
  %526 = vmatpush.bf16.msra.mxu0 %v501
  %527 = vmatpush.bf16.msra.mxu0 %v500
  %528 = vmatpush.bf16.msra.mxu0 %v499
  %529 = vmatpush.bf16.msra.mxu0 %v498
  %530 = vmatpush.bf16.msra.mxu0 %v497
  %531 = vmatpush.bf16.msra.mxu0 %v496
  %532 = vmatpush.bf16.msra.mxu0 %v495
  %533 = vmatpush.bf16.msra.mxu0 %v494
  %534 = vmatmul.bf16.gmra.mxu0 %v302
  %v535 = vpop.f32.mrf.mxu0
  %v536 = vadd.f32 0.0, %v535
  %v537 = vpop.f32.mrf.mxu0
  %v538 = vadd.f32 0.0, %v537
  %539 = vmatmul.bf16.gmra.mxu0 %v304
  %v540 = vpop.f32.mrf.mxu0
  %v541 = vadd.f32 0.0, %v540
  %v542 = vpop.f32.mrf.mxu0
  %v543 = vadd.f32 0.0, %v542
  %544 = vmatmul.bf16.gmra.mxu0 %v306
  %v545 = vpop.f32.mrf.mxu0
  %v546 = vadd.f32 0.0, %v545
  %v547 = vpop.f32.mrf.mxu0
  %v548 = vadd.f32 0.0, %v547
  %549 = vmatmul.bf16.gmra.mxu0 %v308
  %v550 = vpop.f32.mrf.mxu0
  %v551 = vadd.f32 0.0, %v550
  %v552 = vpop.f32.mrf.mxu0
  %v553 = vadd.f32 0.0, %v552
  %554 = vmatmul.bf16.gmra.mxu0 %v310
  %v555 = vpop.f32.mrf.mxu0
  %v556 = vadd.f32 0.0, %v555
  %v557 = vpop.f32.mrf.mxu0
  %v558 = vadd.f32 0.0, %v557
  %559 = vmatmul.bf16.gmra.mxu0 %v312
  %v560 = vpop.f32.mrf.mxu0
  %v561 = vadd.f32 0.0, %v560
  %v562 = vpop.f32.mrf.mxu0
  %v563 = vadd.f32 0.0, %v562
  %564 = vmatmul.bf16.gmra.mxu0 %v314
  %v565 = vpop.f32.mrf.mxu0
  %v566 = vadd.f32 0.0, %v565
  %v567 = vpop.f32.mrf.mxu0
  %v568 = vadd.f32 0.0, %v567
  %569 = vmatmul.bf16.gmra.mxu0 %v316
  %v570 = vpop.f32.mrf.mxu0
  %v571 = vadd.f32 0.0, %v570
  %v572 = vpop.f32.mrf.mxu0
  %v573 = vadd.f32 0.0, %v572
  %574 = vmatmul.bf16.gmra.mxu0 %v318
  %v575 = vpop.f32.mrf.mxu0
  %v576 = vadd.f32 0.0, %v575
  %v577 = vpop.f32.mrf.mxu0
  %v578 = vadd.f32 0.0, %v577
  %579 = vmatmul.bf16.gmra.mxu0 %v320
  %v580 = vpop.f32.mrf.mxu0
  %v581 = vadd.f32 0.0, %v580
  %v582 = vpop.f32.mrf.mxu0
  %v583 = vadd.f32 0.0, %v582
  %584 = vmatmul.bf16.gmra.mxu0 %v322
  %v585 = vpop.f32.mrf.mxu0
  %v586 = vadd.f32 0.0, %v585
  %v587 = vpop.f32.mrf.mxu0
  %v588 = vadd.f32 0.0, %v587
  %589 = vmatmul.bf16.gmra.mxu0 %v324
  %v590 = vpop.f32.mrf.mxu0
  %v591 = vadd.f32 0.0, %v590
  %v592 = vpop.f32.mrf.mxu0
  %v593 = vadd.f32 0.0, %v592
  %594 = vmatmul.bf16.gmra.mxu0 %v326
  %v595 = vpop.f32.mrf.mxu0
  %v596 = vadd.f32 0.0, %v595
  %v597 = vpop.f32.mrf.mxu0
  %v598 = vadd.f32 0.0, %v597
  %599 = vmatmul.bf16.gmra.mxu0 %v328
  %v600 = vpop.f32.mrf.mxu0
  %v601 = vadd.f32 0.0, %v600
  %v602 = vpop.f32.mrf.mxu0
  %v603 = vadd.f32 0.0, %v602
  %604 = vmatmul.bf16.gmra.mxu0 %v330
  %v605 = vpop.f32.mrf.mxu0
  %v606 = vadd.f32 0.0, %v605
  %v607 = vpop.f32.mrf.mxu0
  %v608 = vadd.f32 0.0, %v607
  %609 = vmatmul.bf16.gmra.mxu0 %v332
  %v610 = vpop.f32.mrf.mxu0
  %v611 = vadd.f32 0.0, %v610
  %v612 = vpop.f32.mrf.mxu0
  %v613 = vadd.f32 0.0, %v612
  %614 = vmatmul.bf16.gmra.mxu0 %v334
  %v615 = vpop.f32.mrf.mxu0
  %v616 = vadd.f32 0.0, %v615
  %v617 = vpop.f32.mrf.mxu0
  %v618 = vadd.f32 0.0, %v617
  %619 = vmatmul.bf16.gmra.mxu0 %v336
  %v620 = vpop.f32.mrf.mxu0
  %v621 = vadd.f32 0.0, %v620
  %v622 = vpop.f32.mrf.mxu0
  %v623 = vadd.f32 0.0, %v622
  %624 = vmatmul.bf16.gmra.mxu0 %v338
  %v625 = vpop.f32.mrf.mxu0
  %v626 = vadd.f32 0.0, %v625
  %v627 = vpop.f32.mrf.mxu0
  %v628 = vadd.f32 0.0, %v627
  %629 = vmatmul.bf16.gmra.mxu0 %v340
  %v630 = vpop.f32.mrf.mxu0
  %v631 = vadd.f32 0.0, %v630
  %v632 = vpop.f32.mrf.mxu0
  %v633 = vadd.f32 0.0, %v632
  %634 = vmatmul.bf16.gmra.mxu0 %v342
  %v635 = vpop.f32.mrf.mxu0
  %v636 = vadd.f32 0.0, %v635
  %v637 = vpop.f32.mrf.mxu0
  %v638 = vadd.f32 0.0, %v637
  %639 = vmatmul.bf16.gmra.mxu0 %v344
  %v640 = vpop.f32.mrf.mxu0
  %v641 = vadd.f32 0.0, %v640
  %v642 = vpop.f32.mrf.mxu0
  %v643 = vadd.f32 0.0, %v642
  %644 = vmatmul.bf16.gmra.mxu0 %v346
  %v645 = vpop.f32.mrf.mxu0
  %v646 = vadd.f32 0.0, %v645
  %v647 = vpop.f32.mrf.mxu0
  %v648 = vadd.f32 0.0, %v647
  %649 = vmatmul.bf16.gmra.mxu0 %v348
  %v650 = vpop.f32.mrf.mxu0
  %v651 = vadd.f32 0.0, %v650
  %v652 = vpop.f32.mrf.mxu0
  %v653 = vadd.f32 0.0, %v652
  %654 = vmatmul.bf16.gmra.mxu0 %v350
  %v655 = vpop.f32.mrf.mxu0
  %v656 = vadd.f32 0.0, %v655
  %v657 = vpop.f32.mrf.mxu0
  %v658 = vadd.f32 0.0, %v657
  %659 = vmatmul.bf16.gmra.mxu0 %v352
  %v660 = vpop.f32.mrf.mxu0
  %v661 = vadd.f32 0.0, %v660
  %v662 = vpop.f32.mrf.mxu0
  %v663 = vadd.f32 0.0, %v662
  %664 = vmatmul.bf16.gmra.mxu0 %v354
  %v665 = vpop.f32.mrf.mxu0
  %v666 = vadd.f32 0.0, %v665
  %v667 = vpop.f32.mrf.mxu0
  %v668 = vadd.f32 0.0, %v667
  %669 = vmatmul.bf16.gmra.mxu0 %v356
  %v670 = vpop.f32.mrf.mxu0
  %v671 = vadd.f32 0.0, %v670
  %v672 = vpop.f32.mrf.mxu0
  %v673 = vadd.f32 0.0, %v672
  %674 = vmatmul.bf16.gmra.mxu0 %v358
  %v675 = vpop.f32.mrf.mxu0
  %v676 = vadd.f32 0.0, %v675
  %v677 = vpop.f32.mrf.mxu0
  %v678 = vadd.f32 0.0, %v677
  %679 = vmatmul.bf16.gmra.mxu0 %v360
  %v680 = vpop.f32.mrf.mxu0
  %v681 = vadd.f32 0.0, %v680
  %v682 = vpop.f32.mrf.mxu0
  %v683 = vadd.f32 0.0, %v682
  %684 = vmatmul.bf16.gmra.mxu0 %v362
  %v685 = vpop.f32.mrf.mxu0
  %v686 = vadd.f32 0.0, %v685
  %v687 = vpop.f32.mrf.mxu0
  %v688 = vadd.f32 0.0, %v687
  %689 = vmatmul.bf16.gmra.mxu0 %v364
  %v690 = vpop.f32.mrf.mxu0
  %v691 = vadd.f32 0.0, %v690
  %v692 = vpop.f32.mrf.mxu0
  %v693 = vadd.f32 0.0, %v692
  %694 = vdwg.mxu0
  %695 = vmatpush.bf16.msra.mxu0 %v509
  %696 = vmatpush.bf16.msra.mxu0 %v508
  %697 = vmatpush.bf16.msra.mxu0 %v507
  %698 = vmatpush.bf16.msra.mxu0 %v506
  %699 = vmatpush.bf16.msra.mxu0 %v505
  %700 = vmatpush.bf16.msra.mxu0 %v504
  %701 = vmatpush.bf16.msra.mxu0 %v503
  %702 = vmatpush.bf16.msra.mxu0 %v502
  %703 = vmatmul.bf16.gmra.mxu0 %v303
  %v704 = vpop.f32.mrf.mxu0
  %v705 = vadd.f32 %v536, %v704
  %v706 = vpop.f32.mrf.mxu0
  %v707 = vadd.f32 %v538, %v706
  %708 = vmatmul.bf16.gmra.mxu0 %v305
  %v709 = vpop.f32.mrf.mxu0
  %v710 = vadd.f32 %v541, %v709
  %v711 = vpop.f32.mrf.mxu0
  %v712 = vadd.f32 %v543, %v711
  %713 = vmatmul.bf16.gmra.mxu0 %v307
  %v714 = vpop.f32.mrf.mxu0
  %v715 = vadd.f32 %v546, %v714
  %v716 = vpop.f32.mrf.mxu0
  %v717 = vadd.f32 %v548, %v716
  %718 = vmatmul.bf16.gmra.mxu0 %v309
  %v719 = vpop.f32.mrf.mxu0
  %v720 = vadd.f32 %v551, %v719
  %v721 = vpop.f32.mrf.mxu0
  %v722 = vadd.f32 %v553, %v721
  %723 = vmatmul.bf16.gmra.mxu0 %v311
  %v724 = vpop.f32.mrf.mxu0
  %v725 = vadd.f32 %v556, %v724
  %v726 = vpop.f32.mrf.mxu0
  %v727 = vadd.f32 %v558, %v726
  %728 = vmatmul.bf16.gmra.mxu0 %v313
  %v729 = vpop.f32.mrf.mxu0
  %v730 = vadd.f32 %v561, %v729
  %v731 = vpop.f32.mrf.mxu0
  %v732 = vadd.f32 %v563, %v731
  %733 = vmatmul.bf16.gmra.mxu0 %v315
  %v734 = vpop.f32.mrf.mxu0
  %v735 = vadd.f32 %v566, %v734
  %v736 = vpop.f32.mrf.mxu0
  %v737 = vadd.f32 %v568, %v736
  %738 = vmatmul.bf16.gmra.mxu0 %v317
  %v739 = vpop.f32.mrf.mxu0
  %v740 = vadd.f32 %v571, %v739
  %v741 = vpop.f32.mrf.mxu0
  %v742 = vadd.f32 %v573, %v741
  %743 = vmatmul.bf16.gmra.mxu0 %v319
  %v744 = vpop.f32.mrf.mxu0
  %v745 = vadd.f32 %v576, %v744
  %v746 = vpop.f32.mrf.mxu0
  %v747 = vadd.f32 %v578, %v746
  %748 = vmatmul.bf16.gmra.mxu0 %v321
  %v749 = vpop.f32.mrf.mxu0
  %v750 = vadd.f32 %v581, %v749
  %v751 = vpop.f32.mrf.mxu0
  %v752 = vadd.f32 %v583, %v751
  %753 = vmatmul.bf16.gmra.mxu0 %v323
  %v754 = vpop.f32.mrf.mxu0
  %v755 = vadd.f32 %v586, %v754
  %v756 = vpop.f32.mrf.mxu0
  %v757 = vadd.f32 %v588, %v756
  %758 = vmatmul.bf16.gmra.mxu0 %v325
  %v759 = vpop.f32.mrf.mxu0
  %v760 = vadd.f32 %v591, %v759
  %v761 = vpop.f32.mrf.mxu0
  %v762 = vadd.f32 %v593, %v761
  %763 = vmatmul.bf16.gmra.mxu0 %v327
  %v764 = vpop.f32.mrf.mxu0
  %v765 = vadd.f32 %v596, %v764
  %v766 = vpop.f32.mrf.mxu0
  %v767 = vadd.f32 %v598, %v766
  %768 = vmatmul.bf16.gmra.mxu0 %v329
  %v769 = vpop.f32.mrf.mxu0
  %v770 = vadd.f32 %v601, %v769
  %v771 = vpop.f32.mrf.mxu0
  %v772 = vadd.f32 %v603, %v771
  %773 = vmatmul.bf16.gmra.mxu0 %v331
  %v774 = vpop.f32.mrf.mxu0
  %v775 = vadd.f32 %v606, %v774
  %v776 = vpop.f32.mrf.mxu0
  %v777 = vadd.f32 %v608, %v776
  %778 = vmatmul.bf16.gmra.mxu0 %v333
  %v779 = vpop.f32.mrf.mxu0
  %v780 = vadd.f32 %v611, %v779
  %v781 = vpop.f32.mrf.mxu0
  %v782 = vadd.f32 %v613, %v781
  %783 = vmatmul.bf16.gmra.mxu0 %v335
  %v784 = vpop.f32.mrf.mxu0
  %v785 = vadd.f32 %v616, %v784
  %v786 = vpop.f32.mrf.mxu0
  %v787 = vadd.f32 %v618, %v786
  %788 = vmatmul.bf16.gmra.mxu0 %v337
  %v789 = vpop.f32.mrf.mxu0
  %v790 = vadd.f32 %v621, %v789
  %v791 = vpop.f32.mrf.mxu0
  %v792 = vadd.f32 %v623, %v791
  %793 = vmatmul.bf16.gmra.mxu0 %v339
  %v794 = vpop.f32.mrf.mxu0
  %v795 = vadd.f32 %v626, %v794
  %v796 = vpop.f32.mrf.mxu0
  %v797 = vadd.f32 %v628, %v796
  %798 = vmatmul.bf16.gmra.mxu0 %v341
  %v799 = vpop.f32.mrf.mxu0
  %v800 = vadd.f32 %v631, %v799
  %v801 = vpop.f32.mrf.mxu0
  %v802 = vadd.f32 %v633, %v801
  %803 = vmatmul.bf16.gmra.mxu0 %v343
  %v804 = vpop.f32.mrf.mxu0
  %v805 = vadd.f32 %v636, %v804
  %v806 = vpop.f32.mrf.mxu0
  %v807 = vadd.f32 %v638, %v806
  %808 = vmatmul.bf16.gmra.mxu0 %v345
  %v809 = vpop.f32.mrf.mxu0
  %v810 = vadd.f32 %v641, %v809
  %v811 = vpop.f32.mrf.mxu0
  %v812 = vadd.f32 %v643, %v811
  %813 = vmatmul.bf16.gmra.mxu0 %v347
  %v814 = vpop.f32.mrf.mxu0
  %v815 = vadd.f32 %v646, %v814
  %v816 = vpop.f32.mrf.mxu0
  %v817 = vadd.f32 %v648, %v816
  %818 = vmatmul.bf16.gmra.mxu0 %v349
  %v819 = vpop.f32.mrf.mxu0
  %v820 = vadd.f32 %v651, %v819
  %v821 = vpop.f32.mrf.mxu0
  %v822 = vadd.f32 %v653, %v821
  %823 = vmatmul.bf16.gmra.mxu0 %v351
  %v824 = vpop.f32.mrf.mxu0
  %v825 = vadd.f32 %v656, %v824
  %v826 = vpop.f32.mrf.mxu0
  %v827 = vadd.f32 %v658, %v826
  %828 = vmatmul.bf16.gmra.mxu0 %v353
  %v829 = vpop.f32.mrf.mxu0
  %v830 = vadd.f32 %v661, %v829
  %v831 = vpop.f32.mrf.mxu0
  %v832 = vadd.f32 %v663, %v831
  %833 = vmatmul.bf16.gmra.mxu0 %v355
  %v834 = vpop.f32.mrf.mxu0
  %v835 = vadd.f32 %v666, %v834
  %v836 = vpop.f32.mrf.mxu0
  %v837 = vadd.f32 %v668, %v836
  %838 = vmatmul.bf16.gmra.mxu0 %v357
  %v839 = vpop.f32.mrf.mxu0
  %v840 = vadd.f32 %v671, %v839
  %v841 = vpop.f32.mrf.mxu0
  %v842 = vadd.f32 %v673, %v841
  %843 = vmatmul.bf16.gmra.mxu0 %v359
  %v844 = vpop.f32.mrf.mxu0
  %v845 = vadd.f32 %v676, %v844
  %v846 = vpop.f32.mrf.mxu0
  %v847 = vadd.f32 %v678, %v846
  %848 = vmatmul.bf16.gmra.mxu0 %v361
  %v849 = vpop.f32.mrf.mxu0
  %v850 = vadd.f32 %v681, %v849
  %v851 = vpop.f32.mrf.mxu0
  %v852 = vadd.f32 %v683, %v851
  %853 = vmatmul.bf16.gmra.mxu0 %v363
  %v854 = vpop.f32.mrf.mxu0
  %v855 = vadd.f32 %v686, %v854
  %v856 = vpop.f32.mrf.mxu0
  %v857 = vadd.f32 %v688, %v856
  %858 = vmatmul.bf16.gmra.mxu0 %v365
  %v859 = vpop.f32.mrf.mxu0
  %v860 = vadd.f32 %v691, %v859
  %v861 = vpop.f32.mrf.mxu0
  %v862 = vadd.f32 %v693, %v861
  %863 = vdwg.mxu0
  %v864 = vpack.c.bf16 %v705, %v705
  %v865 = vpack.c.bf16 %v707, %v707
  %v866 = vpack.c.bf16 %v710, %v710
  %v867 = vpack.c.bf16 %v712, %v712
  %v868 = vpack.c.bf16 %v715, %v715
  %v869 = vpack.c.bf16 %v717, %v717
  %v870 = vpack.c.bf16 %v720, %v720
  %v871 = vpack.c.bf16 %v722, %v722
  %v872 = vpack.c.bf16 %v725, %v725
  %v873 = vpack.c.bf16 %v727, %v727
  %v874 = vpack.c.bf16 %v730, %v730
  %v875 = vpack.c.bf16 %v732, %v732
  %v876 = vpack.c.bf16 %v735, %v735
  %v877 = vpack.c.bf16 %v737, %v737
  %v878 = vpack.c.bf16 %v740, %v740
  %v879 = vpack.c.bf16 %v742, %v742
  %v880 = vpack.c.bf16 %v745, %v745
  %v881 = vpack.c.bf16 %v747, %v747
  %v882 = vpack.c.bf16 %v750, %v750
  %v883 = vpack.c.bf16 %v752, %v752
  %v884 = vpack.c.bf16 %v755, %v755
  %v885 = vpack.c.bf16 %v757, %v757
  %v886 = vpack.c.bf16 %v760, %v760
  %v887 = vpack.c.bf16 %v762, %v762
  %v888 = vpack.c.bf16 %v765, %v765
  %v889 = vpack.c.bf16 %v767, %v767
  %v890 = vpack.c.bf16 %v770, %v770
  %v891 = vpack.c.bf16 %v772, %v772
  %v892 = vpack.c.bf16 %v775, %v775
  %v893 = vpack.c.bf16 %v777, %v777
  %v894 = vpack.c.bf16 %v780, %v780
  %v895 = vpack.c.bf16 %v782, %v782
  %v896 = vpack.c.bf16 %v785, %v785
  %v897 = vpack.c.bf16 %v787, %v787
  %v898 = vpack.c.bf16 %v790, %v790
  %v899 = vpack.c.bf16 %v792, %v792
  %v900 = vpack.c.bf16 %v795, %v795
  %v901 = vpack.c.bf16 %v797, %v797
  %v902 = vpack.c.bf16 %v800, %v800
  %v903 = vpack.c.bf16 %v802, %v802
  %v904 = vpack.c.bf16 %v805, %v805
  %v905 = vpack.c.bf16 %v807, %v807
  %v906 = vpack.c.bf16 %v810, %v810
  %v907 = vpack.c.bf16 %v812, %v812
  %v908 = vpack.c.bf16 %v815, %v815
  %v909 = vpack.c.bf16 %v817, %v817
  %v910 = vpack.c.bf16 %v820, %v820
  %v911 = vpack.c.bf16 %v822, %v822
  %v912 = vpack.c.bf16 %v825, %v825
  %v913 = vpack.c.bf16 %v827, %v827
  %v914 = vpack.c.bf16 %v830, %v830
  %v915 = vpack.c.bf16 %v832, %v832
  %v916 = vpack.c.bf16 %v835, %v835
  %v917 = vpack.c.bf16 %v837, %v837
  %v918 = vpack.c.bf16 %v840, %v840
  %v919 = vpack.c.bf16 %v842, %v842
  %v920 = vpack.c.bf16 %v845, %v845
  %v921 = vpack.c.bf16 %v847, %v847
  %v922 = vpack.c.bf16 %v850, %v850
  %v923 = vpack.c.bf16 %v852, %v852
  %v924 = vpack.c.bf16 %v855, %v855
  %v925 = vpack.c.bf16 %v857, %v857
  %v926 = vpack.c.bf16 %v860, %v860
  %v927 = vpack.c.bf16 %v862, %v862
  %vm928 = vcmask 519168
  %929 = vst.msk [vmem:[%s2] sm:$0xf] %vm928, %v864
  %930 = vst.msk [vmem:[%s2 + $0x4] sm:$0xf] %vm928, %v865
  %931 = vst.msk [vmem:[%s2 + $0x8] sm:$0xf] %vm928, %v866
  %932 = vst.msk [vmem:[%s2 + $0xc] sm:$0xf] %vm928, %v867
  %933 = vst.msk [vmem:[%s2 + $0x10] sm:$0xf] %vm928, %v868
  %934 = vst.msk [vmem:[%s2 + $0x14] sm:$0xf] %vm928, %v869
  %935 = vst.msk [vmem:[%s2 + $0x18] sm:$0xf] %vm928, %v870
  %936 = vst.msk [vmem:[%s2 + $0x1c] sm:$0xf] %vm928, %v871
  %937 = vst.msk [vmem:[%s2 + $0x20] sm:$0xf] %vm928, %v872
  %938 = vst.msk [vmem:[%s2 + $0x24] sm:$0xf] %vm928, %v873
  %939 = vst.msk [vmem:[%s2 + $0x28] sm:$0xf] %vm928, %v874
  %940 = vst.msk [vmem:[%s2 + $0x2c] sm:$0xf] %vm928, %v875
  %941 = vst.msk [vmem:[%s2 + $0x30] sm:$0xf] %vm928, %v876
  %942 = vst.msk [vmem:[%s2 + $0x34] sm:$0xf] %vm928, %v877
  %943 = vst.msk [vmem:[%s2 + $0x38] sm:$0xf] %vm928, %v878
  %944 = vst.msk [vmem:[%s2 + $0x3c] sm:$0xf] %vm928, %v879
  %945 = vst.msk [vmem:[%s2 + $0x40] sm:$0xf] %vm928, %v880
  %946 = vst.msk [vmem:[%s2 + $0x44] sm:$0xf] %vm928, %v881
  %947 = vst.msk [vmem:[%s2 + $0x48] sm:$0xf] %vm928, %v882
  %948 = vst.msk [vmem:[%s2 + $0x4c] sm:$0xf] %vm928, %v883
  %949 = vst.msk [vmem:[%s2 + $0x50] sm:$0xf] %vm928, %v884
  %950 = vst.msk [vmem:[%s2 + $0x54] sm:$0xf] %vm928, %v885
  %951 = vst.msk [vmem:[%s2 + $0x58] sm:$0xf] %vm928, %v886
  %952 = vst.msk [vmem:[%s2 + $0x5c] sm:$0xf] %vm928, %v887
  %953 = vst.msk [vmem:[%s2 + $0x60] sm:$0xf] %vm928, %v888
  %954 = vst.msk [vmem:[%s2 + $0x64] sm:$0xf] %vm928, %v889
  %955 = vst.msk [vmem:[%s2 + $0x68] sm:$0xf] %vm928, %v890
  %956 = vst.msk [vmem:[%s2 + $0x6c] sm:$0xf] %vm928, %v891
  %957 = vst.msk [vmem:[%s2 + $0x70] sm:$0xf] %vm928, %v892
  %958 = vst.msk [vmem:[%s2 + $0x74] sm:$0xf] %vm928, %v893
  %959 = vst.msk [vmem:[%s2 + $0x78] sm:$0xf] %vm928, %v894
  %960 = vst.msk [vmem:[%s2 + $0x7c] sm:$0xf] %vm928, %v895
  %961 = vst.msk [vmem:[%s2 + $0x80] sm:$0xf] %vm928, %v896
  %962 = vst.msk [vmem:[%s2 + $0x84] sm:$0xf] %vm928, %v897
  %963 = vst.msk [vmem:[%s2 + $0x88] sm:$0xf] %vm928, %v898
  %964 = vst.msk [vmem:[%s2 + $0x8c] sm:$0xf] %vm928, %v899
  %965 = vst.msk [vmem:[%s2 + $0x90] sm:$0xf] %vm928, %v900
  %966 = vst.msk [vmem:[%s2 + $0x94] sm:$0xf] %vm928, %v901
  %967 = vst.msk [vmem:[%s2 + $0x98] sm:$0xf] %vm928, %v902
  %968 = vst.msk [vmem:[%s2 + $0x9c] sm:$0xf] %vm928, %v903
  %969 = vst.msk [vmem:[%s2 + $0xa0] sm:$0xf] %vm928, %v904
  %970 = vst.msk [vmem:[%s2 + $0xa4] sm:$0xf] %vm928, %v905
  %971 = vst.msk [vmem:[%s2 + $0xa8] sm:$0xf] %vm928, %v906
  %972 = vst.msk [vmem:[%s2 + $0xac] sm:$0xf] %vm928, %v907
  %973 = vst.msk [vmem:[%s2 + $0xb0] sm:$0xf] %vm928, %v908
  %974 = vst.msk [vmem:[%s2 + $0xb4] sm:$0xf] %vm928, %v909
  %975 = vst.msk [vmem:[%s2 + $0xb8] sm:$0xf] %vm928, %v910
  %976 = vst.msk [vmem:[%s2 + $0xbc] sm:$0xf] %vm928, %v911
  %977 = vst.msk [vmem:[%s2 + $0xc0] sm:$0xf] %vm928, %v912
  %978 = vst.msk [vmem:[%s2 + $0xc4] sm:$0xf] %vm928, %v913
  %979 = vst.msk [vmem:[%s2 + $0xc8] sm:$0xf] %vm928, %v914
  %980 = vst.msk [vmem:[%s2 + $0xcc] sm:$0xf] %vm928, %v915
  %981 = vst.msk [vmem:[%s2 + $0xd0] sm:$0xf] %vm928, %v916
  %982 = vst.msk [vmem:[%s2 + $0xd4] sm:$0xf] %vm928, %v917
  %983 = vst.msk [vmem:[%s2 + $0xd8] sm:$0xf] %vm928, %v918
  %984 = vst.msk [vmem:[%s2 + $0xdc] sm:$0xf] %vm928, %v919
  %985 = vst.msk [vmem:[%s2 + $0xe0] sm:$0xf] %vm928, %v920
  %986 = vst.msk [vmem:[%s2 + $0xe4] sm:$0xf] %vm928, %v921
  %987 = vst.msk [vmem:[%s2 + $0xe8] sm:$0xf] %vm928, %v922
  %988 = vst.msk [vmem:[%s2 + $0xec] sm:$0xf] %vm928, %v923
  %989 = vst.msk [vmem:[%s2 + $0xf0] sm:$0xf] %vm928, %v924
  %990 = vst.msk [vmem:[%s2 + $0xf4] sm:$0xf] %vm928, %v925
  %991 = vst.msk [vmem:[%s2 + $0xf8] sm:$0xf] %vm928, %v926
  %992 = vst.msk [vmem:[%s2 + $0xfc] sm:$0xf] %vm928, %v927
  %vm993 = vcmask 523264
  %v994 = vsel %vm993, %v705, 0.0
  %v995 = vsel %vm993, %v707, 0.0
  %v996 = vadd.f32 %v994, %v995
  %v997 = vsel %vm993, %v710, 0.0
  %v998 = vadd.f32 %v996, %v997
  %v999 = vsel %vm993, %v712, 0.0
  %v1000 = vadd.f32 %v998, %v999
  %v1001 = vsel %vm993, %v715, 0.0
  %v1002 = vadd.f32 %v1000, %v1001
  %v1003 = vsel %vm993, %v717, 0.0
  %v1004 = vadd.f32 %v1002, %v1003
  %v1005 = vsel %vm993, %v720, 0.0
  %v1006 = vadd.f32 %v1004, %v1005
  %v1007 = vsel %vm993, %v722, 0.0
  %v1008 = vadd.f32 %v1006, %v1007
  %v1009 = vsel %vm993, %v725, 0.0
  %v1010 = vadd.f32 %v1008, %v1009
  %v1011 = vsel %vm993, %v727, 0.0
  %v1012 = vadd.f32 %v1010, %v1011
  %v1013 = vsel %vm993, %v730, 0.0
  %v1014 = vadd.f32 %v1012, %v1013
  %v1015 = vsel %vm993, %v732, 0.0
  %v1016 = vadd.f32 %v1014, %v1015
  %v1017 = vsel %vm993, %v735, 0.0
  %v1018 = vadd.f32 %v1016, %v1017
  %v1019 = vsel %vm993, %v737, 0.0
  %v1020 = vadd.f32 %v1018, %v1019
  %v1021 = vsel %vm993, %v740, 0.0
  %v1022 = vadd.f32 %v1020, %v1021
  %v1023 = vsel %vm993, %v742, 0.0
  %v1024 = vadd.f32 %v1022, %v1023
  %v1025 = vsel %vm993, %v745, 0.0
  %v1026 = vadd.f32 %v1024, %v1025
  %v1027 = vsel %vm993, %v747, 0.0
  %v1028 = vadd.f32 %v1026, %v1027
  %v1029 = vsel %vm993, %v750, 0.0
  %v1030 = vadd.f32 %v1028, %v1029
  %v1031 = vsel %vm993, %v752, 0.0
  %v1032 = vadd.f32 %v1030, %v1031
  %v1033 = vsel %vm993, %v755, 0.0
  %v1034 = vadd.f32 %v1032, %v1033
  %v1035 = vsel %vm993, %v757, 0.0
  %v1036 = vadd.f32 %v1034, %v1035
  %v1037 = vsel %vm993, %v760, 0.0
  %v1038 = vadd.f32 %v1036, %v1037
  %v1039 = vsel %vm993, %v762, 0.0
  %v1040 = vadd.f32 %v1038, %v1039
  %v1041 = vsel %vm993, %v765, 0.0
  %v1042 = vadd.f32 %v1040, %v1041
  %v1043 = vsel %vm993, %v767, 0.0
  %v1044 = vadd.f32 %v1042, %v1043
  %v1045 = vsel %vm993, %v770, 0.0
  %v1046 = vadd.f32 %v1044, %v1045
  %v1047 = vsel %vm993, %v772, 0.0
  %v1048 = vadd.f32 %v1046, %v1047
  %v1049 = vsel %vm993, %v775, 0.0
  %v1050 = vadd.f32 %v1048, %v1049
  %v1051 = vsel %vm993, %v777, 0.0
  %v1052 = vadd.f32 %v1050, %v1051
  %v1053 = vsel %vm993, %v780, 0.0
  %v1054 = vadd.f32 %v1052, %v1053
  %v1055 = vsel %vm993, %v782, 0.0
  %v1056 = vadd.f32 %v1054, %v1055
  %v1057 = vsel %vm993, %v785, 0.0
  %v1058 = vadd.f32 %v1056, %v1057
  %v1059 = vsel %vm993, %v787, 0.0
  %v1060 = vadd.f32 %v1058, %v1059
  %v1061 = vsel %vm993, %v790, 0.0
  %v1062 = vadd.f32 %v1060, %v1061
  %v1063 = vsel %vm993, %v792, 0.0
  %v1064 = vadd.f32 %v1062, %v1063
  %v1065 = vsel %vm993, %v795, 0.0
  %v1066 = vadd.f32 %v1064, %v1065
  %v1067 = vsel %vm993, %v797, 0.0
  %v1068 = vadd.f32 %v1066, %v1067
  %v1069 = vsel %vm993, %v800, 0.0
  %v1070 = vadd.f32 %v1068, %v1069
  %v1071 = vsel %vm993, %v802, 0.0
  %v1072 = vadd.f32 %v1070, %v1071
  %v1073 = vsel %vm993, %v805, 0.0
  %v1074 = vadd.f32 %v1072, %v1073
  %v1075 = vsel %vm993, %v807, 0.0
  %v1076 = vadd.f32 %v1074, %v1075
  %v1077 = vsel %vm993, %v810, 0.0
  %v1078 = vadd.f32 %v1076, %v1077
  %v1079 = vsel %vm993, %v812, 0.0
  %v1080 = vadd.f32 %v1078, %v1079
  %v1081 = vsel %vm993, %v815, 0.0
  %v1082 = vadd.f32 %v1080, %v1081
  %v1083 = vsel %vm993, %v817, 0.0
  %v1084 = vadd.f32 %v1082, %v1083
  %v1085 = vsel %vm993, %v820, 0.0
  %v1086 = vadd.f32 %v1084, %v1085
  %v1087 = vsel %vm993, %v822, 0.0
  %v1088 = vadd.f32 %v1086, %v1087
  %v1089 = vsel %vm993, %v825, 0.0
  %v1090 = vadd.f32 %v1088, %v1089
  %v1091 = vsel %vm993, %v827, 0.0
  %v1092 = vadd.f32 %v1090, %v1091
  %v1093 = vsel %vm993, %v830, 0.0
  %v1094 = vadd.f32 %v1092, %v1093
  %v1095 = vsel %vm993, %v832, 0.0
  %v1096 = vadd.f32 %v1094, %v1095
  %v1097 = vsel %vm993, %v835, 0.0
  %v1098 = vadd.f32 %v1096, %v1097
  %v1099 = vsel %vm993, %v837, 0.0
  %v1100 = vadd.f32 %v1098, %v1099
  %v1101 = vsel %vm993, %v840, 0.0
  %v1102 = vadd.f32 %v1100, %v1101
  %v1103 = vsel %vm993, %v842, 0.0
  %v1104 = vadd.f32 %v1102, %v1103
  %v1105 = vsel %vm993, %v845, 0.0
  %v1106 = vadd.f32 %v1104, %v1105
  %v1107 = vsel %vm993, %v847, 0.0
  %v1108 = vadd.f32 %v1106, %v1107
  %v1109 = vsel %vm993, %v850, 0.0
  %v1110 = vadd.f32 %v1108, %v1109
  %v1111 = vsel %vm993, %v852, 0.0
  %v1112 = vadd.f32 %v1110, %v1111
  %v1113 = vsel %vm993, %v855, 0.0
  %v1114 = vadd.f32 %v1112, %v1113
  %v1115 = vsel %vm993, %v857, 0.0
  %v1116 = vadd.f32 %v1114, %v1115
  %v1117 = vsel %vm993, %v860, 0.0
  %v1118 = vadd.f32 %v1116, %v1117
  %v1119 = vsel %vm993, %v862, 0.0
  %v1120 = vadd.f32 %v1118, %v1119
  %v1121 = vrot.slane %v1120, 4
  %v1122 = vadd.f32 %v1120, %v1121
  %v1123 = vrot.slane %v1122, 2
  %v1124 = vadd.f32 %v1122, %v1123
  %v1125 = vrot.slane %v1124, 1
  %v1126 = vadd.f32 %v1124, %v1125
  %vm1127 = vcmask 516096
  %1128 = vst.msk [vmem:[%s3] sm:$0x1] %vm1127, %v1126
  %v1129 = vmul.f32 %v705, %v705
  %v1130 = vmul.f32 %v707, %v707
  %v1131 = vmul.f32 %v710, %v710
  %v1132 = vmul.f32 %v712, %v712
  %v1133 = vmul.f32 %v715, %v715
  %v1134 = vmul.f32 %v717, %v717
  %v1135 = vmul.f32 %v720, %v720
  %v1136 = vmul.f32 %v722, %v722
  %v1137 = vmul.f32 %v725, %v725
  %v1138 = vmul.f32 %v727, %v727
  %v1139 = vmul.f32 %v730, %v730
  %v1140 = vmul.f32 %v732, %v732
  %v1141 = vmul.f32 %v735, %v735
  %v1142 = vmul.f32 %v737, %v737
  %v1143 = vmul.f32 %v740, %v740
  %v1144 = vmul.f32 %v742, %v742
  %v1145 = vmul.f32 %v745, %v745
  %v1146 = vmul.f32 %v747, %v747
  %v1147 = vmul.f32 %v750, %v750
  %v1148 = vmul.f32 %v752, %v752
  %v1149 = vmul.f32 %v755, %v755
  %v1150 = vmul.f32 %v757, %v757
  %v1151 = vmul.f32 %v760, %v760
  %v1152 = vmul.f32 %v762, %v762
  %v1153 = vmul.f32 %v765, %v765
  %v1154 = vmul.f32 %v767, %v767
  %v1155 = vmul.f32 %v770, %v770
  %v1156 = vmul.f32 %v772, %v772
  %v1157 = vmul.f32 %v775, %v775
  %v1158 = vmul.f32 %v777, %v777
  %v1159 = vmul.f32 %v780, %v780
  %v1160 = vmul.f32 %v782, %v782
  %v1161 = vmul.f32 %v785, %v785
  %v1162 = vmul.f32 %v787, %v787
  %v1163 = vmul.f32 %v790, %v790
  %v1164 = vmul.f32 %v792, %v792
  %v1165 = vmul.f32 %v795, %v795
  %v1166 = vmul.f32 %v797, %v797
  %v1167 = vmul.f32 %v800, %v800
  %v1168 = vmul.f32 %v802, %v802
  %v1169 = vmul.f32 %v805, %v805
  %v1170 = vmul.f32 %v807, %v807
  %v1171 = vmul.f32 %v810, %v810
  %v1172 = vmul.f32 %v812, %v812
  %v1173 = vmul.f32 %v815, %v815
  %v1174 = vmul.f32 %v817, %v817
  %v1175 = vmul.f32 %v820, %v820
  %v1176 = vmul.f32 %v822, %v822
  %v1177 = vmul.f32 %v825, %v825
  %v1178 = vmul.f32 %v827, %v827
  %v1179 = vmul.f32 %v830, %v830
  %v1180 = vmul.f32 %v832, %v832
  %v1181 = vmul.f32 %v835, %v835
  %v1182 = vmul.f32 %v837, %v837
  %v1183 = vmul.f32 %v840, %v840
  %v1184 = vmul.f32 %v842, %v842
  %v1185 = vmul.f32 %v845, %v845
  %v1186 = vmul.f32 %v847, %v847
  %v1187 = vmul.f32 %v850, %v850
  %v1188 = vmul.f32 %v852, %v852
  %v1189 = vmul.f32 %v855, %v855
  %v1190 = vmul.f32 %v857, %v857
  %v1191 = vmul.f32 %v860, %v860
  %v1192 = vmul.f32 %v862, %v862
  %v1193 = vsel %vm993, %v1129, 0.0
  %v1194 = vsel %vm993, %v1130, 0.0
  %v1195 = vadd.f32 %v1193, %v1194
  %v1196 = vsel %vm993, %v1131, 0.0
  %v1197 = vadd.f32 %v1195, %v1196
  %v1198 = vsel %vm993, %v1132, 0.0
  %v1199 = vadd.f32 %v1197, %v1198
  %v1200 = vsel %vm993, %v1133, 0.0
  %v1201 = vadd.f32 %v1199, %v1200
  %v1202 = vsel %vm993, %v1134, 0.0
  %v1203 = vadd.f32 %v1201, %v1202
  %v1204 = vsel %vm993, %v1135, 0.0
  %v1205 = vadd.f32 %v1203, %v1204
  %v1206 = vsel %vm993, %v1136, 0.0
  %v1207 = vadd.f32 %v1205, %v1206
  %v1208 = vsel %vm993, %v1137, 0.0
  %v1209 = vadd.f32 %v1207, %v1208
  %v1210 = vsel %vm993, %v1138, 0.0
  %v1211 = vadd.f32 %v1209, %v1210
  %v1212 = vsel %vm993, %v1139, 0.0
  %v1213 = vadd.f32 %v1211, %v1212
  %v1214 = vsel %vm993, %v1140, 0.0
  %v1215 = vadd.f32 %v1213, %v1214
  %v1216 = vsel %vm993, %v1141, 0.0
  %v1217 = vadd.f32 %v1215, %v1216
  %v1218 = vsel %vm993, %v1142, 0.0
  %v1219 = vadd.f32 %v1217, %v1218
  %v1220 = vsel %vm993, %v1143, 0.0
  %v1221 = vadd.f32 %v1219, %v1220
  %v1222 = vsel %vm993, %v1144, 0.0
  %v1223 = vadd.f32 %v1221, %v1222
  %v1224 = vsel %vm993, %v1145, 0.0
  %v1225 = vadd.f32 %v1223, %v1224
  %v1226 = vsel %vm993, %v1146, 0.0
  %v1227 = vadd.f32 %v1225, %v1226
  %v1228 = vsel %vm993, %v1147, 0.0
  %v1229 = vadd.f32 %v1227, %v1228
  %v1230 = vsel %vm993, %v1148, 0.0
  %v1231 = vadd.f32 %v1229, %v1230
  %v1232 = vsel %vm993, %v1149, 0.0
  %v1233 = vadd.f32 %v1231, %v1232
  %v1234 = vsel %vm993, %v1150, 0.0
  %v1235 = vadd.f32 %v1233, %v1234
  %v1236 = vsel %vm993, %v1151, 0.0
  %v1237 = vadd.f32 %v1235, %v1236
  %v1238 = vsel %vm993, %v1152, 0.0
  %v1239 = vadd.f32 %v1237, %v1238
  %v1240 = vsel %vm993, %v1153, 0.0
  %v1241 = vadd.f32 %v1239, %v1240
  %v1242 = vsel %vm993, %v1154, 0.0
  %v1243 = vadd.f32 %v1241, %v1242
  %v1244 = vsel %vm993, %v1155, 0.0
  %v1245 = vadd.f32 %v1243, %v1244
  %v1246 = vsel %vm993, %v1156, 0.0
  %v1247 = vadd.f32 %v1245, %v1246
  %v1248 = vsel %vm993, %v1157, 0.0
  %v1249 = vadd.f32 %v1247, %v1248
  %v1250 = vsel %vm993, %v1158, 0.0
  %v1251 = vadd.f32 %v1249, %v1250
  %v1252 = vsel %vm993, %v1159, 0.0
  %v1253 = vadd.f32 %v1251, %v1252
  %v1254 = vsel %vm993, %v1160, 0.0
  %v1255 = vadd.f32 %v1253, %v1254
  %v1256 = vsel %vm993, %v1161, 0.0
  %v1257 = vadd.f32 %v1255, %v1256
  %v1258 = vsel %vm993, %v1162, 0.0
  %v1259 = vadd.f32 %v1257, %v1258
  %v1260 = vsel %vm993, %v1163, 0.0
  %v1261 = vadd.f32 %v1259, %v1260
  %v1262 = vsel %vm993, %v1164, 0.0
  %v1263 = vadd.f32 %v1261, %v1262
  %v1264 = vsel %vm993, %v1165, 0.0
  %v1265 = vadd.f32 %v1263, %v1264
  %v1266 = vsel %vm993, %v1166, 0.0
  %v1267 = vadd.f32 %v1265, %v1266
  %v1268 = vsel %vm993, %v1167, 0.0
  %v1269 = vadd.f32 %v1267, %v1268
  %v1270 = vsel %vm993, %v1168, 0.0
  %v1271 = vadd.f32 %v1269, %v1270
  %v1272 = vsel %vm993, %v1169, 0.0
  %v1273 = vadd.f32 %v1271, %v1272
  %v1274 = vsel %vm993, %v1170, 0.0
  %v1275 = vadd.f32 %v1273, %v1274
  %v1276 = vsel %vm993, %v1171, 0.0
  %v1277 = vadd.f32 %v1275, %v1276
  %v1278 = vsel %vm993, %v1172, 0.0
  %v1279 = vadd.f32 %v1277, %v1278
  %v1280 = vsel %vm993, %v1173, 0.0
  %v1281 = vadd.f32 %v1279, %v1280
  %v1282 = vsel %vm993, %v1174, 0.0
  %v1283 = vadd.f32 %v1281, %v1282
  %v1284 = vsel %vm993, %v1175, 0.0
  %v1285 = vadd.f32 %v1283, %v1284
  %v1286 = vsel %vm993, %v1176, 0.0
  %v1287 = vadd.f32 %v1285, %v1286
  %v1288 = vsel %vm993, %v1177, 0.0
  %v1289 = vadd.f32 %v1287, %v1288
  %v1290 = vsel %vm993, %v1178, 0.0
  %v1291 = vadd.f32 %v1289, %v1290
  %v1292 = vsel %vm993, %v1179, 0.0
  %v1293 = vadd.f32 %v1291, %v1292
  %v1294 = vsel %vm993, %v1180, 0.0
  %v1295 = vadd.f32 %v1293, %v1294
  %v1296 = vsel %vm993, %v1181, 0.0
  %v1297 = vadd.f32 %v1295, %v1296
  %v1298 = vsel %vm993, %v1182, 0.0
  %v1299 = vadd.f32 %v1297, %v1298
  %v1300 = vsel %vm993, %v1183, 0.0
  %v1301 = vadd.f32 %v1299, %v1300
  %v1302 = vsel %vm993, %v1184, 0.0
  %v1303 = vadd.f32 %v1301, %v1302
  %v1304 = vsel %vm993, %v1185, 0.0
  %v1305 = vadd.f32 %v1303, %v1304
  %v1306 = vsel %vm993, %v1186, 0.0
  %v1307 = vadd.f32 %v1305, %v1306
  %v1308 = vsel %vm993, %v1187, 0.0
  %v1309 = vadd.f32 %v1307, %v1308
  %v1310 = vsel %vm993, %v1188, 0.0
  %v1311 = vadd.f32 %v1309, %v1310
  %v1312 = vsel %vm993, %v1189, 0.0
  %v1313 = vadd.f32 %v1311, %v1312
  %v1314 = vsel %vm993, %v1190, 0.0
  %v1315 = vadd.f32 %v1313, %v1314
  %v1316 = vsel %vm993, %v1191, 0.0
  %v1317 = vadd.f32 %v1315, %v1316
  %v1318 = vsel %vm993, %v1192, 0.0
  %v1319 = vadd.f32 %v1317, %v1318
  %v1320 = vrot.slane %v1319, 4
  %v1321 = vadd.f32 %v1319, %v1320
  %v1322 = vrot.slane %v1321, 2
  %v1323 = vadd.f32 %v1321, %v1322
  %v1324 = vrot.slane %v1323, 1
  %v1325 = vadd.f32 %v1323, %v1324
  %1326 = vst.msk [vmem:[%s4] sm:$0x1] %vm1127, %v1325
  // Predicated region
  $region10: #{discriminator_forward.6} parent=0 // pred_check
    _
  $region11: #{discriminator_forward.6} parent=0 // pred_check_branch
    %1328 = sbr.rel (0) target = $region13
  $region12: #{discriminator_forward.6} parent=0 // pred_region
    _
  $region13: #{discriminator_forward.6} parent=0 // pred_fallthru
    _
  // Predicated region
  $region14: #{discriminator_forward.6} parent=0 // pred_check
    _
  $region15: #{discriminator_forward.6} parent=0 // pred_check_branch
    %1330 = sbr.rel (0) target = $region17
  $region16: #{discriminator_forward.6} parent=0 // pred_region
    _
  $region17: #{discriminator_forward.6} parent=0 // pred_fallthru
    _
  // Predicated region
  $region18: #{discriminator_forward.6} parent=0 // pred_check
    _
  $region19: #{discriminator_forward.6} parent=0 // pred_check_branch
    %1332 = sbr.rel (0) target = $region21
  $region20: #{discriminator_forward.6} parent=0 // pred_region
    _
  $region21: #{discriminator_forward.6} parent=0 // pred_fallthru
    _
  // Predicated region
  $region22: #{discriminator_forward.6} parent=0 // pred_check
    _
  $region23: #{discriminator_forward.6} parent=0 // pred_check_branch
    %1334 = sbr.rel (0) target = $region25
  $region24: #{discriminator_forward.6} parent=0 // pred_region
    _
  $region25: #{discriminator_forward.6} parent=0 // pred_fallthru
    _
  // Predicated region
  $region26: #{discriminator_forward.6} parent=0 // pred_check
    _
  $region27: #{discriminator_forward.6} parent=0 // pred_check_branch
    %1336 = sbr.rel (0) target = $region29
  $region28: #{discriminator_forward.6} parent=0 // pred_region
    _
  $region29: #{discriminator_forward.6} parent=0 // pred_fallthru
    _
  // Predicated region
  $region30: #{discriminator_forward.6} parent=0 // pred_check
    _
  $region31: #{discriminator_forward.6} parent=0 // pred_check_branch
    %1338 = sbr.rel (0) target = $region33
  $region32: #{discriminator_forward.6} parent=0 // pred_region
    _
  $region33: #{discriminator_forward.6} parent=0 // pred_fallthru
    _

// kernel: discriminator_forward.11
$region0: #{discriminator_forward.11}
  #allocation0 [shape = 'u32[]', space=smem, size = 0x4, offset = 0x4, fixed_abs, tag = 'smem constant byte address 0x4 - core index']
  #allocation1 [shape = 'u32[72,128]{1,0:T(1,128)}', space=vmem, size = 0x9000, scoped, tag = 'internal scratch']
  #allocation2 [shape = 'f32[1,1]{1,0:T(1,128)S(1)}', space=vmem, size = 0x200, scoped, tag = 'scoped memory for discriminator_forward.11']
  %s0 = inlined_call_operand.vmem [shape: bf16[512,64], index: 0, kind: input, shape index: {}]
  %s1 = inlined_call_operand.vmem [shape: f32[1,64], index: 1, kind: input, shape index: {}]
  %s2 = inlined_call_operand.vmem [shape: f32[1,64], index: 2, kind: input, shape index: {}]
  %s3 = inlined_call_operand.vmem [shape: f32[1,64], index: 3, kind: input, shape index: {}]
  %s4 = inlined_call_operand.<no memory space> [shape: f32[1,1], index: 4, kind: input, shape index: {}]
  %s5 = inlined_call_operand.vmem [shape: f32[512,1], index: 5, kind: output, shape index: {}]
  %s6 = sld [smem:[#allocation0]]
  $region30: #{discriminator_forward.11} parent=0
    _
  %s8 = ssub.s32 1, %s6
  %s9 = scalar_select 0, %s8, %s6
  %v10 = vstv %s4
  %11 = vst [vmem:[#allocation2] sm:$0x1] %v10
  // Predicated region
  $region2: #{discriminator_forward.11} parent=0 // pred_check
    _
  $region3: #{discriminator_forward.11} parent=0 // pred_check_branch
    %13 = sbr.rel (0) target = $region5
  $region4: #{discriminator_forward.11} parent=0 // pred_region
    _
  $region5: #{discriminator_forward.11} parent=0 // pred_fallthru
    _
  // Predicated region
  $region6: #{discriminator_forward.11} parent=0 // pred_check
    _
  $region7: #{discriminator_forward.11} parent=0 // pred_check_branch
    %15 = sbr.rel (0) target = $region9
  $region8: #{discriminator_forward.11} parent=0 // pred_region
    _
  $region9: #{discriminator_forward.11} parent=0 // pred_fallthru
    _
  // Predicated region
  $region10: #{discriminator_forward.11} parent=0 // pred_check
    _
  $region11: #{discriminator_forward.11} parent=0 // pred_check_branch
    %17 = sbr.rel (0) target = $region13
  $region12: #{discriminator_forward.11} parent=0 // pred_region
    _
  $region13: #{discriminator_forward.11} parent=0 // pred_fallthru
    _
  // Predicated region
  $region14: #{discriminator_forward.11} parent=0 // pred_check
    _
  $region15: #{discriminator_forward.11} parent=0 // pred_check_branch
    %19 = sbr.rel (0) target = $region17
  $region16: #{discriminator_forward.11} parent=0 // pred_region
    _
  $region17: #{discriminator_forward.11} parent=0 // pred_fallthru
    _
  // Predicated region
  $region18: #{discriminator_forward.11} parent=0 // pred_check
    _
  $region19: #{discriminator_forward.11} parent=0 // pred_check_branch
    %21 = sbr.rel (0) target = $region21
  $region20: #{discriminator_forward.11} parent=0 // pred_region
    _
  $region21: #{discriminator_forward.11} parent=0 // pred_fallthru
    _
  %v22 = vld [vmem:[%s0] sm:$0xf]
  %v23 = vld [vmem:[%s0 + $0x4] sm:$0xf]
  %v24 = vld [vmem:[%s0 + $0x8] sm:$0xf]
  %v25 = vld [vmem:[%s0 + $0xc] sm:$0xf]
  %v26 = vld [vmem:[%s0 + $0x10] sm:$0xf]
  %v27 = vld [vmem:[%s0 + $0x14] sm:$0xf]
  %v28 = vld [vmem:[%s0 + $0x18] sm:$0xf]
  %v29 = vld [vmem:[%s0 + $0x1c] sm:$0xf]
  %v30 = vld [vmem:[%s0 + $0x20] sm:$0xf]
  %v31 = vld [vmem:[%s0 + $0x24] sm:$0xf]
  %v32 = vld [vmem:[%s0 + $0x28] sm:$0xf]
  %v33 = vld [vmem:[%s0 + $0x2c] sm:$0xf]
  %v34 = vld [vmem:[%s0 + $0x30] sm:$0xf]
  %v35 = vld [vmem:[%s0 + $0x34] sm:$0xf]
  %v36 = vld [vmem:[%s0 + $0x38] sm:$0xf]
  %v37 = vld [vmem:[%s0 + $0x3c] sm:$0xf]
  %v38 = vld [vmem:[%s0 + $0x40] sm:$0xf]
  %v39 = vld [vmem:[%s0 + $0x44] sm:$0xf]
  %v40 = vld [vmem:[%s0 + $0x48] sm:$0xf]
  %v41 = vld [vmem:[%s0 + $0x4c] sm:$0xf]
  %v42 = vld [vmem:[%s0 + $0x50] sm:$0xf]
  %v43 = vld [vmem:[%s0 + $0x54] sm:$0xf]
  %v44 = vld [vmem:[%s0 + $0x58] sm:$0xf]
  %v45 = vld [vmem:[%s0 + $0x5c] sm:$0xf]
  %v46 = vld [vmem:[%s0 + $0x60] sm:$0xf]
  %v47 = vld [vmem:[%s0 + $0x64] sm:$0xf]
  %v48 = vld [vmem:[%s0 + $0x68] sm:$0xf]
  %v49 = vld [vmem:[%s0 + $0x6c] sm:$0xf]
  %v50 = vld [vmem:[%s0 + $0x70] sm:$0xf]
  %v51 = vld [vmem:[%s0 + $0x74] sm:$0xf]
  %v52 = vld [vmem:[%s0 + $0x78] sm:$0xf]
  %v53 = vld [vmem:[%s0 + $0x7c] sm:$0xf]
  %v54 = vld [vmem:[%s0 + $0x80] sm:$0xf]
  %v55 = vld [vmem:[%s0 + $0x84] sm:$0xf]
  %v56 = vld [vmem:[%s0 + $0x88] sm:$0xf]
  %v57 = vld [vmem:[%s0 + $0x8c] sm:$0xf]
  %v58 = vld [vmem:[%s0 + $0x90] sm:$0xf]
  %v59 = vld [vmem:[%s0 + $0x94] sm:$0xf]
  %v60 = vld [vmem:[%s0 + $0x98] sm:$0xf]
  %v61 = vld [vmem:[%s0 + $0x9c] sm:$0xf]
  %v62 = vld [vmem:[%s0 + $0xa0] sm:$0xf]
  %v63 = vld [vmem:[%s0 + $0xa4] sm:$0xf]
  %v64 = vld [vmem:[%s0 + $0xa8] sm:$0xf]
  %v65 = vld [vmem:[%s0 + $0xac] sm:$0xf]
  %v66 = vld [vmem:[%s0 + $0xb0] sm:$0xf]
  %v67 = vld [vmem:[%s0 + $0xb4] sm:$0xf]
  %v68 = vld [vmem:[%s0 + $0xb8] sm:$0xf]
  %v69 = vld [vmem:[%s0 + $0xbc] sm:$0xf]
  %v70 = vld [vmem:[%s0 + $0xc0] sm:$0xf]
  %v71 = vld [vmem:[%s0 + $0xc4] sm:$0xf]
  %v72 = vld [vmem:[%s0 + $0xc8] sm:$0xf]
  %v73 = vld [vmem:[%s0 + $0xcc] sm:$0xf]
  %v74 = vld [vmem:[%s0 + $0xd0] sm:$0xf]
  %v75 = vld [vmem:[%s0 + $0xd4] sm:$0xf]
  %v76 = vld [vmem:[%s0 + $0xd8] sm:$0xf]
  %v77 = vld [vmem:[%s0 + $0xdc] sm:$0xf]
  %v78 = vld [vmem:[%s0 + $0xe0] sm:$0xf]
  %v79 = vld [vmem:[%s0 + $0xe4] sm:$0xf]
  %v80 = vld [vmem:[%s0 + $0xe8] sm:$0xf]
  %v81 = vld [vmem:[%s0 + $0xec] sm:$0xf]
  %v82 = vld [vmem:[%s0 + $0xf0] sm:$0xf]
  %v83 = vld [vmem:[%s0 + $0xf4] sm:$0xf]
  %v84 = vld [vmem:[%s0 + $0xf8] sm:$0xf]
  %v85 = vld [vmem:[%s0 + $0xfc] sm:$0xf]
  %v86 = vunpack.c.l.bf16 %v22
  %v87 = vunpack.c.l.bf16 %v23
  %v88 = vunpack.c.l.bf16 %v24
  %v89 = vunpack.c.l.bf16 %v25
  %v90 = vunpack.c.l.bf16 %v26
  %v91 = vunpack.c.l.bf16 %v27
  %v92 = vunpack.c.l.bf16 %v28
  %v93 = vunpack.c.l.bf16 %v29
  %v94 = vunpack.c.l.bf16 %v30
  %v95 = vunpack.c.l.bf16 %v31
  %v96 = vunpack.c.l.bf16 %v32
  %v97 = vunpack.c.l.bf16 %v33
  %v98 = vunpack.c.l.bf16 %v34
  %v99 = vunpack.c.l.bf16 %v35
  %v100 = vunpack.c.l.bf16 %v36
  %v101 = vunpack.c.l.bf16 %v37
  %v102 = vunpack.c.l.bf16 %v38
  %v103 = vunpack.c.l.bf16 %v39
  %v104 = vunpack.c.l.bf16 %v40
  %v105 = vunpack.c.l.bf16 %v41
  %v106 = vunpack.c.l.bf16 %v42
  %v107 = vunpack.c.l.bf16 %v43
  %v108 = vunpack.c.l.bf16 %v44
  %v109 = vunpack.c.l.bf16 %v45
  %v110 = vunpack.c.l.bf16 %v46
  %v111 = vunpack.c.l.bf16 %v47
  %v112 = vunpack.c.l.bf16 %v48
  %v113 = vunpack.c.l.bf16 %v49
  %v114 = vunpack.c.l.bf16 %v50
  %v115 = vunpack.c.l.bf16 %v51
  %v116 = vunpack.c.l.bf16 %v52
  %v117 = vunpack.c.l.bf16 %v53
  %v118 = vunpack.c.l.bf16 %v54
  %v119 = vunpack.c.l.bf16 %v55
  %v120 = vunpack.c.l.bf16 %v56
  %v121 = vunpack.c.l.bf16 %v57
  %v122 = vunpack.c.l.bf16 %v58
  %v123 = vunpack.c.l.bf16 %v59
  %v124 = vunpack.c.l.bf16 %v60
  %v125 = vunpack.c.l.bf16 %v61
  %v126 = vunpack.c.l.bf16 %v62
  %v127 = vunpack.c.l.bf16 %v63
  %v128 = vunpack.c.l.bf16 %v64
  %v129 = vunpack.c.l.bf16 %v65
  %v130 = vunpack.c.l.bf16 %v66
  %v131 = vunpack.c.l.bf16 %v67
  %v132 = vunpack.c.l.bf16 %v68
  %v133 = vunpack.c.l.bf16 %v69
  %v134 = vunpack.c.l.bf16 %v70
  %v135 = vunpack.c.l.bf16 %v71
  %v136 = vunpack.c.l.bf16 %v72
  %v137 = vunpack.c.l.bf16 %v73
  %v138 = vunpack.c.l.bf16 %v74
  %v139 = vunpack.c.l.bf16 %v75
  %v140 = vunpack.c.l.bf16 %v76
  %v141 = vunpack.c.l.bf16 %v77
  %v142 = vunpack.c.l.bf16 %v78
  %v143 = vunpack.c.l.bf16 %v79
  %v144 = vunpack.c.l.bf16 %v80
  %v145 = vunpack.c.l.bf16 %v81
  %v146 = vunpack.c.l.bf16 %v82
  %v147 = vunpack.c.l.bf16 %v83
  %v148 = vunpack.c.l.bf16 %v84
  %v149 = vunpack.c.l.bf16 %v85
  %v150 = vld [vmem:[%s1] sm:$0x1]
  %v152 = vperm.slane %v150, 0
  %v154 = vmul.f32 %v86, %v152
  %v155 = vmul.f32 %v87, %v152
  %v156 = vmul.f32 %v88, %v152
  %v157 = vmul.f32 %v89, %v152
  %v158 = vmul.f32 %v90, %v152
  %v159 = vmul.f32 %v91, %v152
  %v160 = vmul.f32 %v92, %v152
  %v161 = vmul.f32 %v93, %v152
  %v162 = vmul.f32 %v94, %v152
  %v163 = vmul.f32 %v95, %v152
  %v164 = vmul.f32 %v96, %v152
  %v165 = vmul.f32 %v97, %v152
  %v166 = vmul.f32 %v98, %v152
  %v167 = vmul.f32 %v99, %v152
  %v168 = vmul.f32 %v100, %v152
  %v169 = vmul.f32 %v101, %v152
  %v170 = vmul.f32 %v102, %v152
  %v171 = vmul.f32 %v103, %v152
  %v172 = vmul.f32 %v104, %v152
  %v173 = vmul.f32 %v105, %v152
  %v174 = vmul.f32 %v106, %v152
  %v175 = vmul.f32 %v107, %v152
  %v176 = vmul.f32 %v108, %v152
  %v177 = vmul.f32 %v109, %v152
  %v178 = vmul.f32 %v110, %v152
  %v179 = vmul.f32 %v111, %v152
  %v180 = vmul.f32 %v112, %v152
  %v181 = vmul.f32 %v113, %v152
  %v182 = vmul.f32 %v114, %v152
  %v183 = vmul.f32 %v115, %v152
  %v184 = vmul.f32 %v116, %v152
  %v185 = vmul.f32 %v117, %v152
  %v186 = vmul.f32 %v118, %v152
  %v187 = vmul.f32 %v119, %v152
  %v188 = vmul.f32 %v120, %v152
  %v189 = vmul.f32 %v121, %v152
  %v190 = vmul.f32 %v122, %v152
  %v191 = vmul.f32 %v123, %v152
  %v192 = vmul.f32 %v124, %v152
  %v193 = vmul.f32 %v125, %v152
  %v194 = vmul.f32 %v126, %v152
  %v195 = vmul.f32 %v127, %v152
  %v196 = vmul.f32 %v128, %v152
  %v197 = vmul.f32 %v129, %v152
  %v198 = vmul.f32 %v130, %v152
  %v199 = vmul.f32 %v131, %v152
  %v200 = vmul.f32 %v132, %v152
  %v201 = vmul.f32 %v133, %v152
  %v202 = vmul.f32 %v134, %v152
  %v203 = vmul.f32 %v135, %v152
  %v204 = vmul.f32 %v136, %v152
  %v205 = vmul.f32 %v137, %v152
  %v206 = vmul.f32 %v138, %v152
  %v207 = vmul.f32 %v139, %v152
  %v208 = vmul.f32 %v140, %v152
  %v209 = vmul.f32 %v141, %v152
  %v210 = vmul.f32 %v142, %v152
  %v211 = vmul.f32 %v143, %v152
  %v212 = vmul.f32 %v144, %v152
  %v213 = vmul.f32 %v145, %v152
  %v214 = vmul.f32 %v146, %v152
  %v215 = vmul.f32 %v147, %v152
  %v216 = vmul.f32 %v148, %v152
  %v217 = vmul.f32 %v149, %v152
  %v218 = vld [vmem:[%s2] sm:$0x1]
  %v220 = vperm.slane %v218, 0
  %v222 = vadd.f32 %v154, %v220
  %v223 = vadd.f32 %v155, %v220
  %v224 = vadd.f32 %v156, %v220
  %v225 = vadd.f32 %v157, %v220
  %v226 = vadd.f32 %v158, %v220
  %v227 = vadd.f32 %v159, %v220
  %v228 = vadd.f32 %v160, %v220
  %v229 = vadd.f32 %v161, %v220
  %v230 = vadd.f32 %v162, %v220
  %v231 = vadd.f32 %v163, %v220
  %v232 = vadd.f32 %v164, %v220
  %v233 = vadd.f32 %v165, %v220
  %v234 = vadd.f32 %v166, %v220
  %v235 = vadd.f32 %v167, %v220
  %v236 = vadd.f32 %v168, %v220
  %v237 = vadd.f32 %v169, %v220
  %v238 = vadd.f32 %v170, %v220
  %v239 = vadd.f32 %v171, %v220
  %v240 = vadd.f32 %v172, %v220
  %v241 = vadd.f32 %v173, %v220
  %v242 = vadd.f32 %v174, %v220
  %v243 = vadd.f32 %v175, %v220
  %v244 = vadd.f32 %v176, %v220
  %v245 = vadd.f32 %v177, %v220
  %v246 = vadd.f32 %v178, %v220
  %v247 = vadd.f32 %v179, %v220
  %v248 = vadd.f32 %v180, %v220
  %v249 = vadd.f32 %v181, %v220
  %v250 = vadd.f32 %v182, %v220
  %v251 = vadd.f32 %v183, %v220
  %v252 = vadd.f32 %v184, %v220
  %v253 = vadd.f32 %v185, %v220
  %v254 = vadd.f32 %v186, %v220
  %v255 = vadd.f32 %v187, %v220
  %v256 = vadd.f32 %v188, %v220
  %v257 = vadd.f32 %v189, %v220
  %v258 = vadd.f32 %v190, %v220
  %v259 = vadd.f32 %v191, %v220
  %v260 = vadd.f32 %v192, %v220
  %v261 = vadd.f32 %v193, %v220
  %v262 = vadd.f32 %v194, %v220
  %v263 = vadd.f32 %v195, %v220
  %v264 = vadd.f32 %v196, %v220
  %v265 = vadd.f32 %v197, %v220
  %v266 = vadd.f32 %v198, %v220
  %v267 = vadd.f32 %v199, %v220
  %v268 = vadd.f32 %v200, %v220
  %v269 = vadd.f32 %v201, %v220
  %v270 = vadd.f32 %v202, %v220
  %v271 = vadd.f32 %v203, %v220
  %v272 = vadd.f32 %v204, %v220
  %v273 = vadd.f32 %v205, %v220
  %v274 = vadd.f32 %v206, %v220
  %v275 = vadd.f32 %v207, %v220
  %v276 = vadd.f32 %v208, %v220
  %v277 = vadd.f32 %v209, %v220
  %v278 = vadd.f32 %v210, %v220
  %v279 = vadd.f32 %v211, %v220
  %v280 = vadd.f32 %v212, %v220
  %v281 = vadd.f32 %v213, %v220
  %v282 = vadd.f32 %v214, %v220
  %v283 = vadd.f32 %v215, %v220
  %v284 = vadd.f32 %v216, %v220
  %v285 = vadd.f32 %v217, %v220
  %v286 = vmax.f32 %v222, 0.0
  %v287 = vmax.f32 %v223, 0.0
  %v288 = vmax.f32 %v224, 0.0
  %v289 = vmax.f32 %v225, 0.0
  %v290 = vmax.f32 %v226, 0.0
  %v291 = vmax.f32 %v227, 0.0
  %v292 = vmax.f32 %v228, 0.0
  %v293 = vmax.f32 %v229, 0.0
  %v294 = vmax.f32 %v230, 0.0
  %v295 = vmax.f32 %v231, 0.0
  %v296 = vmax.f32 %v232, 0.0
  %v297 = vmax.f32 %v233, 0.0
  %v298 = vmax.f32 %v234, 0.0
  %v299 = vmax.f32 %v235, 0.0
  %v300 = vmax.f32 %v236, 0.0
  %v301 = vmax.f32 %v237, 0.0
  %v302 = vmax.f32 %v238, 0.0
  %v303 = vmax.f32 %v239, 0.0
  %v304 = vmax.f32 %v240, 0.0
  %v305 = vmax.f32 %v241, 0.0
  %v306 = vmax.f32 %v242, 0.0
  %v307 = vmax.f32 %v243, 0.0
  %v308 = vmax.f32 %v244, 0.0
  %v309 = vmax.f32 %v245, 0.0
  %v310 = vmax.f32 %v246, 0.0
  %v311 = vmax.f32 %v247, 0.0
  %v312 = vmax.f32 %v248, 0.0
  %v313 = vmax.f32 %v249, 0.0
  %v314 = vmax.f32 %v250, 0.0
  %v315 = vmax.f32 %v251, 0.0
  %v316 = vmax.f32 %v252, 0.0
  %v317 = vmax.f32 %v253, 0.0
  %v318 = vmax.f32 %v254, 0.0
  %v319 = vmax.f32 %v255, 0.0
  %v320 = vmax.f32 %v256, 0.0
  %v321 = vmax.f32 %v257, 0.0
  %v322 = vmax.f32 %v258, 0.0
  %v323 = vmax.f32 %v259, 0.0
  %v324 = vmax.f32 %v260, 0.0
  %v325 = vmax.f32 %v261, 0.0
  %v326 = vmax.f32 %v262, 0.0
  %v327 = vmax.f32 %v263, 0.0
  %v328 = vmax.f32 %v264, 0.0
  %v329 = vmax.f32 %v265, 0.0
  %v330 = vmax.f32 %v266, 0.0
  %v331 = vmax.f32 %v267, 0.0
  %v332 = vmax.f32 %v268, 0.0
  %v333 = vmax.f32 %v269, 0.0
  %v334 = vmax.f32 %v270, 0.0
  %v335 = vmax.f32 %v271, 0.0
  %v336 = vmax.f32 %v272, 0.0
  %v337 = vmax.f32 %v273, 0.0
  %v338 = vmax.f32 %v274, 0.0
  %v339 = vmax.f32 %v275, 0.0
  %v340 = vmax.f32 %v276, 0.0
  %v341 = vmax.f32 %v277, 0.0
  %v342 = vmax.f32 %v278, 0.0
  %v343 = vmax.f32 %v279, 0.0
  %v344 = vmax.f32 %v280, 0.0
  %v345 = vmax.f32 %v281, 0.0
  %v346 = vmax.f32 %v282, 0.0
  %v347 = vmax.f32 %v283, 0.0
  %v348 = vmax.f32 %v284, 0.0
  %v349 = vmax.f32 %v285, 0.0
  %v350 = vld [vmem:[%s3] sm:$0x1]
  %v352 = vperm.slane %v350, 0
  %v354 = vmul.f32 %v286, %v352
  %v355 = vmul.f32 %v287, %v352
  %v356 = vmul.f32 %v288, %v352
  %v357 = vmul.f32 %v289, %v352
  %v358 = vmul.f32 %v290, %v352
  %v359 = vmul.f32 %v291, %v352
  %v360 = vmul.f32 %v292, %v352
  %v361 = vmul.f32 %v293, %v352
  %v362 = vmul.f32 %v294, %v352
  %v363 = vmul.f32 %v295, %v352
  %v364 = vmul.f32 %v296, %v352
  %v365 = vmul.f32 %v297, %v352
  %v366 = vmul.f32 %v298, %v352
  %v367 = vmul.f32 %v299, %v352
  %v368 = vmul.f32 %v300, %v352
  %v369 = vmul.f32 %v301, %v352
  %v370 = vmul.f32 %v302, %v352
  %v371 = vmul.f32 %v303, %v352
  %v372 = vmul.f32 %v304, %v352
  %v373 = vmul.f32 %v305, %v352
  %v374 = vmul.f32 %v306, %v352
  %v375 = vmul.f32 %v307, %v352
  %v376 = vmul.f32 %v308, %v352
  %v377 = vmul.f32 %v309, %v352
  %v378 = vmul.f32 %v310, %v352
  %v379 = vmul.f32 %v311, %v352
  %v380 = vmul.f32 %v312, %v352
  %v381 = vmul.f32 %v313, %v352
  %v382 = vmul.f32 %v314, %v352
  %v383 = vmul.f32 %v315, %v352
  %v384 = vmul.f32 %v316, %v352
  %v385 = vmul.f32 %v317, %v352
  %v386 = vmul.f32 %v318, %v352
  %v387 = vmul.f32 %v319, %v352
  %v388 = vmul.f32 %v320, %v352
  %v389 = vmul.f32 %v321, %v352
  %v390 = vmul.f32 %v322, %v352
  %v391 = vmul.f32 %v323, %v352
  %v392 = vmul.f32 %v324, %v352
  %v393 = vmul.f32 %v325, %v352
  %v394 = vmul.f32 %v326, %v352
  %v395 = vmul.f32 %v327, %v352
  %v396 = vmul.f32 %v328, %v352
  %v397 = vmul.f32 %v329, %v352
  %v398 = vmul.f32 %v330, %v352
  %v399 = vmul.f32 %v331, %v352
  %v400 = vmul.f32 %v332, %v352
  %v401 = vmul.f32 %v333, %v352
  %v402 = vmul.f32 %v334, %v352
  %v403 = vmul.f32 %v335, %v352
  %v404 = vmul.f32 %v336, %v352
  %v405 = vmul.f32 %v337, %v352
  %v406 = vmul.f32 %v338, %v352
  %v407 = vmul.f32 %v339, %v352
  %v408 = vmul.f32 %v340, %v352
  %v409 = vmul.f32 %v341, %v352
  %v410 = vmul.f32 %v342, %v352
  %v411 = vmul.f32 %v343, %v352
  %v412 = vmul.f32 %v344, %v352
  %v413 = vmul.f32 %v345, %v352
  %v414 = vmul.f32 %v346, %v352
  %v415 = vmul.f32 %v347, %v352
  %v416 = vmul.f32 %v348, %v352
  %v417 = vmul.f32 %v349, %v352
  %vm418 = vcmask 523264
  %v419 = vsel %vm418, %v354, 0.0
  %420 = vadd.xlane.f32.xlu0 %v419
  %v421 = vpop.xlane.xlu0 %420
  %v422 = vsel %vm418, %v355, 0.0
  %423 = vadd.xlane.f32.xlu0 %v422
  %v424 = vpop.xlane.xlu0 %423
  %v425 = vsel %vm418, %v356, 0.0
  %426 = vadd.xlane.f32.xlu0 %v425
  %v427 = vpop.xlane.xlu0 %426
  %v428 = vsel %vm418, %v357, 0.0
  %429 = vadd.xlane.f32.xlu0 %v428
  %v430 = vpop.xlane.xlu0 %429
  %v431 = vsel %vm418, %v358, 0.0
  %432 = vadd.xlane.f32.xlu0 %v431
  %v433 = vpop.xlane.xlu0 %432
  %v434 = vsel %vm418, %v359, 0.0
  %435 = vadd.xlane.f32.xlu0 %v434
  %v436 = vpop.xlane.xlu0 %435
  %v437 = vsel %vm418, %v360, 0.0
  %438 = vadd.xlane.f32.xlu0 %v437
  %v439 = vpop.xlane.xlu0 %438
  %v440 = vsel %vm418, %v361, 0.0
  %441 = vadd.xlane.f32.xlu0 %v440
  %v442 = vpop.xlane.xlu0 %441
  %v443 = vsel %vm418, %v362, 0.0
  %444 = vadd.xlane.f32.xlu0 %v443
  %v445 = vpop.xlane.xlu0 %444
  %v446 = vsel %vm418, %v363, 0.0
  %447 = vadd.xlane.f32.xlu0 %v446
  %v448 = vpop.xlane.xlu0 %447
  %v449 = vsel %vm418, %v364, 0.0
  %450 = vadd.xlane.f32.xlu0 %v449
  %v451 = vpop.xlane.xlu0 %450
  %v452 = vsel %vm418, %v365, 0.0
  %453 = vadd.xlane.f32.xlu0 %v452
  %v454 = vpop.xlane.xlu0 %453
  %v455 = vsel %vm418, %v366, 0.0
  %456 = vadd.xlane.f32.xlu0 %v455
  %v457 = vpop.xlane.xlu0 %456
  %v458 = vsel %vm418, %v367, 0.0
  %459 = vadd.xlane.f32.xlu0 %v458
  %v460 = vpop.xlane.xlu0 %459
  %v461 = vsel %vm418, %v368, 0.0
  %462 = vadd.xlane.f32.xlu0 %v461
  %v463 = vpop.xlane.xlu0 %462
  %v464 = vsel %vm418, %v369, 0.0
  %465 = vadd.xlane.f32.xlu0 %v464
  %v466 = vpop.xlane.xlu0 %465
  %v467 = vsel %vm418, %v370, 0.0
  %468 = vadd.xlane.f32.xlu0 %v467
  %v469 = vpop.xlane.xlu0 %468
  %v470 = vsel %vm418, %v371, 0.0
  %471 = vadd.xlane.f32.xlu0 %v470
  %v472 = vpop.xlane.xlu0 %471
  %v473 = vsel %vm418, %v372, 0.0
  %474 = vadd.xlane.f32.xlu0 %v473
  %v475 = vpop.xlane.xlu0 %474
  %v476 = vsel %vm418, %v373, 0.0
  %477 = vadd.xlane.f32.xlu0 %v476
  %v478 = vpop.xlane.xlu0 %477
  %v479 = vsel %vm418, %v374, 0.0
  %480 = vadd.xlane.f32.xlu0 %v479
  %v481 = vpop.xlane.xlu0 %480
  %v482 = vsel %vm418, %v375, 0.0
  %483 = vadd.xlane.f32.xlu0 %v482
  %v484 = vpop.xlane.xlu0 %483
  %v485 = vsel %vm418, %v376, 0.0
  %486 = vadd.xlane.f32.xlu0 %v485
  %v487 = vpop.xlane.xlu0 %486
  %v488 = vsel %vm418, %v377, 0.0
  %489 = vadd.xlane.f32.xlu0 %v488
  %v490 = vpop.xlane.xlu0 %489
  %v491 = vsel %vm418, %v378, 0.0
  %492 = vadd.xlane.f32.xlu0 %v491
  %v493 = vpop.xlane.xlu0 %492
  %v494 = vsel %vm418, %v379, 0.0
  %495 = vadd.xlane.f32.xlu0 %v494
  %v496 = vpop.xlane.xlu0 %495
  %v497 = vsel %vm418, %v380, 0.0
  %498 = vadd.xlane.f32.xlu0 %v497
  %v499 = vpop.xlane.xlu0 %498
  %v500 = vsel %vm418, %v381, 0.0
  %501 = vadd.xlane.f32.xlu0 %v500
  %v502 = vpop.xlane.xlu0 %501
  %v503 = vsel %vm418, %v382, 0.0
  %504 = vadd.xlane.f32.xlu0 %v503
  %v505 = vpop.xlane.xlu0 %504
  %v506 = vsel %vm418, %v383, 0.0
  %507 = vadd.xlane.f32.xlu0 %v506
  %v508 = vpop.xlane.xlu0 %507
  %v509 = vsel %vm418, %v384, 0.0
  %510 = vadd.xlane.f32.xlu0 %v509
  %v511 = vpop.xlane.xlu0 %510
  %v512 = vsel %vm418, %v385, 0.0
  %513 = vadd.xlane.f32.xlu0 %v512
  %v514 = vpop.xlane.xlu0 %513
  %v515 = vsel %vm418, %v386, 0.0
  %516 = vadd.xlane.f32.xlu0 %v515
  %v517 = vpop.xlane.xlu0 %516
  %v518 = vsel %vm418, %v387, 0.0
  %519 = vadd.xlane.f32.xlu0 %v518
  %v520 = vpop.xlane.xlu0 %519
  %v521 = vsel %vm418, %v388, 0.0
  %522 = vadd.xlane.f32.xlu0 %v521
  %v523 = vpop.xlane.xlu0 %522
  %v524 = vsel %vm418, %v389, 0.0
  %525 = vadd.xlane.f32.xlu0 %v524
  %v526 = vpop.xlane.xlu0 %525
  %v527 = vsel %vm418, %v390, 0.0
  %528 = vadd.xlane.f32.xlu0 %v527
  %v529 = vpop.xlane.xlu0 %528
  %v530 = vsel %vm418, %v391, 0.0
  %531 = vadd.xlane.f32.xlu0 %v530
  %v532 = vpop.xlane.xlu0 %531
  %v533 = vsel %vm418, %v392, 0.0
  %534 = vadd.xlane.f32.xlu0 %v533
  %v535 = vpop.xlane.xlu0 %534
  %v536 = vsel %vm418, %v393, 0.0
  %537 = vadd.xlane.f32.xlu0 %v536
  %v538 = vpop.xlane.xlu0 %537
  %v539 = vsel %vm418, %v394, 0.0
  %540 = vadd.xlane.f32.xlu0 %v539
  %v541 = vpop.xlane.xlu0 %540
  %v542 = vsel %vm418, %v395, 0.0
  %543 = vadd.xlane.f32.xlu0 %v542
  %v544 = vpop.xlane.xlu0 %543
  %v545 = vsel %vm418, %v396, 0.0
  %546 = vadd.xlane.f32.xlu0 %v545
  %v547 = vpop.xlane.xlu0 %546
  %v548 = vsel %vm418, %v397, 0.0
  %549 = vadd.xlane.f32.xlu0 %v548
  %v550 = vpop.xlane.xlu0 %549
  %v551 = vsel %vm418, %v398, 0.0
  %552 = vadd.xlane.f32.xlu0 %v551
  %v553 = vpop.xlane.xlu0 %552
  %v554 = vsel %vm418, %v399, 0.0
  %555 = vadd.xlane.f32.xlu0 %v554
  %v556 = vpop.xlane.xlu0 %555
  %v557 = vsel %vm418, %v400, 0.0
  %558 = vadd.xlane.f32.xlu0 %v557
  %v559 = vpop.xlane.xlu0 %558
  %v560 = vsel %vm418, %v401, 0.0
  %561 = vadd.xlane.f32.xlu0 %v560
  %v562 = vpop.xlane.xlu0 %561
  %v563 = vsel %vm418, %v402, 0.0
  %564 = vadd.xlane.f32.xlu0 %v563
  %v565 = vpop.xlane.xlu0 %564
  %v566 = vsel %vm418, %v403, 0.0
  %567 = vadd.xlane.f32.xlu0 %v566
  %v568 = vpop.xlane.xlu0 %567
  %v569 = vsel %vm418, %v404, 0.0
  %570 = vadd.xlane.f32.xlu0 %v569
  %v571 = vpop.xlane.xlu0 %570
  %v572 = vsel %vm418, %v405, 0.0
  %573 = vadd.xlane.f32.xlu0 %v572
  %v574 = vpop.xlane.xlu0 %573
  %v575 = vsel %vm418, %v406, 0.0
  %576 = vadd.xlane.f32.xlu0 %v575
  %v577 = vpop.xlane.xlu0 %576
  %v578 = vsel %vm418, %v407, 0.0
  %579 = vadd.xlane.f32.xlu0 %v578
  %v580 = vpop.xlane.xlu0 %579
  %v581 = vsel %vm418, %v408, 0.0
  %582 = vadd.xlane.f32.xlu0 %v581
  %v583 = vpop.xlane.xlu0 %582
  %v584 = vsel %vm418, %v409, 0.0
  %585 = vadd.xlane.f32.xlu0 %v584
  %v586 = vpop.xlane.xlu0 %585
  %v587 = vsel %vm418, %v410, 0.0
  %588 = vadd.xlane.f32.xlu0 %v587
  %v589 = vpop.xlane.xlu0 %588
  %v590 = vsel %vm418, %v411, 0.0
  %591 = vadd.xlane.f32.xlu0 %v590
  %v592 = vpop.xlane.xlu0 %591
  %v593 = vsel %vm418, %v412, 0.0
  %594 = vadd.xlane.f32.xlu0 %v593
  %v595 = vpop.xlane.xlu0 %594
  %v596 = vsel %vm418, %v413, 0.0
  %597 = vadd.xlane.f32.xlu0 %v596
  %v598 = vpop.xlane.xlu0 %597
  %v599 = vsel %vm418, %v414, 0.0
  %600 = vadd.xlane.f32.xlu0 %v599
  %v601 = vpop.xlane.xlu0 %600
  %v602 = vsel %vm418, %v415, 0.0
  %603 = vadd.xlane.f32.xlu0 %v602
  %v604 = vpop.xlane.xlu0 %603
  %v605 = vsel %vm418, %v416, 0.0
  %606 = vadd.xlane.f32.xlu0 %v605
  %v607 = vpop.xlane.xlu0 %606
  %v608 = vsel %vm418, %v417, 0.0
  %609 = vadd.xlane.f32.xlu0 %v608
  %v610 = vpop.xlane.xlu0 %609
  %v611 = vld [vmem:[#allocation2] sm:$0x1]
  %v613 = vperm.slane %v611, 0
  %v615 = vadd.f32 %v421, %v613
  %v616 = vadd.f32 %v424, %v613
  %v617 = vadd.f32 %v427, %v613
  %v618 = vadd.f32 %v430, %v613
  %v619 = vadd.f32 %v433, %v613
  %v620 = vadd.f32 %v436, %v613
  %v621 = vadd.f32 %v439, %v613
  %v622 = vadd.f32 %v442, %v613
  %v623 = vadd.f32 %v445, %v613
  %v624 = vadd.f32 %v448, %v613
  %v625 = vadd.f32 %v451, %v613
  %v626 = vadd.f32 %v454, %v613
  %v627 = vadd.f32 %v457, %v613
  %v628 = vadd.f32 %v460, %v613
  %v629 = vadd.f32 %v463, %v613
  %v630 = vadd.f32 %v466, %v613
  %v631 = vadd.f32 %v469, %v613
  %v632 = vadd.f32 %v472, %v613
  %v633 = vadd.f32 %v475, %v613
  %v634 = vadd.f32 %v478, %v613
  %v635 = vadd.f32 %v481, %v613
  %v636 = vadd.f32 %v484, %v613
  %v637 = vadd.f32 %v487, %v613
  %v638 = vadd.f32 %v490, %v613
  %v639 = vadd.f32 %v493, %v613
  %v640 = vadd.f32 %v496, %v613
  %v641 = vadd.f32 %v499, %v613
  %v642 = vadd.f32 %v502, %v613
  %v643 = vadd.f32 %v505, %v613
  %v644 = vadd.f32 %v508, %v613
  %v645 = vadd.f32 %v511, %v613
  %v646 = vadd.f32 %v514, %v613
  %v647 = vadd.f32 %v517, %v613
  %v648 = vadd.f32 %v520, %v613
  %v649 = vadd.f32 %v523, %v613
  %v650 = vadd.f32 %v526, %v613
  %v651 = vadd.f32 %v529, %v613
  %v652 = vadd.f32 %v532, %v613
  %v653 = vadd.f32 %v535, %v613
  %v654 = vadd.f32 %v538, %v613
  %v655 = vadd.f32 %v541, %v613
  %v656 = vadd.f32 %v544, %v613
  %v657 = vadd.f32 %v547, %v613
  %v658 = vadd.f32 %v550, %v613
  %v659 = vadd.f32 %v553, %v613
  %v660 = vadd.f32 %v556, %v613
  %v661 = vadd.f32 %v559, %v613
  %v662 = vadd.f32 %v562, %v613
  %v663 = vadd.f32 %v565, %v613
  %v664 = vadd.f32 %v568, %v613
  %v665 = vadd.f32 %v571, %v613
  %v666 = vadd.f32 %v574, %v613
  %v667 = vadd.f32 %v577, %v613
  %v668 = vadd.f32 %v580, %v613
  %v669 = vadd.f32 %v583, %v613
  %v670 = vadd.f32 %v586, %v613
  %v671 = vadd.f32 %v589, %v613
  %v672 = vadd.f32 %v592, %v613
  %v673 = vadd.f32 %v595, %v613
  %v674 = vadd.f32 %v598, %v613
  %v675 = vadd.f32 %v601, %v613
  %v676 = vadd.f32 %v604, %v613
  %v677 = vadd.f32 %v607, %v613
  %v678 = vadd.f32 %v610, %v613
  %v679 = vxor.u32 %v615, 2147483648
  %v680 = vxor.u32 %v616, 2147483648
  %v681 = vxor.u32 %v617, 2147483648
  %v682 = vxor.u32 %v618, 2147483648
  %v683 = vxor.u32 %v619, 2147483648
  %v684 = vxor.u32 %v620, 2147483648
  %v685 = vxor.u32 %v621, 2147483648
  %v686 = vxor.u32 %v622, 2147483648
  %v687 = vxor.u32 %v623, 2147483648
  %v688 = vxor.u32 %v624, 2147483648
  %v689 = vxor.u32 %v625, 2147483648
  %v690 = vxor.u32 %v626, 2147483648
  %v691 = vxor.u32 %v627, 2147483648
  %v692 = vxor.u32 %v628, 2147483648
  %v693 = vxor.u32 %v629, 2147483648
  %v694 = vxor.u32 %v630, 2147483648
  %v695 = vxor.u32 %v631, 2147483648
  %v696 = vxor.u32 %v632, 2147483648
  %v697 = vxor.u32 %v633, 2147483648
  %v698 = vxor.u32 %v634, 2147483648
  %v699 = vxor.u32 %v635, 2147483648
  %v700 = vxor.u32 %v636, 2147483648
  %v701 = vxor.u32 %v637, 2147483648
  %v702 = vxor.u32 %v638, 2147483648
  %v703 = vxor.u32 %v639, 2147483648
  %v704 = vxor.u32 %v640, 2147483648
  %v705 = vxor.u32 %v641, 2147483648
  %v706 = vxor.u32 %v642, 2147483648
  %v707 = vxor.u32 %v643, 2147483648
  %v708 = vxor.u32 %v644, 2147483648
  %v709 = vxor.u32 %v645, 2147483648
  %v710 = vxor.u32 %v646, 2147483648
  %v711 = vxor.u32 %v647, 2147483648
  %v712 = vxor.u32 %v648, 2147483648
  %v713 = vxor.u32 %v649, 2147483648
  %v714 = vxor.u32 %v650, 2147483648
  %v715 = vxor.u32 %v651, 2147483648
  %v716 = vxor.u32 %v652, 2147483648
  %v717 = vxor.u32 %v653, 2147483648
  %v718 = vxor.u32 %v654, 2147483648
  %v719 = vxor.u32 %v655, 2147483648
  %v720 = vxor.u32 %v656, 2147483648
  %v721 = vxor.u32 %v657, 2147483648
  %v722 = vxor.u32 %v658, 2147483648
  %v723 = vxor.u32 %v659, 2147483648
  %v724 = vxor.u32 %v660, 2147483648
  %v725 = vxor.u32 %v661, 2147483648
  %v726 = vxor.u32 %v662, 2147483648
  %v727 = vxor.u32 %v663, 2147483648
  %v728 = vxor.u32 %v664, 2147483648
  %v729 = vxor.u32 %v665, 2147483648
  %v730 = vxor.u32 %v666, 2147483648
  %v731 = vxor.u32 %v667, 2147483648
  %v732 = vxor.u32 %v668, 2147483648
  %v733 = vxor.u32 %v669, 2147483648
  %v734 = vxor.u32 %v670, 2147483648
  %v735 = vxor.u32 %v671, 2147483648
  %v736 = vxor.u32 %v672, 2147483648
  %v737 = vxor.u32 %v673, 2147483648
  %v738 = vxor.u32 %v674, 2147483648
  %v739 = vxor.u32 %v675, 2147483648
  %v740 = vxor.u32 %v676, 2147483648
  %v741 = vxor.u32 %v677, 2147483648
  %v742 = vxor.u32 %v678, 2147483648
  %v743 = vmul.f32 %v679, 1.442695
  %v744 = vpow.pop %v743
  %v745 = vmul.f32 %v680, 1.442695
  %v746 = vpow.pop %v745
  %v747 = vmul.f32 %v681, 1.442695
  %v748 = vpow.pop %v747
  %v749 = vmul.f32 %v682, 1.442695
  %v750 = vpow.pop %v749
  %v751 = vmul.f32 %v683, 1.442695
  %v752 = vpow.pop %v751
  %v753 = vmul.f32 %v684, 1.442695
  %v754 = vpow.pop %v753
  %v755 = vmul.f32 %v685, 1.442695
  %v756 = vpow.pop %v755
  %v757 = vmul.f32 %v686, 1.442695
  %v758 = vpow.pop %v757
  %v759 = vmul.f32 %v687, 1.442695
  %v760 = vpow.pop %v759
  %v761 = vmul.f32 %v688, 1.442695
  %v762 = vpow.pop %v761
  %v763 = vmul.f32 %v689, 1.442695
  %v764 = vpow.pop %v763
  %v765 = vmul.f32 %v690, 1.442695
  %v766 = vpow.pop %v765
  %v767 = vmul.f32 %v691, 1.442695
  %v768 = vpow.pop %v767
  %v769 = vmul.f32 %v692, 1.442695
  %v770 = vpow.pop %v769
  %v771 = vmul.f32 %v693, 1.442695
  %v772 = vpow.pop %v771
  %v773 = vmul.f32 %v694, 1.442695
  %v774 = vpow.pop %v773
  %v775 = vmul.f32 %v695, 1.442695
  %v776 = vpow.pop %v775
  %v777 = vmul.f32 %v696, 1.442695
  %v778 = vpow.pop %v777
  %v779 = vmul.f32 %v697, 1.442695
  %v780 = vpow.pop %v779
  %v781 = vmul.f32 %v698, 1.442695
  %v782 = vpow.pop %v781
  %v783 = vmul.f32 %v699, 1.442695
  %v784 = vpow.pop %v783
  %v785 = vmul.f32 %v700, 1.442695
  %v786 = vpow.pop %v785
  %v787 = vmul.f32 %v701, 1.442695
  %v788 = vpow.pop %v787
  %v789 = vmul.f32 %v702, 1.442695
  %v790 = vpow.pop %v789
  %v791 = vmul.f32 %v703, 1.442695
  %v792 = vpow.pop %v791
  %v793 = vmul.f32 %v704, 1.442695
  %v794 = vpow.pop %v793
  %v795 = vmul.f32 %v705, 1.442695
  %v796 = vpow.pop %v795
  %v797 = vmul.f32 %v706, 1.442695
  %v798 = vpow.pop %v797
  %v799 = vmul.f32 %v707, 1.442695
  %v800 = vpow.pop %v799
  %v801 = vmul.f32 %v708, 1.442695
  %v802 = vpow.pop %v801
  %v803 = vmul.f32 %v709, 1.442695
  %v804 = vpow.pop %v803
  %v805 = vmul.f32 %v710, 1.442695
  %v806 = vpow.pop %v805
  %v807 = vmul.f32 %v711, 1.442695
  %v808 = vpow.pop %v807
  %v809 = vmul.f32 %v712, 1.442695
  %v810 = vpow.pop %v809
  %v811 = vmul.f32 %v713, 1.442695
  %v812 = vpow.pop %v811
  %v813 = vmul.f32 %v714, 1.442695
  %v814 = vpow.pop %v813
  %v815 = vmul.f32 %v715, 1.442695
  %v816 = vpow.pop %v815
  %v817 = vmul.f32 %v716, 1.442695
  %v818 = vpow.pop %v817
  %v819 = vmul.f32 %v717, 1.442695
  %v820 = vpow.pop %v819
  %v821 = vmul.f32 %v718, 1.442695
  %v822 = vpow.pop %v821
  %v823 = vmul.f32 %v719, 1.442695
  %v824 = vpow.pop %v823
  %v825 = vmul.f32 %v720, 1.442695
  %v826 = vpow.pop %v825
  %v827 = vmul.f32 %v721, 1.442695
  %v828 = vpow.pop %v827
  %v829 = vmul.f32 %v722, 1.442695
  %v830 = vpow.pop %v829
  %v831 = vmul.f32 %v723, 1.442695
  %v832 = vpow.pop %v831
  %v833 = vmul.f32 %v724, 1.442695
  %v834 = vpow.pop %v833
  %v835 = vmul.f32 %v725, 1.442695
  %v836 = vpow.pop %v835
  %v837 = vmul.f32 %v726, 1.442695
  %v838 = vpow.pop %v837
  %v839 = vmul.f32 %v727, 1.442695
  %v840 = vpow.pop %v839
  %v841 = vmul.f32 %v728, 1.442695
  %v842 = vpow.pop %v841
  %v843 = vmul.f32 %v729, 1.442695
  %v844 = vpow.pop %v843
  %v845 = vmul.f32 %v730, 1.442695
  %v846 = vpow.pop %v845
  %v847 = vmul.f32 %v731, 1.442695
  %v848 = vpow.pop %v847
  %v849 = vmul.f32 %v732, 1.442695
  %v850 = vpow.pop %v849
  %v851 = vmul.f32 %v733, 1.442695
  %v852 = vpow.pop %v851
  %v853 = vmul.f32 %v734, 1.442695
  %v854 = vpow.pop %v853
  %v855 = vmul.f32 %v735, 1.442695
  %v856 = vpow.pop %v855
  %v857 = vmul.f32 %v736, 1.442695
  %v858 = vpow.pop %v857
  %v859 = vmul.f32 %v737, 1.442695
  %v860 = vpow.pop %v859
  %v861 = vmul.f32 %v738, 1.442695
  %v862 = vpow.pop %v861
  %v863 = vmul.f32 %v739, 1.442695
  %v864 = vpow.pop %v863
  %v865 = vmul.f32 %v740, 1.442695
  %v866 = vpow.pop %v865
  %v867 = vmul.f32 %v741, 1.442695
  %v868 = vpow.pop %v867
  %v869 = vmul.f32 %v742, 1.442695
  %v870 = vpow.pop %v869
  %v871 = vadd.f32 %v744, 1.0
  %v872 = vadd.f32 %v746, 1.0
  %v873 = vadd.f32 %v748, 1.0
  %v874 = vadd.f32 %v750, 1.0
  %v875 = vadd.f32 %v752, 1.0
  %v876 = vadd.f32 %v754, 1.0
  %v877 = vadd.f32 %v756, 1.0
  %v878 = vadd.f32 %v758, 1.0
  %v879 = vadd.f32 %v760, 1.0
  %v880 = vadd.f32 %v762, 1.0
  %v881 = vadd.f32 %v764, 1.0
  %v882 = vadd.f32 %v766, 1.0
  %v883 = vadd.f32 %v768, 1.0
  %v884 = vadd.f32 %v770, 1.0
  %v885 = vadd.f32 %v772, 1.0
  %v886 = vadd.f32 %v774, 1.0
  %v887 = vadd.f32 %v776, 1.0
  %v888 = vadd.f32 %v778, 1.0
  %v889 = vadd.f32 %v780, 1.0
  %v890 = vadd.f32 %v782, 1.0
  %v891 = vadd.f32 %v784, 1.0
  %v892 = vadd.f32 %v786, 1.0
  %v893 = vadd.f32 %v788, 1.0
  %v894 = vadd.f32 %v790, 1.0
  %v895 = vadd.f32 %v792, 1.0
  %v896 = vadd.f32 %v794, 1.0
  %v897 = vadd.f32 %v796, 1.0
  %v898 = vadd.f32 %v798, 1.0
  %v899 = vadd.f32 %v800, 1.0
  %v900 = vadd.f32 %v802, 1.0
  %v901 = vadd.f32 %v804, 1.0
  %v902 = vadd.f32 %v806, 1.0
  %v903 = vadd.f32 %v808, 1.0
  %v904 = vadd.f32 %v810, 1.0
  %v905 = vadd.f32 %v812, 1.0
  %v906 = vadd.f32 %v814, 1.0
  %v907 = vadd.f32 %v816, 1.0
  %v908 = vadd.f32 %v818, 1.0
  %v909 = vadd.f32 %v820, 1.0
  %v910 = vadd.f32 %v822, 1.0
  %v911 = vadd.f32 %v824, 1.0
  %v912 = vadd.f32 %v826, 1.0
  %v913 = vadd.f32 %v828, 1.0
  %v914 = vadd.f32 %v830, 1.0
  %v915 = vadd.f32 %v832, 1.0
  %v916 = vadd.f32 %v834, 1.0
  %v917 = vadd.f32 %v836, 1.0
  %v918 = vadd.f32 %v838, 1.0
  %v919 = vadd.f32 %v840, 1.0
  %v920 = vadd.f32 %v842, 1.0
  %v921 = vadd.f32 %v844, 1.0
  %v922 = vadd.f32 %v846, 1.0
  %v923 = vadd.f32 %v848, 1.0
  %v924 = vadd.f32 %v850, 1.0
  %v925 = vadd.f32 %v852, 1.0
  %v926 = vadd.f32 %v854, 1.0
  %v927 = vadd.f32 %v856, 1.0
  %v928 = vadd.f32 %v858, 1.0
  %v929 = vadd.f32 %v860, 1.0
  %v930 = vadd.f32 %v862, 1.0
  %v931 = vadd.f32 %v864, 1.0
  %v932 = vadd.f32 %v866, 1.0
  %v933 = vadd.f32 %v868, 1.0
  %v934 = vadd.f32 %v870, 1.0
  %v935 = vrcp.pop %v871
  %v936 = vmul.f32 %v871, %v935
  %v937 = vsub.f32 1.0, %v936
  %v938 = vmul.f32 %v935, %v937
  %v939 = vadd.f32 %v935, %v938
  %vm940 = vweird.f32 %v871
  %vm941 = vweird.f32 %v935
  %vm942 = vmor %vm940, %vm941
  %v943 = vsel %vm942, %v935, %v939
  %v944 = vand.u32 2147483647, %v871
  %vm945 = vcmp.eq.f32.partialorder %v944, 8.507059e+37
  %v946 = vand.u32 %v871, 2147483648
  %v947 = vor.u32 1.1754944e-38, %v946
  %v948 = vsel %vm945, %v947, %v943
  %v949 = vmul.f32 1.0, %v948
  %v950 = vrcp.pop %v872
  %v951 = vmul.f32 %v872, %v950
  %v952 = vsub.f32 1.0, %v951
  %v953 = vmul.f32 %v950, %v952
  %v954 = vadd.f32 %v950, %v953
  %vm955 = vweird.f32 %v872
  %vm956 = vweird.f32 %v950
  %vm957 = vmor %vm955, %vm956
  %v958 = vsel %vm957, %v950, %v954
  %v959 = vand.u32 2147483647, %v872
  %vm960 = vcmp.eq.f32.partialorder %v959, 8.507059e+37
  %v961 = vand.u32 %v872, 2147483648
  %v962 = vor.u32 1.1754944e-38, %v961
  %v963 = vsel %vm960, %v962, %v958
  %v964 = vmul.f32 1.0, %v963
  %v965 = vrcp.pop %v873
  %v966 = vmul.f32 %v873, %v965
  %v967 = vsub.f32 1.0, %v966
  %v968 = vmul.f32 %v965, %v967
  %v969 = vadd.f32 %v965, %v968
  %vm970 = vweird.f32 %v873
  %vm971 = vweird.f32 %v965
  %vm972 = vmor %vm970, %vm971
  %v973 = vsel %vm972, %v965, %v969
  %v974 = vand.u32 2147483647, %v873
  %vm975 = vcmp.eq.f32.partialorder %v974, 8.507059e+37
  %v976 = vand.u32 %v873, 2147483648
  %v977 = vor.u32 1.1754944e-38, %v976
  %v978 = vsel %vm975, %v977, %v973
  %v979 = vmul.f32 1.0, %v978
  %v980 = vrcp.pop %v874
  %v981 = vmul.f32 %v874, %v980
  %v982 = vsub.f32 1.0, %v981
  %v983 = vmul.f32 %v980, %v982
  %v984 = vadd.f32 %v980, %v983
  %vm985 = vweird.f32 %v874
  %vm986 = vweird.f32 %v980
  %vm987 = vmor %vm985, %vm986
  %v988 = vsel %vm987, %v980, %v984
  %v989 = vand.u32 2147483647, %v874
  %vm990 = vcmp.eq.f32.partialorder %v989, 8.507059e+37
  %v991 = vand.u32 %v874, 2147483648
  %v992 = vor.u32 1.1754944e-38, %v991
  %v993 = vsel %vm990, %v992, %v988
  %v994 = vmul.f32 1.0, %v993
  %v995 = vrcp.pop %v875
  %v996 = vmul.f32 %v875, %v995
  %v997 = vsub.f32 1.0, %v996
  %v998 = vmul.f32 %v995, %v997
  %v999 = vadd.f32 %v995, %v998
  %vm1000 = vweird.f32 %v875
  %vm1001 = vweird.f32 %v995
  %vm1002 = vmor %vm1000, %vm1001
  %v1003 = vsel %vm1002, %v995, %v999
  %v1004 = vand.u32 2147483647, %v875
  %vm1005 = vcmp.eq.f32.partialorder %v1004, 8.507059e+37
  %v1006 = vand.u32 %v875, 2147483648
  %v1007 = vor.u32 1.1754944e-38, %v1006
  %v1008 = vsel %vm1005, %v1007, %v1003
  %v1009 = vmul.f32 1.0, %v1008
  %v1010 = vrcp.pop %v876
  %v1011 = vmul.f32 %v876, %v1010
  %v1012 = vsub.f32 1.0, %v1011
  %v1013 = vmul.f32 %v1010, %v1012
  %v1014 = vadd.f32 %v1010, %v1013
  %vm1015 = vweird.f32 %v876
  %vm1016 = vweird.f32 %v1010
  %vm1017 = vmor %vm1015, %vm1016
  %v1018 = vsel %vm1017, %v1010, %v1014
  %v1019 = vand.u32 2147483647, %v876
  %vm1020 = vcmp.eq.f32.partialorder %v1019, 8.507059e+37
  %v1021 = vand.u32 %v876, 2147483648
  %v1022 = vor.u32 1.1754944e-38, %v1021
  %v1023 = vsel %vm1020, %v1022, %v1018
  %v1024 = vmul.f32 1.0, %v1023
  %v1025 = vrcp.pop %v877
  %v1026 = vmul.f32 %v877, %v1025
  %v1027 = vsub.f32 1.0, %v1026
  %v1028 = vmul.f32 %v1025, %v1027
  %v1029 = vadd.f32 %v1025, %v1028
  %vm1030 = vweird.f32 %v877
  %vm1031 = vweird.f32 %v1025
  %vm1032 = vmor %vm1030, %vm1031
  %v1033 = vsel %vm1032, %v1025, %v1029
  %v1034 = vand.u32 2147483647, %v877
  %vm1035 = vcmp.eq.f32.partialorder %v1034, 8.507059e+37
  %v1036 = vand.u32 %v877, 2147483648
  %v1037 = vor.u32 1.1754944e-38, %v1036
  %v1038 = vsel %vm1035, %v1037, %v1033
  %v1039 = vmul.f32 1.0, %v1038
  %v1040 = vrcp.pop %v878
  %v1041 = vmul.f32 %v878, %v1040
  %v1042 = vsub.f32 1.0, %v1041
  %v1043 = vmul.f32 %v1040, %v1042
  %v1044 = vadd.f32 %v1040, %v1043
  %vm1045 = vweird.f32 %v878
  %vm1046 = vweird.f32 %v1040
  %vm1047 = vmor %vm1045, %vm1046
  %v1048 = vsel %vm1047, %v1040, %v1044
  %v1049 = vand.u32 2147483647, %v878
  %vm1050 = vcmp.eq.f32.partialorder %v1049, 8.507059e+37
  %v1051 = vand.u32 %v878, 2147483648
  %v1052 = vor.u32 1.1754944e-38, %v1051
  %v1053 = vsel %vm1050, %v1052, %v1048
  %v1054 = vmul.f32 1.0, %v1053
  %v1055 = vrcp.pop %v879
  %v1056 = vmul.f32 %v879, %v1055
  %v1057 = vsub.f32 1.0, %v1056
  %v1058 = vmul.f32 %v1055, %v1057
  %v1059 = vadd.f32 %v1055, %v1058
  %vm1060 = vweird.f32 %v879
  %vm1061 = vweird.f32 %v1055
  %vm1062 = vmor %vm1060, %vm1061
  %v1063 = vsel %vm1062, %v1055, %v1059
  %v1064 = vand.u32 2147483647, %v879
  %vm1065 = vcmp.eq.f32.partialorder %v1064, 8.507059e+37
  %v1066 = vand.u32 %v879, 2147483648
  %v1067 = vor.u32 1.1754944e-38, %v1066
  %v1068 = vsel %vm1065, %v1067, %v1063
  %v1069 = vmul.f32 1.0, %v1068
  %v1070 = vrcp.pop %v880
  %v1071 = vmul.f32 %v880, %v1070
  %v1072 = vsub.f32 1.0, %v1071
  %v1073 = vmul.f32 %v1070, %v1072
  %v1074 = vadd.f32 %v1070, %v1073
  %vm1075 = vweird.f32 %v880
  %vm1076 = vweird.f32 %v1070
  %vm1077 = vmor %vm1075, %vm1076
  %v1078 = vsel %vm1077, %v1070, %v1074
  %v1079 = vand.u32 2147483647, %v880
  %vm1080 = vcmp.eq.f32.partialorder %v1079, 8.507059e+37
  %v1081 = vand.u32 %v880, 2147483648
  %v1082 = vor.u32 1.1754944e-38, %v1081
  %v1083 = vsel %vm1080, %v1082, %v1078
  %v1084 = vmul.f32 1.0, %v1083
  %v1085 = vrcp.pop %v881
  %v1086 = vmul.f32 %v881, %v1085
  %v1087 = vsub.f32 1.0, %v1086
  %v1088 = vmul.f32 %v1085, %v1087
  %v1089 = vadd.f32 %v1085, %v1088
  %vm1090 = vweird.f32 %v881
  %vm1091 = vweird.f32 %v1085
  %vm1092 = vmor %vm1090, %vm1091
  %v1093 = vsel %vm1092, %v1085, %v1089
  %v1094 = vand.u32 2147483647, %v881
  %vm1095 = vcmp.eq.f32.partialorder %v1094, 8.507059e+37
  %v1096 = vand.u32 %v881, 2147483648
  %v1097 = vor.u32 1.1754944e-38, %v1096
  %v1098 = vsel %vm1095, %v1097, %v1093
  %v1099 = vmul.f32 1.0, %v1098
  %v1100 = vrcp.pop %v882
  %v1101 = vmul.f32 %v882, %v1100
  %v1102 = vsub.f32 1.0, %v1101
  %v1103 = vmul.f32 %v1100, %v1102
  %v1104 = vadd.f32 %v1100, %v1103
  %vm1105 = vweird.f32 %v882
  %vm1106 = vweird.f32 %v1100
  %vm1107 = vmor %vm1105, %vm1106
  %v1108 = vsel %vm1107, %v1100, %v1104
  %v1109 = vand.u32 2147483647, %v882
  %vm1110 = vcmp.eq.f32.partialorder %v1109, 8.507059e+37
  %v1111 = vand.u32 %v882, 2147483648
  %v1112 = vor.u32 1.1754944e-38, %v1111
  %v1113 = vsel %vm1110, %v1112, %v1108
  %v1114 = vmul.f32 1.0, %v1113
  %v1115 = vrcp.pop %v883
  %v1116 = vmul.f32 %v883, %v1115
  %v1117 = vsub.f32 1.0, %v1116
  %v1118 = vmul.f32 %v1115, %v1117
  %v1119 = vadd.f32 %v1115, %v1118
  %vm1120 = vweird.f32 %v883
  %vm1121 = vweird.f32 %v1115
  %vm1122 = vmor %vm1120, %vm1121
  %v1123 = vsel %vm1122, %v1115, %v1119
  %v1124 = vand.u32 2147483647, %v883
  %vm1125 = vcmp.eq.f32.partialorder %v1124, 8.507059e+37
  %v1126 = vand.u32 %v883, 2147483648
  %v1127 = vor.u32 1.1754944e-38, %v1126
  %v1128 = vsel %vm1125, %v1127, %v1123
  %v1129 = vmul.f32 1.0, %v1128
  %v1130 = vrcp.pop %v884
  %v1131 = vmul.f32 %v884, %v1130
  %v1132 = vsub.f32 1.0, %v1131
  %v1133 = vmul.f32 %v1130, %v1132
  %v1134 = vadd.f32 %v1130, %v1133
  %vm1135 = vweird.f32 %v884
  %vm1136 = vweird.f32 %v1130
  %vm1137 = vmor %vm1135, %vm1136
  %v1138 = vsel %vm1137, %v1130, %v1134
  %v1139 = vand.u32 2147483647, %v884
  %vm1140 = vcmp.eq.f32.partialorder %v1139, 8.507059e+37
  %v1141 = vand.u32 %v884, 2147483648
  %v1142 = vor.u32 1.1754944e-38, %v1141
  %v1143 = vsel %vm1140, %v1142, %v1138
  %v1144 = vmul.f32 1.0, %v1143
  %v1145 = vrcp.pop %v885
  %v1146 = vmul.f32 %v885, %v1145
  %v1147 = vsub.f32 1.0, %v1146
  %v1148 = vmul.f32 %v1145, %v1147
  %v1149 = vadd.f32 %v1145, %v1148
  %vm1150 = vweird.f32 %v885
  %vm1151 = vweird.f32 %v1145
  %vm1152 = vmor %vm1150, %vm1151
  %v1153 = vsel %vm1152, %v1145, %v1149
  %v1154 = vand.u32 2147483647, %v885
  %vm1155 = vcmp.eq.f32.partialorder %v1154, 8.507059e+37
  %v1156 = vand.u32 %v885, 2147483648
  %v1157 = vor.u32 1.1754944e-38, %v1156
  %v1158 = vsel %vm1155, %v1157, %v1153
  %v1159 = vmul.f32 1.0, %v1158
  %v1160 = vrcp.pop %v886
  %v1161 = vmul.f32 %v886, %v1160
  %v1162 = vsub.f32 1.0, %v1161
  %v1163 = vmul.f32 %v1160, %v1162
  %v1164 = vadd.f32 %v1160, %v1163
  %vm1165 = vweird.f32 %v886
  %vm1166 = vweird.f32 %v1160
  %vm1167 = vmor %vm1165, %vm1166
  %v1168 = vsel %vm1167, %v1160, %v1164
  %v1169 = vand.u32 2147483647, %v886
  %vm1170 = vcmp.eq.f32.partialorder %v1169, 8.507059e+37
  %v1171 = vand.u32 %v886, 2147483648
  %v1172 = vor.u32 1.1754944e-38, %v1171
  %v1173 = vsel %vm1170, %v1172, %v1168
  %v1174 = vmul.f32 1.0, %v1173
  %v1175 = vrcp.pop %v887
  %v1176 = vmul.f32 %v887, %v1175
  %v1177 = vsub.f32 1.0, %v1176
  %v1178 = vmul.f32 %v1175, %v1177
  %v1179 = vadd.f32 %v1175, %v1178
  %vm1180 = vweird.f32 %v887
  %vm1181 = vweird.f32 %v1175
  %vm1182 = vmor %vm1180, %vm1181
  %v1183 = vsel %vm1182, %v1175, %v1179
  %v1184 = vand.u32 2147483647, %v887
  %vm1185 = vcmp.eq.f32.partialorder %v1184, 8.507059e+37
  %v1186 = vand.u32 %v887, 2147483648
  %v1187 = vor.u32 1.1754944e-38, %v1186
  %v1188 = vsel %vm1185, %v1187, %v1183
  %v1189 = vmul.f32 1.0, %v1188
  %v1190 = vrcp.pop %v888
  %v1191 = vmul.f32 %v888, %v1190
  %v1192 = vsub.f32 1.0, %v1191
  %v1193 = vmul.f32 %v1190, %v1192
  %v1194 = vadd.f32 %v1190, %v1193
  %vm1195 = vweird.f32 %v888
  %vm1196 = vweird.f32 %v1190
  %vm1197 = vmor %vm1195, %vm1196
  %v1198 = vsel %vm1197, %v1190, %v1194
  %v1199 = vand.u32 2147483647, %v888
  %vm1200 = vcmp.eq.f32.partialorder %v1199, 8.507059e+37
  %v1201 = vand.u32 %v888, 2147483648
  %v1202 = vor.u32 1.1754944e-38, %v1201
  %v1203 = vsel %vm1200, %v1202, %v1198
  %v1204 = vmul.f32 1.0, %v1203
  %v1205 = vrcp.pop %v889
  %v1206 = vmul.f32 %v889, %v1205
  %v1207 = vsub.f32 1.0, %v1206
  %v1208 = vmul.f32 %v1205, %v1207
  %v1209 = vadd.f32 %v1205, %v1208
  %vm1210 = vweird.f32 %v889
  %vm1211 = vweird.f32 %v1205
  %vm1212 = vmor %vm1210, %vm1211
  %v1213 = vsel %vm1212, %v1205, %v1209
  %v1214 = vand.u32 2147483647, %v889
  %vm1215 = vcmp.eq.f32.partialorder %v1214, 8.507059e+37
  %v1216 = vand.u32 %v889, 2147483648
  %v1217 = vor.u32 1.1754944e-38, %v1216
  %v1218 = vsel %vm1215, %v1217, %v1213
  %v1219 = vmul.f32 1.0, %v1218
  %v1220 = vrcp.pop %v890
  %v1221 = vmul.f32 %v890, %v1220
  %v1222 = vsub.f32 1.0, %v1221
  %v1223 = vmul.f32 %v1220, %v1222
  %v1224 = vadd.f32 %v1220, %v1223
  %vm1225 = vweird.f32 %v890
  %vm1226 = vweird.f32 %v1220
  %vm1227 = vmor %vm1225, %vm1226
  %v1228 = vsel %vm1227, %v1220, %v1224
  %v1229 = vand.u32 2147483647, %v890
  %vm1230 = vcmp.eq.f32.partialorder %v1229, 8.507059e+37
  %v1231 = vand.u32 %v890, 2147483648
  %v1232 = vor.u32 1.1754944e-38, %v1231
  %v1233 = vsel %vm1230, %v1232, %v1228
  %v1234 = vmul.f32 1.0, %v1233
  %v1235 = vrcp.pop %v891
  %v1236 = vmul.f32 %v891, %v1235
  %v1237 = vsub.f32 1.0, %v1236
  %v1238 = vmul.f32 %v1235, %v1237
  %v1239 = vadd.f32 %v1235, %v1238
  %vm1240 = vweird.f32 %v891
  %vm1241 = vweird.f32 %v1235
  %vm1242 = vmor %vm1240, %vm1241
  %v1243 = vsel %vm1242, %v1235, %v1239
  %v1244 = vand.u32 2147483647, %v891
  %vm1245 = vcmp.eq.f32.partialorder %v1244, 8.507059e+37
  %v1246 = vand.u32 %v891, 2147483648
  %v1247 = vor.u32 1.1754944e-38, %v1246
  %v1248 = vsel %vm1245, %v1247, %v1243
  %v1249 = vmul.f32 1.0, %v1248
  %v1250 = vrcp.pop %v892
  %v1251 = vmul.f32 %v892, %v1250
  %v1252 = vsub.f32 1.0, %v1251
  %v1253 = vmul.f32 %v1250, %v1252
  %v1254 = vadd.f32 %v1250, %v1253
  %vm1255 = vweird.f32 %v892
  %vm1256 = vweird.f32 %v1250
  %vm1257 = vmor %vm1255, %vm1256
  %v1258 = vsel %vm1257, %v1250, %v1254
  %v1259 = vand.u32 2147483647, %v892
  %vm1260 = vcmp.eq.f32.partialorder %v1259, 8.507059e+37
  %v1261 = vand.u32 %v892, 2147483648
  %v1262 = vor.u32 1.1754944e-38, %v1261
  %v1263 = vsel %vm1260, %v1262, %v1258
  %v1264 = vmul.f32 1.0, %v1263
  %v1265 = vrcp.pop %v893
  %v1266 = vmul.f32 %v893, %v1265
  %v1267 = vsub.f32 1.0, %v1266
  %v1268 = vmul.f32 %v1265, %v1267
  %v1269 = vadd.f32 %v1265, %v1268
  %vm1270 = vweird.f32 %v893
  %vm1271 = vweird.f32 %v1265
  %vm1272 = vmor %vm1270, %vm1271
  %v1273 = vsel %vm1272, %v1265, %v1269
  %v1274 = vand.u32 2147483647, %v893
  %vm1275 = vcmp.eq.f32.partialorder %v1274, 8.507059e+37
  %v1276 = vand.u32 %v893, 2147483648
  %v1277 = vor.u32 1.1754944e-38, %v1276
  %v1278 = vsel %vm1275, %v1277, %v1273
  %v1279 = vmul.f32 1.0, %v1278
  %v1280 = vrcp.pop %v894
  %v1281 = vmul.f32 %v894, %v1280
  %v1282 = vsub.f32 1.0, %v1281
  %v1283 = vmul.f32 %v1280, %v1282
  %v1284 = vadd.f32 %v1280, %v1283
  %vm1285 = vweird.f32 %v894
  %vm1286 = vweird.f32 %v1280
  %vm1287 = vmor %vm1285, %vm1286
  %v1288 = vsel %vm1287, %v1280, %v1284
  %v1289 = vand.u32 2147483647, %v894
  %vm1290 = vcmp.eq.f32.partialorder %v1289, 8.507059e+37
  %v1291 = vand.u32 %v894, 2147483648
  %v1292 = vor.u32 1.1754944e-38, %v1291
  %v1293 = vsel %vm1290, %v1292, %v1288
  %v1294 = vmul.f32 1.0, %v1293
  %v1295 = vrcp.pop %v895
  %v1296 = vmul.f32 %v895, %v1295
  %v1297 = vsub.f32 1.0, %v1296
  %v1298 = vmul.f32 %v1295, %v1297
  %v1299 = vadd.f32 %v1295, %v1298
  %vm1300 = vweird.f32 %v895
  %vm1301 = vweird.f32 %v1295
  %vm1302 = vmor %vm1300, %vm1301
  %v1303 = vsel %vm1302, %v1295, %v1299
  %v1304 = vand.u32 2147483647, %v895
  %vm1305 = vcmp.eq.f32.partialorder %v1304, 8.507059e+37
  %v1306 = vand.u32 %v895, 2147483648
  %v1307 = vor.u32 1.1754944e-38, %v1306
  %v1308 = vsel %vm1305, %v1307, %v1303
  %v1309 = vmul.f32 1.0, %v1308
  %v1310 = vrcp.pop %v896
  %v1311 = vmul.f32 %v896, %v1310
  %v1312 = vsub.f32 1.0, %v1311
  %v1313 = vmul.f32 %v1310, %v1312
  %v1314 = vadd.f32 %v1310, %v1313
  %vm1315 = vweird.f32 %v896
  %vm1316 = vweird.f32 %v1310
  %vm1317 = vmor %vm1315, %vm1316
  %v1318 = vsel %vm1317, %v1310, %v1314
  %v1319 = vand.u32 2147483647, %v896
  %vm1320 = vcmp.eq.f32.partialorder %v1319, 8.507059e+37
  %v1321 = vand.u32 %v896, 2147483648
  %v1322 = vor.u32 1.1754944e-38, %v1321
  %v1323 = vsel %vm1320, %v1322, %v1318
  %v1324 = vmul.f32 1.0, %v1323
  %v1325 = vrcp.pop %v897
  %v1326 = vmul.f32 %v897, %v1325
  %v1327 = vsub.f32 1.0, %v1326
  %v1328 = vmul.f32 %v1325, %v1327
  %v1329 = vadd.f32 %v1325, %v1328
  %vm1330 = vweird.f32 %v897
  %vm1331 = vweird.f32 %v1325
  %vm1332 = vmor %vm1330, %vm1331
  %v1333 = vsel %vm1332, %v1325, %v1329
  %v1334 = vand.u32 2147483647, %v897
  %vm1335 = vcmp.eq.f32.partialorder %v1334, 8.507059e+37
  %v1336 = vand.u32 %v897, 2147483648
  %v1337 = vor.u32 1.1754944e-38, %v1336
  %v1338 = vsel %vm1335, %v1337, %v1333
  %v1339 = vmul.f32 1.0, %v1338
  %v1340 = vrcp.pop %v898
  %v1341 = vmul.f32 %v898, %v1340
  %v1342 = vsub.f32 1.0, %v1341
  %v1343 = vmul.f32 %v1340, %v1342
  %v1344 = vadd.f32 %v1340, %v1343
  %vm1345 = vweird.f32 %v898
  %vm1346 = vweird.f32 %v1340
  %vm1347 = vmor %vm1345, %vm1346
  %v1348 = vsel %vm1347, %v1340, %v1344
  %v1349 = vand.u32 2147483647, %v898
  %vm1350 = vcmp.eq.f32.partialorder %v1349, 8.507059e+37
  %v1351 = vand.u32 %v898, 2147483648
  %v1352 = vor.u32 1.1754944e-38, %v1351
  %v1353 = vsel %vm1350, %v1352, %v1348
  %v1354 = vmul.f32 1.0, %v1353
  %v1355 = vrcp.pop %v899
  %v1356 = vmul.f32 %v899, %v1355
  %v1357 = vsub.f32 1.0, %v1356
  %v1358 = vmul.f32 %v1355, %v1357
  %v1359 = vadd.f32 %v1355, %v1358
  %vm1360 = vweird.f32 %v899
  %vm1361 = vweird.f32 %v1355
  %vm1362 = vmor %vm1360, %vm1361
  %v1363 = vsel %vm1362, %v1355, %v1359
  %v1364 = vand.u32 2147483647, %v899
  %vm1365 = vcmp.eq.f32.partialorder %v1364, 8.507059e+37
  %v1366 = vand.u32 %v899, 2147483648
  %v1367 = vor.u32 1.1754944e-38, %v1366
  %v1368 = vsel %vm1365, %v1367, %v1363
  %v1369 = vmul.f32 1.0, %v1368
  %v1370 = vrcp.pop %v900
  %v1371 = vmul.f32 %v900, %v1370
  %v1372 = vsub.f32 1.0, %v1371
  %v1373 = vmul.f32 %v1370, %v1372
  %v1374 = vadd.f32 %v1370, %v1373
  %vm1375 = vweird.f32 %v900
  %vm1376 = vweird.f32 %v1370
  %vm1377 = vmor %vm1375, %vm1376
  %v1378 = vsel %vm1377, %v1370, %v1374
  %v1379 = vand.u32 2147483647, %v900
  %vm1380 = vcmp.eq.f32.partialorder %v1379, 8.507059e+37
  %v1381 = vand.u32 %v900, 2147483648
  %v1382 = vor.u32 1.1754944e-38, %v1381
  %v1383 = vsel %vm1380, %v1382, %v1378
  %v1384 = vmul.f32 1.0, %v1383
  %v1385 = vrcp.pop %v901
  %v1386 = vmul.f32 %v901, %v1385
  %v1387 = vsub.f32 1.0, %v1386
  %v1388 = vmul.f32 %v1385, %v1387
  %v1389 = vadd.f32 %v1385, %v1388
  %vm1390 = vweird.f32 %v901
  %vm1391 = vweird.f32 %v1385
  %vm1392 = vmor %vm1390, %vm1391
  %v1393 = vsel %vm1392, %v1385, %v1389
  %v1394 = vand.u32 2147483647, %v901
  %vm1395 = vcmp.eq.f32.partialorder %v1394, 8.507059e+37
  %v1396 = vand.u32 %v901, 2147483648
  %v1397 = vor.u32 1.1754944e-38, %v1396
  %v1398 = vsel %vm1395, %v1397, %v1393
  %v1399 = vmul.f32 1.0, %v1398
  %v1400 = vrcp.pop %v902
  %v1401 = vmul.f32 %v902, %v1400
  %v1402 = vsub.f32 1.0, %v1401
  %v1403 = vmul.f32 %v1400, %v1402
  %v1404 = vadd.f32 %v1400, %v1403
  %vm1405 = vweird.f32 %v902
  %vm1406 = vweird.f32 %v1400
  %vm1407 = vmor %vm1405, %vm1406
  %v1408 = vsel %vm1407, %v1400, %v1404
  %v1409 = vand.u32 2147483647, %v902
  %vm1410 = vcmp.eq.f32.partialorder %v1409, 8.507059e+37
  %v1411 = vand.u32 %v902, 2147483648
  %v1412 = vor.u32 1.1754944e-38, %v1411
  %v1413 = vsel %vm1410, %v1412, %v1408
  %v1414 = vmul.f32 1.0, %v1413
  %v1415 = vrcp.pop %v903
  %v1416 = vmul.f32 %v903, %v1415
  %v1417 = vsub.f32 1.0, %v1416
  %v1418 = vmul.f32 %v1415, %v1417
  %v1419 = vadd.f32 %v1415, %v1418
  %vm1420 = vweird.f32 %v903
  %vm1421 = vweird.f32 %v1415
  %vm1422 = vmor %vm1420, %vm1421
  %v1423 = vsel %vm1422, %v1415, %v1419
  %v1424 = vand.u32 2147483647, %v903
  %vm1425 = vcmp.eq.f32.partialorder %v1424, 8.507059e+37
  %v1426 = vand.u32 %v903, 2147483648
  %v1427 = vor.u32 1.1754944e-38, %v1426
  %v1428 = vsel %vm1425, %v1427, %v1423
  %v1429 = vmul.f32 1.0, %v1428
  %v1430 = vrcp.pop %v904
  %v1431 = vmul.f32 %v904, %v1430
  %v1432 = vsub.f32 1.0, %v1431
  %v1433 = vmul.f32 %v1430, %v1432
  %v1434 = vadd.f32 %v1430, %v1433
  %vm1435 = vweird.f32 %v904
  %vm1436 = vweird.f32 %v1430
  %vm1437 = vmor %vm1435, %vm1436
  %v1438 = vsel %vm1437, %v1430, %v1434
  %v1439 = vand.u32 2147483647, %v904
  %vm1440 = vcmp.eq.f32.partialorder %v1439, 8.507059e+37
  %v1441 = vand.u32 %v904, 2147483648
  %v1442 = vor.u32 1.1754944e-38, %v1441
  %v1443 = vsel %vm1440, %v1442, %v1438
  %v1444 = vmul.f32 1.0, %v1443
  %v1445 = vrcp.pop %v905
  %v1446 = vmul.f32 %v905, %v1445
  %v1447 = vsub.f32 1.0, %v1446
  %v1448 = vmul.f32 %v1445, %v1447
  %v1449 = vadd.f32 %v1445, %v1448
  %vm1450 = vweird.f32 %v905
  %vm1451 = vweird.f32 %v1445
  %vm1452 = vmor %vm1450, %vm1451
  %v1453 = vsel %vm1452, %v1445, %v1449
  %v1454 = vand.u32 2147483647, %v905
  %vm1455 = vcmp.eq.f32.partialorder %v1454, 8.507059e+37
  %v1456 = vand.u32 %v905, 2147483648
  %v1457 = vor.u32 1.1754944e-38, %v1456
  %v1458 = vsel %vm1455, %v1457, %v1453
  %v1459 = vmul.f32 1.0, %v1458
  %v1460 = vrcp.pop %v906
  %v1461 = vmul.f32 %v906, %v1460
  %v1462 = vsub.f32 1.0, %v1461
  %v1463 = vmul.f32 %v1460, %v1462
  %v1464 = vadd.f32 %v1460, %v1463
  %vm1465 = vweird.f32 %v906
  %vm1466 = vweird.f32 %v1460
  %vm1467 = vmor %vm1465, %vm1466
  %v1468 = vsel %vm1467, %v1460, %v1464
  %v1469 = vand.u32 2147483647, %v906
  %vm1470 = vcmp.eq.f32.partialorder %v1469, 8.507059e+37
  %v1471 = vand.u32 %v906, 2147483648
  %v1472 = vor.u32 1.1754944e-38, %v1471
  %v1473 = vsel %vm1470, %v1472, %v1468
  %v1474 = vmul.f32 1.0, %v1473
  %v1475 = vrcp.pop %v907
  %v1476 = vmul.f32 %v907, %v1475
  %v1477 = vsub.f32 1.0, %v1476
  %v1478 = vmul.f32 %v1475, %v1477
  %v1479 = vadd.f32 %v1475, %v1478
  %vm1480 = vweird.f32 %v907
  %vm1481 = vweird.f32 %v1475
  %vm1482 = vmor %vm1480, %vm1481
  %v1483 = vsel %vm1482, %v1475, %v1479
  %v1484 = vand.u32 2147483647, %v907
  %vm1485 = vcmp.eq.f32.partialorder %v1484, 8.507059e+37
  %v1486 = vand.u32 %v907, 2147483648
  %v1487 = vor.u32 1.1754944e-38, %v1486
  %v1488 = vsel %vm1485, %v1487, %v1483
  %v1489 = vmul.f32 1.0, %v1488
  %v1490 = vrcp.pop %v908
  %v1491 = vmul.f32 %v908, %v1490
  %v1492 = vsub.f32 1.0, %v1491
  %v1493 = vmul.f32 %v1490, %v1492
  %v1494 = vadd.f32 %v1490, %v1493
  %vm1495 = vweird.f32 %v908
  %vm1496 = vweird.f32 %v1490
  %vm1497 = vmor %vm1495, %vm1496
  %v1498 = vsel %vm1497, %v1490, %v1494
  %v1499 = vand.u32 2147483647, %v908
  %vm1500 = vcmp.eq.f32.partialorder %v1499, 8.507059e+37
  %v1501 = vand.u32 %v908, 2147483648
  %v1502 = vor.u32 1.1754944e-38, %v1501
  %v1503 = vsel %vm1500, %v1502, %v1498
  %v1504 = vmul.f32 1.0, %v1503
  %v1505 = vrcp.pop %v909
  %v1506 = vmul.f32 %v909, %v1505
  %v1507 = vsub.f32 1.0, %v1506
  %v1508 = vmul.f32 %v1505, %v1507
  %v1509 = vadd.f32 %v1505, %v1508
  %vm1510 = vweird.f32 %v909
  %vm1511 = vweird.f32 %v1505
  %vm1512 = vmor %vm1510, %vm1511
  %v1513 = vsel %vm1512, %v1505, %v1509
  %v1514 = vand.u32 2147483647, %v909
  %vm1515 = vcmp.eq.f32.partialorder %v1514, 8.507059e+37
  %v1516 = vand.u32 %v909, 2147483648
  %v1517 = vor.u32 1.1754944e-38, %v1516
  %v1518 = vsel %vm1515, %v1517, %v1513
  %v1519 = vmul.f32 1.0, %v1518
  %v1520 = vrcp.pop %v910
  %v1521 = vmul.f32 %v910, %v1520
  %v1522 = vsub.f32 1.0, %v1521
  %v1523 = vmul.f32 %v1520, %v1522
  %v1524 = vadd.f32 %v1520, %v1523
  %vm1525 = vweird.f32 %v910
  %vm1526 = vweird.f32 %v1520
  %vm1527 = vmor %vm1525, %vm1526
  %v1528 = vsel %vm1527, %v1520, %v1524
  %v1529 = vand.u32 2147483647, %v910
  %vm1530 = vcmp.eq.f32.partialorder %v1529, 8.507059e+37
  %v1531 = vand.u32 %v910, 2147483648
  %v1532 = vor.u32 1.1754944e-38, %v1531
  %v1533 = vsel %vm1530, %v1532, %v1528
  %v1534 = vmul.f32 1.0, %v1533
  %v1535 = vrcp.pop %v911
  %v1536 = vmul.f32 %v911, %v1535
  %v1537 = vsub.f32 1.0, %v1536
  %v1538 = vmul.f32 %v1535, %v1537
  %v1539 = vadd.f32 %v1535, %v1538
  %vm1540 = vweird.f32 %v911
  %vm1541 = vweird.f32 %v1535
  %vm1542 = vmor %vm1540, %vm1541
  %v1543 = vsel %vm1542, %v1535, %v1539
  %v1544 = vand.u32 2147483647, %v911
  %vm1545 = vcmp.eq.f32.partialorder %v1544, 8.507059e+37
  %v1546 = vand.u32 %v911, 2147483648
  %v1547 = vor.u32 1.1754944e-38, %v1546
  %v1548 = vsel %vm1545, %v1547, %v1543
  %v1549 = vmul.f32 1.0, %v1548
  %v1550 = vrcp.pop %v912
  %v1551 = vmul.f32 %v912, %v1550
  %v1552 = vsub.f32 1.0, %v1551
  %v1553 = vmul.f32 %v1550, %v1552
  %v1554 = vadd.f32 %v1550, %v1553
  %vm1555 = vweird.f32 %v912
  %vm1556 = vweird.f32 %v1550
  %vm1557 = vmor %vm1555, %vm1556
  %v1558 = vsel %vm1557, %v1550, %v1554
  %v1559 = vand.u32 2147483647, %v912
  %vm1560 = vcmp.eq.f32.partialorder %v1559, 8.507059e+37
  %v1561 = vand.u32 %v912, 2147483648
  %v1562 = vor.u32 1.1754944e-38, %v1561
  %v1563 = vsel %vm1560, %v1562, %v1558
  %v1564 = vmul.f32 1.0, %v1563
  %v1565 = vrcp.pop %v913
  %v1566 = vmul.f32 %v913, %v1565
  %v1567 = vsub.f32 1.0, %v1566
  %v1568 = vmul.f32 %v1565, %v1567
  %v1569 = vadd.f32 %v1565, %v1568
  %vm1570 = vweird.f32 %v913
  %vm1571 = vweird.f32 %v1565
  %vm1572 = vmor %vm1570, %vm1571
  %v1573 = vsel %vm1572, %v1565, %v1569
  %v1574 = vand.u32 2147483647, %v913
  %vm1575 = vcmp.eq.f32.partialorder %v1574, 8.507059e+37
  %v1576 = vand.u32 %v913, 2147483648
  %v1577 = vor.u32 1.1754944e-38, %v1576
  %v1578 = vsel %vm1575, %v1577, %v1573
  %v1579 = vmul.f32 1.0, %v1578
  %v1580 = vrcp.pop %v914
  %v1581 = vmul.f32 %v914, %v1580
  %v1582 = vsub.f32 1.0, %v1581
  %v1583 = vmul.f32 %v1580, %v1582
  %v1584 = vadd.f32 %v1580, %v1583
  %vm1585 = vweird.f32 %v914
  %vm1586 = vweird.f32 %v1580
  %vm1587 = vmor %vm1585, %vm1586
  %v1588 = vsel %vm1587, %v1580, %v1584
  %v1589 = vand.u32 2147483647, %v914
  %vm1590 = vcmp.eq.f32.partialorder %v1589, 8.507059e+37
  %v1591 = vand.u32 %v914, 2147483648
  %v1592 = vor.u32 1.1754944e-38, %v1591
  %v1593 = vsel %vm1590, %v1592, %v1588
  %v1594 = vmul.f32 1.0, %v1593
  %v1595 = vrcp.pop %v915
  %v1596 = vmul.f32 %v915, %v1595
  %v1597 = vsub.f32 1.0, %v1596
  %v1598 = vmul.f32 %v1595, %v1597
  %v1599 = vadd.f32 %v1595, %v1598
  %vm1600 = vweird.f32 %v915
  %vm1601 = vweird.f32 %v1595
  %vm1602 = vmor %vm1600, %vm1601
  %v1603 = vsel %vm1602, %v1595, %v1599
  %v1604 = vand.u32 2147483647, %v915
  %vm1605 = vcmp.eq.f32.partialorder %v1604, 8.507059e+37
  %v1606 = vand.u32 %v915, 2147483648
  %v1607 = vor.u32 1.1754944e-38, %v1606
  %v1608 = vsel %vm1605, %v1607, %v1603
  %v1609 = vmul.f32 1.0, %v1608
  %v1610 = vrcp.pop %v916
  %v1611 = vmul.f32 %v916, %v1610
  %v1612 = vsub.f32 1.0, %v1611
  %v1613 = vmul.f32 %v1610, %v1612
  %v1614 = vadd.f32 %v1610, %v1613
  %vm1615 = vweird.f32 %v916
  %vm1616 = vweird.f32 %v1610
  %vm1617 = vmor %vm1615, %vm1616
  %v1618 = vsel %vm1617, %v1610, %v1614
  %v1619 = vand.u32 2147483647, %v916
  %vm1620 = vcmp.eq.f32.partialorder %v1619, 8.507059e+37
  %v1621 = vand.u32 %v916, 2147483648
  %v1622 = vor.u32 1.1754944e-38, %v1621
  %v1623 = vsel %vm1620, %v1622, %v1618
  %v1624 = vmul.f32 1.0, %v1623
  %v1625 = vrcp.pop %v917
  %v1626 = vmul.f32 %v917, %v1625
  %v1627 = vsub.f32 1.0, %v1626
  %v1628 = vmul.f32 %v1625, %v1627
  %v1629 = vadd.f32 %v1625, %v1628
  %vm1630 = vweird.f32 %v917
  %vm1631 = vweird.f32 %v1625
  %vm1632 = vmor %vm1630, %vm1631
  %v1633 = vsel %vm1632, %v1625, %v1629
  %v1634 = vand.u32 2147483647, %v917
  %vm1635 = vcmp.eq.f32.partialorder %v1634, 8.507059e+37
  %v1636 = vand.u32 %v917, 2147483648
  %v1637 = vor.u32 1.1754944e-38, %v1636
  %v1638 = vsel %vm1635, %v1637, %v1633
  %v1639 = vmul.f32 1.0, %v1638
  %v1640 = vrcp.pop %v918
  %v1641 = vmul.f32 %v918, %v1640
  %v1642 = vsub.f32 1.0, %v1641
  %v1643 = vmul.f32 %v1640, %v1642
  %v1644 = vadd.f32 %v1640, %v1643
  %vm1645 = vweird.f32 %v918
  %vm1646 = vweird.f32 %v1640
  %vm1647 = vmor %vm1645, %vm1646
  %v1648 = vsel %vm1647, %v1640, %v1644
  %v1649 = vand.u32 2147483647, %v918
  %vm1650 = vcmp.eq.f32.partialorder %v1649, 8.507059e+37
  %v1651 = vand.u32 %v918, 2147483648
  %v1652 = vor.u32 1.1754944e-38, %v1651
  %v1653 = vsel %vm1650, %v1652, %v1648
  %v1654 = vmul.f32 1.0, %v1653
  %v1655 = vrcp.pop %v919
  %v1656 = vmul.f32 %v919, %v1655
  %v1657 = vsub.f32 1.0, %v1656
  %v1658 = vmul.f32 %v1655, %v1657
  %v1659 = vadd.f32 %v1655, %v1658
  %vm1660 = vweird.f32 %v919
  %vm1661 = vweird.f32 %v1655
  %vm1662 = vmor %vm1660, %vm1661
  %v1663 = vsel %vm1662, %v1655, %v1659
  %v1664 = vand.u32 2147483647, %v919
  %vm1665 = vcmp.eq.f32.partialorder %v1664, 8.507059e+37
  %v1666 = vand.u32 %v919, 2147483648
  %v1667 = vor.u32 1.1754944e-38, %v1666
  %v1668 = vsel %vm1665, %v1667, %v1663
  %v1669 = vmul.f32 1.0, %v1668
  %v1670 = vrcp.pop %v920
  %v1671 = vmul.f32 %v920, %v1670
  %v1672 = vsub.f32 1.0, %v1671
  %v1673 = vmul.f32 %v1670, %v1672
  %v1674 = vadd.f32 %v1670, %v1673
  %vm1675 = vweird.f32 %v920
  %vm1676 = vweird.f32 %v1670
  %vm1677 = vmor %vm1675, %vm1676
  %v1678 = vsel %vm1677, %v1670, %v1674
  %v1679 = vand.u32 2147483647, %v920
  %vm1680 = vcmp.eq.f32.partialorder %v1679, 8.507059e+37
  %v1681 = vand.u32 %v920, 2147483648
  %v1682 = vor.u32 1.1754944e-38, %v1681
  %v1683 = vsel %vm1680, %v1682, %v1678
  %v1684 = vmul.f32 1.0, %v1683
  %v1685 = vrcp.pop %v921
  %v1686 = vmul.f32 %v921, %v1685
  %v1687 = vsub.f32 1.0, %v1686
  %v1688 = vmul.f32 %v1685, %v1687
  %v1689 = vadd.f32 %v1685, %v1688
  %vm1690 = vweird.f32 %v921
  %vm1691 = vweird.f32 %v1685
  %vm1692 = vmor %vm1690, %vm1691
  %v1693 = vsel %vm1692, %v1685, %v1689
  %v1694 = vand.u32 2147483647, %v921
  %vm1695 = vcmp.eq.f32.partialorder %v1694, 8.507059e+37
  %v1696 = vand.u32 %v921, 2147483648
  %v1697 = vor.u32 1.1754944e-38, %v1696
  %v1698 = vsel %vm1695, %v1697, %v1693
  %v1699 = vmul.f32 1.0, %v1698
  %v1700 = vrcp.pop %v922
  %v1701 = vmul.f32 %v922, %v1700
  %v1702 = vsub.f32 1.0, %v1701
  %v1703 = vmul.f32 %v1700, %v1702
  %v1704 = vadd.f32 %v1700, %v1703
  %vm1705 = vweird.f32 %v922
  %vm1706 = vweird.f32 %v1700
  %vm1707 = vmor %vm1705, %vm1706
  %v1708 = vsel %vm1707, %v1700, %v1704
  %v1709 = vand.u32 2147483647, %v922
  %vm1710 = vcmp.eq.f32.partialorder %v1709, 8.507059e+37
  %v1711 = vand.u32 %v922, 2147483648
  %v1712 = vor.u32 1.1754944e-38, %v1711
  %v1713 = vsel %vm1710, %v1712, %v1708
  %v1714 = vmul.f32 1.0, %v1713
  %v1715 = vrcp.pop %v923
  %v1716 = vmul.f32 %v923, %v1715
  %v1717 = vsub.f32 1.0, %v1716
  %v1718 = vmul.f32 %v1715, %v1717
  %v1719 = vadd.f32 %v1715, %v1718
  %vm1720 = vweird.f32 %v923
  %vm1721 = vweird.f32 %v1715
  %vm1722 = vmor %vm1720, %vm1721
  %v1723 = vsel %vm1722, %v1715, %v1719
  %v1724 = vand.u32 2147483647, %v923
  %vm1725 = vcmp.eq.f32.partialorder %v1724, 8.507059e+37
  %v1726 = vand.u32 %v923, 2147483648
  %v1727 = vor.u32 1.1754944e-38, %v1726
  %v1728 = vsel %vm1725, %v1727, %v1723
  %v1729 = vmul.f32 1.0, %v1728
  %v1730 = vrcp.pop %v924
  %v1731 = vmul.f32 %v924, %v1730
  %v1732 = vsub.f32 1.0, %v1731
  %v1733 = vmul.f32 %v1730, %v1732
  %v1734 = vadd.f32 %v1730, %v1733
  %vm1735 = vweird.f32 %v924
  %vm1736 = vweird.f32 %v1730
  %vm1737 = vmor %vm1735, %vm1736
  %v1738 = vsel %vm1737, %v1730, %v1734
  %v1739 = vand.u32 2147483647, %v924
  %vm1740 = vcmp.eq.f32.partialorder %v1739, 8.507059e+37
  %v1741 = vand.u32 %v924, 2147483648
  %v1742 = vor.u32 1.1754944e-38, %v1741
  %v1743 = vsel %vm1740, %v1742, %v1738
  %v1744 = vmul.f32 1.0, %v1743
  %v1745 = vrcp.pop %v925
  %v1746 = vmul.f32 %v925, %v1745
  %v1747 = vsub.f32 1.0, %v1746
  %v1748 = vmul.f32 %v1745, %v1747
  %v1749 = vadd.f32 %v1745, %v1748
  %vm1750 = vweird.f32 %v925
  %vm1751 = vweird.f32 %v1745
  %vm1752 = vmor %vm1750, %vm1751
  %v1753 = vsel %vm1752, %v1745, %v1749
  %v1754 = vand.u32 2147483647, %v925
  %vm1755 = vcmp.eq.f32.partialorder %v1754, 8.507059e+37
  %v1756 = vand.u32 %v925, 2147483648
  %v1757 = vor.u32 1.1754944e-38, %v1756
  %v1758 = vsel %vm1755, %v1757, %v1753
  %v1759 = vmul.f32 1.0, %v1758
  %v1760 = vrcp.pop %v926
  %v1761 = vmul.f32 %v926, %v1760
  %v1762 = vsub.f32 1.0, %v1761
  %v1763 = vmul.f32 %v1760, %v1762
  %v1764 = vadd.f32 %v1760, %v1763
  %vm1765 = vweird.f32 %v926
  %vm1766 = vweird.f32 %v1760
  %vm1767 = vmor %vm1765, %vm1766
  %v1768 = vsel %vm1767, %v1760, %v1764
  %v1769 = vand.u32 2147483647, %v926
  %vm1770 = vcmp.eq.f32.partialorder %v1769, 8.507059e+37
  %v1771 = vand.u32 %v926, 2147483648
  %v1772 = vor.u32 1.1754944e-38, %v1771
  %v1773 = vsel %vm1770, %v1772, %v1768
  %v1774 = vmul.f32 1.0, %v1773
  %v1775 = vrcp.pop %v927
  %v1776 = vmul.f32 %v927, %v1775
  %v1777 = vsub.f32 1.0, %v1776
  %v1778 = vmul.f32 %v1775, %v1777
  %v1779 = vadd.f32 %v1775, %v1778
  %vm1780 = vweird.f32 %v927
  %vm1781 = vweird.f32 %v1775
  %vm1782 = vmor %vm1780, %vm1781
  %v1783 = vsel %vm1782, %v1775, %v1779
  %v1784 = vand.u32 2147483647, %v927
  %vm1785 = vcmp.eq.f32.partialorder %v1784, 8.507059e+37
  %v1786 = vand.u32 %v927, 2147483648
  %v1787 = vor.u32 1.1754944e-38, %v1786
  %v1788 = vsel %vm1785, %v1787, %v1783
  %v1789 = vmul.f32 1.0, %v1788
  %v1790 = vrcp.pop %v928
  %v1791 = vmul.f32 %v928, %v1790
  %v1792 = vsub.f32 1.0, %v1791
  %v1793 = vmul.f32 %v1790, %v1792
  %v1794 = vadd.f32 %v1790, %v1793
  %vm1795 = vweird.f32 %v928
  %vm1796 = vweird.f32 %v1790
  %vm1797 = vmor %vm1795, %vm1796
  %v1798 = vsel %vm1797, %v1790, %v1794
  %v1799 = vand.u32 2147483647, %v928
  %vm1800 = vcmp.eq.f32.partialorder %v1799, 8.507059e+37
  %v1801 = vand.u32 %v928, 2147483648
  %v1802 = vor.u32 1.1754944e-38, %v1801
  %v1803 = vsel %vm1800, %v1802, %v1798
  %v1804 = vmul.f32 1.0, %v1803
  %v1805 = vrcp.pop %v929
  %v1806 = vmul.f32 %v929, %v1805
  %v1807 = vsub.f32 1.0, %v1806
  %v1808 = vmul.f32 %v1805, %v1807
  %v1809 = vadd.f32 %v1805, %v1808
  %vm1810 = vweird.f32 %v929
  %vm1811 = vweird.f32 %v1805
  %vm1812 = vmor %vm1810, %vm1811
  %v1813 = vsel %vm1812, %v1805, %v1809
  %v1814 = vand.u32 2147483647, %v929
  %vm1815 = vcmp.eq.f32.partialorder %v1814, 8.507059e+37
  %v1816 = vand.u32 %v929, 2147483648
  %v1817 = vor.u32 1.1754944e-38, %v1816
  %v1818 = vsel %vm1815, %v1817, %v1813
  %v1819 = vmul.f32 1.0, %v1818
  %v1820 = vrcp.pop %v930
  %v1821 = vmul.f32 %v930, %v1820
  %v1822 = vsub.f32 1.0, %v1821
  %v1823 = vmul.f32 %v1820, %v1822
  %v1824 = vadd.f32 %v1820, %v1823
  %vm1825 = vweird.f32 %v930
  %vm1826 = vweird.f32 %v1820
  %vm1827 = vmor %vm1825, %vm1826
  %v1828 = vsel %vm1827, %v1820, %v1824
  %v1829 = vand.u32 2147483647, %v930
  %vm1830 = vcmp.eq.f32.partialorder %v1829, 8.507059e+37
  %v1831 = vand.u32 %v930, 2147483648
  %v1832 = vor.u32 1.1754944e-38, %v1831
  %v1833 = vsel %vm1830, %v1832, %v1828
  %v1834 = vmul.f32 1.0, %v1833
  %v1835 = vrcp.pop %v931
  %v1836 = vmul.f32 %v931, %v1835
  %v1837 = vsub.f32 1.0, %v1836
  %v1838 = vmul.f32 %v1835, %v1837
  %v1839 = vadd.f32 %v1835, %v1838
  %vm1840 = vweird.f32 %v931
  %vm1841 = vweird.f32 %v1835
  %vm1842 = vmor %vm1840, %vm1841
  %v1843 = vsel %vm1842, %v1835, %v1839
  %v1844 = vand.u32 2147483647, %v931
  %vm1845 = vcmp.eq.f32.partialorder %v1844, 8.507059e+37
  %v1846 = vand.u32 %v931, 2147483648
  %v1847 = vor.u32 1.1754944e-38, %v1846
  %v1848 = vsel %vm1845, %v1847, %v1843
  %v1849 = vmul.f32 1.0, %v1848
  %v1850 = vrcp.pop %v932
  %v1851 = vmul.f32 %v932, %v1850
  %v1852 = vsub.f32 1.0, %v1851
  %v1853 = vmul.f32 %v1850, %v1852
  %v1854 = vadd.f32 %v1850, %v1853
  %vm1855 = vweird.f32 %v932
  %vm1856 = vweird.f32 %v1850
  %vm1857 = vmor %vm1855, %vm1856
  %v1858 = vsel %vm1857, %v1850, %v1854
  %v1859 = vand.u32 2147483647, %v932
  %vm1860 = vcmp.eq.f32.partialorder %v1859, 8.507059e+37
  %v1861 = vand.u32 %v932, 2147483648
  %v1862 = vor.u32 1.1754944e-38, %v1861
  %v1863 = vsel %vm1860, %v1862, %v1858
  %v1864 = vmul.f32 1.0, %v1863
  %v1865 = vrcp.pop %v933
  %v1866 = vmul.f32 %v933, %v1865
  %v1867 = vsub.f32 1.0, %v1866
  %v1868 = vmul.f32 %v1865, %v1867
  %v1869 = vadd.f32 %v1865, %v1868
  %vm1870 = vweird.f32 %v933
  %vm1871 = vweird.f32 %v1865
  %vm1872 = vmor %vm1870, %vm1871
  %v1873 = vsel %vm1872, %v1865, %v1869
  %v1874 = vand.u32 2147483647, %v933
  %vm1875 = vcmp.eq.f32.partialorder %v1874, 8.507059e+37
  %v1876 = vand.u32 %v933, 2147483648
  %v1877 = vor.u32 1.1754944e-38, %v1876
  %v1878 = vsel %vm1875, %v1877, %v1873
  %v1879 = vmul.f32 1.0, %v1878
  %v1880 = vrcp.pop %v934
  %v1881 = vmul.f32 %v934, %v1880
  %v1882 = vsub.f32 1.0, %v1881
  %v1883 = vmul.f32 %v1880, %v1882
  %v1884 = vadd.f32 %v1880, %v1883
  %vm1885 = vweird.f32 %v934
  %vm1886 = vweird.f32 %v1880
  %vm1887 = vmor %vm1885, %vm1886
  %v1888 = vsel %vm1887, %v1880, %v1884
  %v1889 = vand.u32 2147483647, %v934
  %vm1890 = vcmp.eq.f32.partialorder %v1889, 8.507059e+37
  %v1891 = vand.u32 %v934, 2147483648
  %v1892 = vor.u32 1.1754944e-38, %v1891
  %v1893 = vsel %vm1890, %v1892, %v1888
  %v1894 = vmul.f32 1.0, %v1893
  %vm1895 = vcmask 7168
  %1896 = vst.msk [vmem:[%s5] sm:$0xff] %vm1895, %v949
  %1897 = vst.msk [vmem:[%s5 + $0x8] sm:$0xff] %vm1895, %v964
  %1898 = vst.msk [vmem:[%s5 + $0x10] sm:$0xff] %vm1895, %v979
  %1899 = vst.msk [vmem:[%s5 + $0x18] sm:$0xff] %vm1895, %v994
  %1900 = vst.msk [vmem:[%s5 + $0x20] sm:$0xff] %vm1895, %v1009
  %1901 = vst.msk [vmem:[%s5 + $0x28] sm:$0xff] %vm1895, %v1024
  %1902 = vst.msk [vmem:[%s5 + $0x30] sm:$0xff] %vm1895, %v1039
  %1903 = vst.msk [vmem:[%s5 + $0x38] sm:$0xff] %vm1895, %v1054
  %1904 = vst.msk [vmem:[%s5 + $0x40] sm:$0xff] %vm1895, %v1069
  %1905 = vst.msk [vmem:[%s5 + $0x48] sm:$0xff] %vm1895, %v1084
  %1906 = vst.msk [vmem:[%s5 + $0x50] sm:$0xff] %vm1895, %v1099
  %1907 = vst.msk [vmem:[%s5 + $0x58] sm:$0xff] %vm1895, %v1114
  %1908 = vst.msk [vmem:[%s5 + $0x60] sm:$0xff] %vm1895, %v1129
  %1909 = vst.msk [vmem:[%s5 + $0x68] sm:$0xff] %vm1895, %v1144
  %1910 = vst.msk [vmem:[%s5 + $0x70] sm:$0xff] %vm1895, %v1159
  %1911 = vst.msk [vmem:[%s5 + $0x78] sm:$0xff] %vm1895, %v1174
  %1912 = vst.msk [vmem:[%s5 + $0x80] sm:$0xff] %vm1895, %v1189
  %1913 = vst.msk [vmem:[%s5 + $0x88] sm:$0xff] %vm1895, %v1204
  %1914 = vst.msk [vmem:[%s5 + $0x90] sm:$0xff] %vm1895, %v1219
  %1915 = vst.msk [vmem:[%s5 + $0x98] sm:$0xff] %vm1895, %v1234
  %1916 = vst.msk [vmem:[%s5 + $0xa0] sm:$0xff] %vm1895, %v1249
  %1917 = vst.msk [vmem:[%s5 + $0xa8] sm:$0xff] %vm1895, %v1264
  %1918 = vst.msk [vmem:[%s5 + $0xb0] sm:$0xff] %vm1895, %v1279
  %1919 = vst.msk [vmem:[%s5 + $0xb8] sm:$0xff] %vm1895, %v1294
  %1920 = vst.msk [vmem:[%s5 + $0xc0] sm:$0xff] %vm1895, %v1309
  %1921 = vst.msk [vmem:[%s5 + $0xc8] sm:$0xff] %vm1895, %v1324
  %1922 = vst.msk [vmem:[%s5 + $0xd0] sm:$0xff] %vm1895, %v1339
  %1923 = vst.msk [vmem:[%s5 + $0xd8] sm:$0xff] %vm1895, %v1354
  %1924 = vst.msk [vmem:[%s5 + $0xe0] sm:$0xff] %vm1895, %v1369
  %1925 = vst.msk [vmem:[%s5 + $0xe8] sm:$0xff] %vm1895, %v1384
  %1926 = vst.msk [vmem:[%s5 + $0xf0] sm:$0xff] %vm1895, %v1399
  %1927 = vst.msk [vmem:[%s5 + $0xf8] sm:$0xff] %vm1895, %v1414
  %1928 = vst.msk [vmem:[%s5 + $0x100] sm:$0xff] %vm1895, %v1429
  %1929 = vst.msk [vmem:[%s5 + $0x108] sm:$0xff] %vm1895, %v1444
  %1930 = vst.msk [vmem:[%s5 + $0x110] sm:$0xff] %vm1895, %v1459
  %1931 = vst.msk [vmem:[%s5 + $0x118] sm:$0xff] %vm1895, %v1474
  %1932 = vst.msk [vmem:[%s5 + $0x120] sm:$0xff] %vm1895, %v1489
  %1933 = vst.msk [vmem:[%s5 + $0x128] sm:$0xff] %vm1895, %v1504
  %1934 = vst.msk [vmem:[%s5 + $0x130] sm:$0xff] %vm1895, %v1519
  %1935 = vst.msk [vmem:[%s5 + $0x138] sm:$0xff] %vm1895, %v1534
  %1936 = vst.msk [vmem:[%s5 + $0x140] sm:$0xff] %vm1895, %v1549
  %1937 = vst.msk [vmem:[%s5 + $0x148] sm:$0xff] %vm1895, %v1564
  %1938 = vst.msk [vmem:[%s5 + $0x150] sm:$0xff] %vm1895, %v1579
  %1939 = vst.msk [vmem:[%s5 + $0x158] sm:$0xff] %vm1895, %v1594
  %1940 = vst.msk [vmem:[%s5 + $0x160] sm:$0xff] %vm1895, %v1609
  %1941 = vst.msk [vmem:[%s5 + $0x168] sm:$0xff] %vm1895, %v1624
  %1942 = vst.msk [vmem:[%s5 + $0x170] sm:$0xff] %vm1895, %v1639
  %1943 = vst.msk [vmem:[%s5 + $0x178] sm:$0xff] %vm1895, %v1654
  %1944 = vst.msk [vmem:[%s5 + $0x180] sm:$0xff] %vm1895, %v1669
  %1945 = vst.msk [vmem:[%s5 + $0x188] sm:$0xff] %vm1895, %v1684
  %1946 = vst.msk [vmem:[%s5 + $0x190] sm:$0xff] %vm1895, %v1699
  %1947 = vst.msk [vmem:[%s5 + $0x198] sm:$0xff] %vm1895, %v1714
  %1948 = vst.msk [vmem:[%s5 + $0x1a0] sm:$0xff] %vm1895, %v1729
  %1949 = vst.msk [vmem:[%s5 + $0x1a8] sm:$0xff] %vm1895, %v1744
  %1950 = vst.msk [vmem:[%s5 + $0x1b0] sm:$0xff] %vm1895, %v1759
  %1951 = vst.msk [vmem:[%s5 + $0x1b8] sm:$0xff] %vm1895, %v1774
  %1952 = vst.msk [vmem:[%s5 + $0x1c0] sm:$0xff] %vm1895, %v1789
  %1953 = vst.msk [vmem:[%s5 + $0x1c8] sm:$0xff] %vm1895, %v1804
  %1954 = vst.msk [vmem:[%s5 + $0x1d0] sm:$0xff] %vm1895, %v1819
  %1955 = vst.msk [vmem:[%s5 + $0x1d8] sm:$0xff] %vm1895, %v1834
  %1956 = vst.msk [vmem:[%s5 + $0x1e0] sm:$0xff] %vm1895, %v1849
  %1957 = vst.msk [vmem:[%s5 + $0x1e8] sm:$0xff] %vm1895, %v1864
  %1958 = vst.msk [vmem:[%s5 + $0x1f0] sm:$0xff] %vm1895, %v1879
  %1959 = vst.msk [vmem:[%s5 + $0x1f8] sm:$0xff] %vm1895, %v1894
  // Predicated region
  $region22: #{discriminator_forward.11} parent=0 // pred_check
    _
  $region23: #{discriminator_forward.11} parent=0 // pred_check_branch
    %1961 = sbr.rel (0) target = $region25
  $region24: #{discriminator_forward.11} parent=0 // pred_region
    _
  $region25: #{discriminator_forward.11} parent=0 // pred_fallthru
    _
  // Predicated region
  $region26: #{discriminator_forward.11} parent=0 // pred_check
    _
  $region27: #{discriminator_forward.11} parent=0 // pred_check_branch
    %1963 = sbr.rel (0) target = $region29
  $region28: #{discriminator_forward.11} parent=0 // pred_region
    _
  $region29: #{discriminator_forward.11} parent=0 // pred_fallthru
    _

</llo_original>
